<compile_context>
chip_gen: v7x
topology: tpu7x:2x2x1
jax: 0.10.0
libtpu: 0.0.40
codegen_flags: <defaults>
</compile_context>

<pallas_src>
import functools

import numpy as np
import jax
import jax.numpy as jnp
from jax.experimental import pallas as pl
from jax.experimental.pallas import tpu as pltpu


_VMEM_LIMIT = 32 * 1024 * 1024
_TAPS = [(dh, dw) for dh in range(3) for dw in range(3)]


# ----------------------------------------------------------------------------
# Pallas kernels
# ----------------------------------------------------------------------------

def _cam_up_kernel(p16_ref, p32_ref, wr4_ref, br4_ref, wr5_ref, br5_ref,
                   kup_ref, mask_ref, wc1a_ref, wc1b_ref, s1_ref, o1_ref,
                   wc2_ref, s2_ref, o2_ref, out_ref, *, H, W, camC):
    """Fused CamEncode trunk stand-in + Up block for one camera image.

    p16/p32: pooled image endpoints, channels-last, spatial flattened.
    Output:  (camC, H*W) channels-first feature map (bf16).
    """
    f32 = jnp.float32
    bf16 = jnp.bfloat16
    S = H * W

    # --- trunk stand-in pointwise convs (TODO(synk): EfficientNet-B0 trunk) ---
    r4 = jnp.dot(p16_ref[0], wr4_ref[...], preferred_element_type=f32) + br4_ref[...]
    r4 = jnp.maximum(r4, 0.0).astype(bf16)                                # (S, 112)
    r5 = jnp.dot(p32_ref[0], wr5_ref[...], preferred_element_type=f32) + br5_ref[...]
    r5 = jnp.maximum(r5, 0.0)                                             # (S//4, 320)

    # --- Up: bilinear x2 (align_corners) of reduction_5 via Kronecker matrix ---
    r5u = jnp.dot(kup_ref[...], r5, preferred_element_type=f32).astype(bf16)  # (S, 320)

    def conv3x3(taps_y, cout):
        """Combine tap-major matmul result (S, 9*cout) into the 3x3 conv output."""
        acc = jnp.zeros((S, cout), f32)
        for t, (dh, dw) in enumerate(_TAPS):
            shift = (-((dh - 1) * W + (dw - 1))) % S
            y = taps_y[:, t * cout:(t + 1) * cout]
            if shift:
                y = pltpu.roll(y, shift, axis=0)
            acc = acc + y * mask_ref[t]
        return acc

    # --- conv1 (3x3, pad 1) over cat([reduction_4, up(reduction_5)]) + BN + ReLU ---
    y1 = jnp.dot(r4, wc1a_ref[...], preferred_element_type=f32)
    y1 = y1 + jnp.dot(r5u, wc1b_ref[...], preferred_element_type=f32)     # (S, 9*camC)
    h1 = conv3x3(y1, camC)
    h1 = jnp.maximum(h1 * s1_ref[...] + o1_ref[...], 0.0).astype(bf16)    # (S, camC)

    # --- conv2 (3x3, pad 1) + BN + ReLU ---
    y2 = jnp.dot(h1, wc2_ref[...], preferred_element_type=f32)            # (S, 9*camC)
    h2 = conv3x3(y2, camC)
    h2 = jnp.maximum(h2 * s2_ref[...] + o2_ref[...], 0.0)                 # (S, camC)

    # channels-first store: this is the layout the view-MLP consumes directly.
    out_ref[0] = h2.T.astype(out_ref.dtype)                               # (camC, S)


def cam_up_pallas(p16, p32, wr4, br4, wr5, br5, kup, masks,
                  wc1a, wc1b, s1, o1, wc2, s2, o2, *, H, W, camC):
    BN, S, _ = p16.shape
    img3 = lambda i: (i, 0, 0)
    fix2 = lambda i: (0, 0)
    fix3 = lambda i: (0, 0, 0)
    return pl.pallas_call(
        functools.partial(_cam_up_kernel, H=H, W=W, camC=camC),
        out_shape=jax.ShapeDtypeStruct((BN, camC, S), jnp.bfloat16),
        grid=(BN,),
        in_specs=[
            pl.BlockSpec((1,) + p16.shape[1:], img3),
            pl.BlockSpec((1,) + p32.shape[1:], img3),
            pl.BlockSpec(wr4.shape, fix2),
            pl.BlockSpec(br4.shape, fix2),
            pl.BlockSpec(wr5.shape, fix2),
            pl.BlockSpec(br5.shape, fix2),
            pl.BlockSpec(kup.shape, fix2),
            pl.BlockSpec(masks.shape, fix3),
            pl.BlockSpec(wc1a.shape, fix2),
            pl.BlockSpec(wc1b.shape, fix2),
            pl.BlockSpec(s1.shape, fix2),
            pl.BlockSpec(o1.shape, fix2),
            pl.BlockSpec(wc2.shape, fix2),
            pl.BlockSpec(s2.shape, fix2),
            pl.BlockSpec(o2.shape, fix2),
        ],
        out_specs=pl.BlockSpec((1, camC, S), img3),
        compiler_params=pltpu.CompilerParams(
            dimension_semantics=("parallel",),
            vmem_limit_bytes=_VMEM_LIMIT),
    )(p16, p32, wr4, br4, wr5, br5, kup, masks, wc1a, wc1b, s1, o1, wc2, s2, o2)


def _view_fuse_kernel(feat_ref, w1_ref, b1_ref, w2_ref, b2_ref, out_ref, acc_ref,
                      *, n_views):
    """Per-view 2-layer FC (fv->bv->bv, ReLU) fused with the cross-view mean."""
    n = pl.program_id(2)
    f32 = jnp.float32

    x = feat_ref[0, 0]                                                    # (Ct, fv)
    h = jnp.dot(x, w1_ref[0], preferred_element_type=f32) + b1_ref[0]
    h = jnp.maximum(h, 0.0).astype(jnp.bfloat16)
    y = jnp.dot(h, w2_ref[0], preferred_element_type=f32) + b2_ref[0]
    y = jnp.maximum(y, 0.0)                                               # (Ct, bv)

    @pl.when(n == 0)
    def _():
        acc_ref[...] = jnp.zeros_like(acc_ref)

    acc_ref[...] += y * (1.0 / n_views)

    @pl.when(n == n_views - 1)
    def _():
        out_ref[0] = acc_ref[...].astype(out_ref.dtype)


def view_fuse_pallas(feat, w1, b1, w2, b2, *, ct):
    B, Nv, C, fv = feat.shape
    bv = w1.shape[-1]
    assert C % ct == 0
    return pl.pallas_call(
        functools.partial(_view_fuse_kernel, n_views=Nv),
        out_shape=jax.ShapeDtypeStruct((B, C, bv), jnp.float32),
        grid=(B, C // ct, Nv),
        in_specs=[
            pl.BlockSpec((1, 1, ct, fv), lambda b, c, n: (b, n, c, 0)),
            pl.BlockSpec((1, fv, bv), lambda b, c, n: (n, 0, 0)),
            pl.BlockSpec((1, 1, bv), lambda b, c, n: (n, 0, 0)),
            pl.BlockSpec((1, bv, bv), lambda b, c, n: (n, 0, 0)),
            pl.BlockSpec((1, 1, bv), lambda b, c, n: (n, 0, 0)),
        ],
        out_specs=pl.BlockSpec((1, ct, bv), lambda b, c, n: (b, c, 0)),
        scratch_shapes=[pltpu.VMEM((ct, bv), jnp.float32)],
        compiler_params=pltpu.CompilerParams(
            dimension_semantics=("parallel", "parallel", "arbitrary"),
            vmem_limit_bytes=_VMEM_LIMIT),
    )(feat, w1, b1, w2, b2)


def _resize_kernel(x_ref, uh_ref, uwT_ref, out_ref):
    """out = Uh @ X @ Uw^T batched over a channel tile (fused bilinear resample)."""
    x = x_ref[0]                                                          # (Ct, Hi, Wi)
    ct = x.shape[0]
    uwT = jnp.broadcast_to(uwT_ref[...], (ct,) + uwT_ref.shape)           # (Ct, Wi, Wo)
    uh = jnp.broadcast_to(uh_ref[...], (ct,) + uh_ref.shape)              # (Ct, Ho, Hi)
    y = jnp.einsum('chw,cwx->chx', x, uwT, preferred_element_type=jnp.float32)
    z = jnp.einsum('cyh,chx->cyx', uh, y, preferred_element_type=jnp.float32)
    out_ref[0] = z.astype(out_ref.dtype)


def resize_pallas(x, uh, uwT, *, ct):
    B, C, Hi, Wi = x.shape
    Ho, Wo = uh.shape[0], uwT.shape[1]
    assert C % ct == 0
    return pl.pallas_call(
        _resize_kernel,
        out_shape=jax.ShapeDtypeStruct((B, C, Ho, Wo), jnp.float32),
        grid=(B, C // ct),
        in_specs=[
            pl.BlockSpec((1, ct, Hi, Wi), lambda b, c: (b, c, 0, 0)),
            pl.BlockSpec(uh.shape, lambda b, c: (0, 0)),
            pl.BlockSpec(uwT.shape, lambda b, c: (0, 0)),
        ],
        out_specs=pl.BlockSpec((1, ct, Ho, Wo), lambda b, c: (b, c, 0, 0)),
        compiler_params=pltpu.CompilerParams(
            dimension_semantics=("parallel", "parallel"),
            vmem_limit_bytes=_VMEM_LIMIT),
    )(x, uh, uwT)


# ----------------------------------------------------------------------------
# Host-side helpers (trace-time constants, BN folding, meta handling)
# ----------------------------------------------------------------------------

def gen_dx_bx(xbound, ybound, zbound):
    rows = (xbound, ybound, zbound)
    dx = np.array([row[2] for row in rows], np.float32)
    bx = np.array([row[0] + row[2] / 2.0 for row in rows], np.float32)
    nx = np.array([int((row[1] - row[0]) / row[2]) for row in rows], np.int64)
    return dx, bx, nx


def interp_matrix_np(out_size, in_size):
    """Bilinear (align_corners=True) 1-D interpolation matrix (out_size, in_size)."""
    m = np.zeros((out_size, in_size), np.float32)
    if in_size == 1 or out_size == 1:
        m[:, 0] = 1.0
        return m
    for i in range(out_size):
        src = i * (in_size - 1) / (out_size - 1)
        lo = int(np.floor(src))
        hi = min(lo + 1, in_size - 1)
        f = src - lo
        m[i, lo] += 1.0 - f
        m[i, hi] += f
    return m


def conv3x3_masks(H, W):
    """Boundary-validity masks for the 9 taps of a 3x3 same-padded conv."""
    S = H * W
    hh, ww = np.meshgrid(np.arange(H), np.arange(W), indexing='ij')
    hh = hh.reshape(S)
    ww = ww.reshape(S)
    masks = np.zeros((9, S, 1), np.float32)
    for t, (dh, dw) in enumerate(_TAPS):
        valid = ((hh + dh - 1 >= 0) & (hh + dh - 1 < H) &
                 (ww + dw - 1 >= 0) & (ww + dw - 1 < W))
        masks[t, :, 0] = valid.astype(np.float32)
    return masks


def fold_bn(gamma, beta, mean, var, eps=1e-5):
    scale = gamma / jnp.sqrt(var + eps)
    return scale, beta - mean * scale


# ----------------------------------------------------------------------------
# Model
# ----------------------------------------------------------------------------

class HDMapNetBackbonePallas:
    def __init__(self, outC, img_res, camC=64, xbound=None, ybound=None,
                 zbound=None, n_views=6, up_sample_scale=2, key=None):
        self.outC = outC                       # (unused in forward, as in reference)
        self.camC = camC
        self.downsample = 16
        self.n_views = n_views
        self.up_sample_scale = up_sample_scale

        dx, bx, nx = gen_dx_bx(xbound, ybound, zbound)
        final_H, final_W = int(nx[1]), int(nx[0])
        self.fv_size = (img_res[0] // self.downsample, img_res[1] // self.downsample)
        self.bv_size = (final_H // 5, final_W // 5)
        fv_dim = self.fv_size[0] * self.fv_size[1]
        bv_dim = self.bv_size[0] * self.bv_size[1]

        res_x = self.bv_size[1] * 3 // 4
        ipm_xbound = [-res_x, res_x, 4 * res_x / final_W]
        ipm_ybound = [-res_x / 2, res_x / 2, 2 * res_x / final_H]
        self.ipm_out_w = int((ipm_xbound[1] - ipm_xbound[0]) / ipm_xbound[2])
        self.ipm_out_h = int((ipm_ybound[1] - ipm_ybound[0]) / ipm_ybound[2])

        H16, W16 = self.fv_size
        H32, W32 = H16 // 2, W16 // 2

        # channel tile: guarantees a 'parallel' grid extent >= 2 for megacore
        self.ct = 8 if camC % 8 == 0 else camC

        # ---------------- deterministic synthetic parameters ----------------
        ks = iter(jax.random.split(key, 24))

        def nrm(shape, s):
            return jax.random.normal(next(ks), shape, jnp.float32) * s

        bf16 = jnp.bfloat16
        # TODO(synk): EfficientNet-B0 pretrained trunk replaced by avg-pool +
        # pointwise-conv stand-ins producing reduction_4 (112ch @ /16) and
        # reduction_5 (320ch @ /32) endpoints with matching shapes.
        self.wr4 = nrm((3, 112), 0.3).astype(bf16)
        self.br4 = nrm((1, 112), 0.1)
        self.wr5 = nrm((3, 320), 0.3).astype(bf16)
        self.br5 = nrm((1, 320), 0.1)

        # Up(320 + 112 -> camC): conv3x3 (no bias) + BN + ReLU, twice
        cin1 = 112 + 320
        conv1_w = nrm((9, cin1, camC), 1.0 / np.sqrt(9 * cin1))
        s1, o1 = fold_bn(1.0 + nrm((camC,), 0.1), nrm((camC,), 0.1),
                         nrm((camC,), 0.1), jnp.abs(nrm((camC,), 0.1)) + 1.0)
        conv2_w = nrm((9, camC, camC), 1.0 / np.sqrt(9 * camC))
        s2, o2 = fold_bn(1.0 + nrm((camC,), 0.1), nrm((camC,), 0.1),
                         nrm((camC,), 0.1), jnp.abs(nrm((camC,), 0.1)) + 1.0)
        # tap-major kernel layout: W[ci, t*camC + co] = conv_w[t, ci, co]
        self.wc1a = jnp.transpose(conv1_w[:, :112, :], (1, 0, 2)).reshape(112, 9 * camC).astype(bf16)
        self.wc1b = jnp.transpose(conv1_w[:, 112:, :], (1, 0, 2)).reshape(320, 9 * camC).astype(bf16)
        self.wc2 = jnp.transpose(conv2_w, (1, 0, 2)).reshape(camC, 9 * camC).astype(bf16)
        self.s1 = s1.reshape(1, camC)
        self.o1 = o1.reshape(1, camC)
        self.s2 = s2.reshape(1, camC)
        self.o2 = o2.reshape(1, camC)

        # ViewTransformation: per-view (Linear fv->bv, ReLU, Linear bv->bv, ReLU)
        self.vt_w1 = nrm((n_views, fv_dim, bv_dim), 1.0 / np.sqrt(fv_dim)).astype(bf16)
        self.vt_b1 = nrm((n_views, 1, bv_dim), 0.02)
        self.vt_w2 = nrm((n_views, bv_dim, bv_dim), 1.0 / np.sqrt(bv_dim)).astype(bf16)
        self.vt_b2 = nrm((n_views, 1, bv_dim), 0.02)

        # static conv-tap masks / interpolation matrices (numpy, trace-time)
        self.conv_masks = jnp.asarray(conv3x3_masks(H16, W16))               # (9, S16, 1)
        self.kron_up = jnp.asarray(
            np.kron(interp_matrix_np(H16, H32), interp_matrix_np(W16, W32)))  # (S16, S32)
        # IPM-grid resample composed with the x2 up_sampler (both align_corners)
        uh = (interp_matrix_np(self.ipm_out_h * up_sample_scale, self.ipm_out_h)
              @ interp_matrix_np(self.ipm_out_h, self.bv_size[0]))
        uw = (interp_matrix_np(self.ipm_out_w * up_sample_scale, self.ipm_out_w)
              @ interp_matrix_np(self.ipm_out_w, self.bv_size[1]))
        self.uh_total = jnp.asarray(uh)                                       # (Ho, bvH)
        self.uwT_total = jnp.asarray(uw.T)                                    # (bvW, Wo)

    # ------------------------------ sub-modules ------------------------------

    def cam_encode(self, x_bn):
        """CamEncode (trunk stand-in + Up) for all B*N images, one Pallas kernel."""
        BN, Cin, imH, imW = x_bn.shape
        H16, W16 = imH // 16, imW // 16
        H32, W32 = imH // 32, imW // 32
        # TODO(synk): EfficientNet-B0 trunk stand-in: strided average pooling.
        p16 = x_bn.reshape(BN, Cin, H16, 16, W16, 16).mean(axis=(3, 5))
        p32 = x_bn.reshape(BN, Cin, H32, 32, W32, 32).mean(axis=(3, 5))
        p16 = jnp.transpose(p16, (0, 2, 3, 1)).reshape(BN, H16 * W16, Cin).astype(jnp.bfloat16)
        p32 = jnp.transpose(p32, (0, 2, 3, 1)).reshape(BN, H32 * W32, Cin).astype(jnp.bfloat16)
        return cam_up_pallas(
            p16, p32, self.wr4, self.br4, self.wr5, self.br5,
            self.kron_up, self.conv_masks, self.wc1a, self.wc1b,
            self.s1, self.o1, self.wc2, self.s2, self.o2,
            H=H16, W=W16, camC=self.camC)                   # (BN, camC, H16*W16)

    def get_cam_feats(self, x):
        B, N, C, imH, imW = x.shape
        feats = self.cam_encode(x.reshape(B * N, C, imH, imW))
        fv = (imH // self.downsample) * (imW // self.downsample)
        return feats.reshape(B, N, self.camC, fv)           # (B, N, camC, fv)

    def view_fusion(self, feat):
        """Per-view FC view transformation, fused with the cross-view mean that
        the IPM stand-in uses for camera fusion."""
        return view_fuse_pallas(feat, self.vt_w1, self.vt_b1,
                                self.vt_w2, self.vt_b2, ct=self.ct)   # (B, camC, bv)

    @staticmethod
    def get_Ks_RTs_and_post_RTs(intrins, rots, trans, post_rots, post_trans):
        B, N = intrins.shape[:2]
        eye = jnp.eye(4, dtype=jnp.float32)
        Ks = jnp.tile(eye[None, None], (B, N, 1, 1))
        Rs = jnp.tile(eye[None, None], (B, N, 1, 1))
        Rs = Rs.at[:, :, :3, :3].set(jnp.swapaxes(rots, -1, -2))
        Ts = jnp.tile(eye[None, None], (B, N, 1, 1))
        Ts = Ts.at[:, :, :3, 3].set(-trans)
        RTs = Rs @ Ts
        return Ks, RTs, None

    def ipm(self, fused_bev, Ks, RTs, ego_t, ypr, post_RTs):
        # TODO(synk): exact IPM plane-homography warping (external `IPM` module)
        # is not reproducible here; camera views were mean-fused upstream and the
        # IPM-grid resample + x2 up_sampler are applied as one fused
        # interpolation-matrix Pallas kernel.
        B, C, bv = fused_bev.shape
        x = fused_bev.reshape(B, C, self.bv_size[0], self.bv_size[1])
        return resize_pallas(x, self.uh_total, self.uwT_total, ct=self.ct)

    # ------------------------------- forward ---------------------------------

    def forward(self, imgs, img_metas, points=None):
        feat = self.get_cam_feats(imgs)          # (B, N, camC, fv)   bf16
        fused = self.view_fusion(feat)           # (B, camC, bv)      f32

        desired_keys = ['cam_intrinsics', 'ego2global_translation', 'cam2ego_rotations',
                        'cam2ego_translations', 'post_rots', 'post_trans', 'yaw_pitch_roll']
        batched_keys = ['cam_intrinsics', 'ego2global_translation', 'cam2ego_rotations',
                        'cam2ego_translations', 'yaw_pitch_roll']
        batched = dict([(k, []) for k in img_metas[0].keys() if k in desired_keys])
        for meta in img_metas:
            for k in desired_keys:
                batched[k].append(meta[k])
        for k in list(batched.keys()):
            if k in batched_keys:
                batched[k] = jnp.asarray(np.asarray(batched[k]), dtype=jnp.float32)

        Ks, RTs, post_RTs = self.get_Ks_RTs_and_post_RTs(
            batched['cam_intrinsics'], batched['cam2ego_rotations'],
            batched['cam2ego_translations'], batched['post_rots'], batched['post_trans'])

        # IPM stand-in + up_sampler (x2 bilinear align_corners) in one fused kernel.
        topdown = self.ipm(fused, Ks, RTs, batched['ego2global_translation'],
                           batched['yaw_pitch_roll'], post_RTs)
        # TODO(synk): lidar / PointPillarEncoder branch not implemented (lidar=False).
        return topdown


# ----------------------------------------------------------------------------
# main
# ----------------------------------------------------------------------------

if __name__ == "__main__":
    key = jax.random.PRNGKey(0)
    k_img, k_param, k_meta = jax.random.split(key, 3)

    B, Nv = 1, 6
    img_res = (128, 128)                       # -> fv_size (8, 8)
    camC = 16
    xbound = [-15.0, 15.0, 0.3]                # -> final_W = 100
    ybound = [-15.0, 15.0, 0.3]                # -> final_H = 100
    zbound = [-10.0, 10.0, 20.0]

    model = HDMapNetBackbonePallas(outC=4, img_res=img_res, camC=camC,
                                   xbound=xbound, ybound=ybound, zbound=zbound,
                                   n_views=Nv, key=k_param)

    imgs = jax.random.normal(k_img, (B, Nv, 3, img_res[0], img_res[1]), jnp.float32)

    mk = jax.random.split(k_meta, 7)
    img_metas = []
    for _ in range(B):
        img_metas.append({
            'cam_intrinsics': np.asarray(jax.random.normal(mk[0], (Nv, 3, 3))),
            'ego2global_translation': np.asarray(jax.random.normal(mk[1], (3,))),
            'cam2ego_rotations': np.asarray(jax.random.normal(mk[2], (Nv, 3, 3))),
            'cam2ego_translations': np.asarray(jax.random.normal(mk[3], (Nv, 3))),
            'post_rots': np.asarray(jax.random.normal(mk[4], (Nv, 3, 3))),
            'post_trans': np.asarray(jax.random.normal(mk[5], (Nv, 3))),
            'yaw_pitch_roll': np.asarray(jax.random.normal(mk[6], (3,))),
        })

    out = model.forward(imgs, img_metas)
    out = jax.block_until_ready(out)
    assert out.shape == (B, camC, 100, 100), out.shape
    assert bool(jnp.all(jnp.isfinite(out)))
    print("KERNEL_OK")
</pallas_src>

<mosaic_0001>
module attributes {stable_mosaic.version = 11 : i64} {
  func.func @_cam_up_kernel(%arg0: i32, %arg1: memref<1x64x3xbf16, #tpu.memory_space<vmem>>, %arg2: memref<1x16x3xbf16, #tpu.memory_space<vmem>>, %arg3: memref<3x112xbf16, #tpu.memory_space<vmem>>, %arg4: memref<1x112xf32, #tpu.memory_space<vmem>>, %arg5: memref<3x320xbf16, #tpu.memory_space<vmem>>, %arg6: memref<1x320xf32, #tpu.memory_space<vmem>>, %arg7: memref<64x16xf32, #tpu.memory_space<vmem>>, %arg8: memref<9x64x1xf32, #tpu.memory_space<vmem>>, %arg9: memref<112x144xbf16, #tpu.memory_space<vmem>>, %arg10: memref<320x144xbf16, #tpu.memory_space<vmem>>, %arg11: memref<1x16xf32, #tpu.memory_space<vmem>>, %arg12: memref<1x16xf32, #tpu.memory_space<vmem>>, %arg13: memref<16x144xbf16, #tpu.memory_space<vmem>>, %arg14: memref<1x16xf32, #tpu.memory_space<vmem>>, %arg15: memref<1x16xf32, #tpu.memory_space<vmem>>, %arg16: memref<1x16x64xbf16, #tpu.memory_space<vmem>>) attributes {dimension_semantics = [#tpu.dimension_semantics<parallel>], iteration_bounds = array<i64: 6>, scalar_prefetch = 0 : i64, scratch_operands = 0 : i64, tpu.core_type = #tpu.core_type<tc>, window_params = [{transform_indices = @transform_0, window_bounds = array<i64: 1, 64, 3>}, {transform_indices = @transform_1, window_bounds = array<i64: 1, 16, 3>}, {pipeline_mode = #tpu.pipeline_mode<synchronous>, transform_indices = @transform_2, window_bounds = array<i64: 3, 112>}, {pipeline_mode = #tpu.pipeline_mode<synchronous>, transform_indices = @transform_3, window_bounds = array<i64: 1, 112>}, {pipeline_mode = #tpu.pipeline_mode<synchronous>, transform_indices = @transform_4, window_bounds = array<i64: 3, 320>}, {pipeline_mode = #tpu.pipeline_mode<synchronous>, transform_indices = @transform_5, window_bounds = array<i64: 1, 320>}, {pipeline_mode = #tpu.pipeline_mode<synchronous>, transform_indices = @transform_6, window_bounds = array<i64: 64, 16>}, {pipeline_mode = #tpu.pipeline_mode<synchronous>, transform_indices = @transform_7, window_bounds = array<i64: 9, 64, 1>}, {pipeline_mode = #tpu.pipeline_mode<synchronous>, transform_indices = @transform_8, window_bounds = array<i64: 112, 144>}, {pipeline_mode = #tpu.pipeline_mode<synchronous>, transform_indices = @transform_9, window_bounds = array<i64: 320, 144>}, {pipeline_mode = #tpu.pipeline_mode<synchronous>, transform_indices = @transform_10, window_bounds = array<i64: 1, 16>}, {pipeline_mode = #tpu.pipeline_mode<synchronous>, transform_indices = @transform_11, window_bounds = array<i64: 1, 16>}, {pipeline_mode = #tpu.pipeline_mode<synchronous>, transform_indices = @transform_12, window_bounds = array<i64: 16, 144>}, {pipeline_mode = #tpu.pipeline_mode<synchronous>, transform_indices = @transform_13, window_bounds = array<i64: 1, 16>}, {pipeline_mode = #tpu.pipeline_mode<synchronous>, transform_indices = @transform_14, window_bounds = array<i64: 1, 16>}, {transform_indices = @transform_15, window_bounds = array<i64: 1, 16, 64>}]} {
    %c0 = arith.constant 0 : index
    %c0_0 = arith.constant 0 : index
    %c0_1 = arith.constant 0 : index
    %0 = vector.load %arg1[%c0, %c0_0, %c0_1] : memref<1x64x3xbf16, #tpu.memory_space<vmem>>, vector<1x64x3xbf16>
    %1 = vector.shape_cast %0 : vector<1x64x3xbf16> to vector<64x3xbf16>
    %c0_2 = arith.constant 0 : index
    %c0_3 = arith.constant 0 : index
    %2 = vector.load %arg3[%c0_2, %c0_3] : memref<3x112xbf16, #tpu.memory_space<vmem>>, vector<3x112xbf16>
    %cst = arith.constant dense<0.000000e+00> : vector<64x112xf32>
    %3 = tpu.matmul %1, %2, %cst {dimension_numbers = #tpu.dot_dimension_numbers<[1], [0], [0], [1], [0, 0, 1, 1], [], []>} : vector<64x3xbf16>, vector<3x112xbf16>, vector<64x112xf32> -> vector<64x112xf32>
    %c0_4 = arith.constant 0 : index
    %c0_5 = arith.constant 0 : index
    %4 = vector.load %arg4[%c0_4, %c0_5] : memref<1x112xf32, #tpu.memory_space<vmem>>, vector<1x112xf32>
    %5 = vector.broadcast %4 : vector<1x112xf32> to vector<64x112xf32>
    %6 = arith.addf %3, %5 : vector<64x112xf32>
    %cst_6 = arith.constant 0.000000e+00 : f32
    %7 = vector.broadcast %cst_6 : f32 to vector<64x112xf32>
    %8 = arith.maximumf %6, %7 : vector<64x112xf32>
    %9 = arith.truncf %8 : vector<64x112xf32> to vector<64x112xbf16>
    %c0_7 = arith.constant 0 : index
    %c0_8 = arith.constant 0 : index
    %c0_9 = arith.constant 0 : index
    %10 = vector.load %arg2[%c0_7, %c0_8, %c0_9] : memref<1x16x3xbf16, #tpu.memory_space<vmem>>, vector<1x16x3xbf16>
    %11 = vector.shape_cast %10 : vector<1x16x3xbf16> to vector<16x3xbf16>
    %c0_10 = arith.constant 0 : index
    %c0_11 = arith.constant 0 : index
    %12 = vector.load %arg5[%c0_10, %c0_11] : memref<3x320xbf16, #tpu.memory_space<vmem>>, vector<3x320xbf16>
    %cst_12 = arith.constant dense<0.000000e+00> : vector<16x320xf32>
    %13 = tpu.matmul %11, %12, %cst_12 {dimension_numbers = #tpu.dot_dimension_numbers<[1], [0], [0], [1], [0, 0, 1, 1], [], []>} : vector<16x3xbf16>, vector<3x320xbf16>, vector<16x320xf32> -> vector<16x320xf32>
    %c0_13 = arith.constant 0 : index
    %c0_14 = arith.constant 0 : index
    %14 = vector.load %arg6[%c0_13, %c0_14] : memref<1x320xf32, #tpu.memory_space<vmem>>, vector<1x320xf32>
    %15 = vector.broadcast %14 : vector<1x320xf32> to vector<16x320xf32>
    %16 = arith.addf %13, %15 : vector<16x320xf32>
    %cst_15 = arith.constant 0.000000e+00 : f32
    %17 = vector.broadcast %cst_15 : f32 to vector<16x320xf32>
    %18 = arith.maximumf %16, %17 : vector<16x320xf32>
    %c0_16 = arith.constant 0 : index
    %c0_17 = arith.constant 0 : index
    %19 = vector.load %arg7[%c0_16, %c0_17] : memref<64x16xf32, #tpu.memory_space<vmem>>, vector<64x16xf32>
    %cst_18 = arith.constant dense<0.000000e+00> : vector<64x320xf32>
    %20 = tpu.matmul %19, %18, %cst_18 {dimension_numbers = #tpu.dot_dimension_numbers<[1], [0], [0], [1], [0, 0, 1, 1], [], []>} : vector<64x16xf32>, vector<16x320xf32>, vector<64x320xf32> -> vector<64x320xf32>
    %21 = arith.truncf %20 : vector<64x320xf32> to vector<64x320xbf16>
    %c0_19 = arith.constant 0 : index
    %c0_20 = arith.constant 0 : index
    %22 = vector.load %arg9[%c0_19, %c0_20] : memref<112x144xbf16, #tpu.memory_space<vmem>>, vector<112x144xbf16>
    %cst_21 = arith.constant dense<0.000000e+00> : vector<64x144xf32>
    %23 = tpu.matmul %9, %22, %cst_21 {dimension_numbers = #tpu.dot_dimension_numbers<[1], [0], [0], [1], [0, 0, 1, 1], [], []>} : vector<64x112xbf16>, vector<112x144xbf16>, vector<64x144xf32> -> vector<64x144xf32>
    %c0_22 = arith.constant 0 : index
    %c0_23 = arith.constant 0 : index
    %24 = vector.load %arg10[%c0_22, %c0_23] : memref<320x144xbf16, #tpu.memory_space<vmem>>, vector<320x144xbf16>
    %cst_24 = arith.constant dense<0.000000e+00> : vector<64x144xf32>
    %25 = tpu.matmul %21, %24, %cst_24 {dimension_numbers = #tpu.dot_dimension_numbers<[1], [0], [0], [1], [0, 0, 1, 1], [], []>} : vector<64x320xbf16>, vector<320x144xbf16>, vector<64x144xf32> -> vector<64x144xf32>
    %26 = arith.addf %23, %25 : vector<64x144xf32>
    %cst_25 = arith.constant 0.000000e+00 : f32
    %27 = vector.broadcast %cst_25 : f32 to vector<64x16xf32>
    %28 = vector.extract_strided_slice %26 {offsets = [0, 0], sizes = [64, 16], strides = [1, 1]} : vector<64x144xf32> to vector<64x16xf32>
    %c9_i32 = arith.constant 9 : i32
    %29 = tpu.dynamic_rotate %28 by %c9_i32 dim 0 : vector<64x16xf32>, i32 -> vector<64x16xf32>
    %c0_26 = arith.constant 0 : index
    %c0_27 = arith.constant 0 : index
    %c0_28 = arith.constant 0 : index
    %30 = vector.load %arg8[%c0_26, %c0_27, %c0_28] : memref<9x64x1xf32, #tpu.memory_space<vmem>>, vector<1x64x1xf32>
    %31 = vector.shape_cast %30 : vector<1x64x1xf32> to vector<64x1xf32>
    %32 = vector.broadcast %31 : vector<64x1xf32> to vector<64x16xf32>
    %33 = arith.mulf %29, %32 : vector<64x16xf32>
    %34 = arith.addf %27, %33 : vector<64x16xf32>
    %35 = vector.extract_strided_slice %26 {offsets = [0, 16], sizes = [64, 16], strides = [1, 1]} : vector<64x144xf32> to vector<64x16xf32>
    %c8_i32 = arith.constant 8 : i32
    %36 = tpu.dynamic_rotate %35 by %c8_i32 dim 0 : vector<64x16xf32>, i32 -> vector<64x16xf32>
    %c1 = arith.constant 1 : index
    %c0_29 = arith.constant 0 : index
    %c0_30 = arith.constant 0 : index
    %37 = vector.load %arg8[%c1, %c0_29, %c0_30] : memref<9x64x1xf32, #tpu.memory_space<vmem>>, vector<1x64x1xf32>
    %38 = vector.shape_cast %37 : vector<1x64x1xf32> to vector<64x1xf32>
    %39 = vector.broadcast %38 : vector<64x1xf32> to vector<64x16xf32>
    %40 = arith.mulf %36, %39 : vector<64x16xf32>
    %41 = arith.addf %34, %40 : vector<64x16xf32>
    %42 = vector.extract_strided_slice %26 {offsets = [0, 32], sizes = [64, 16], strides = [1, 1]} : vector<64x144xf32> to vector<64x16xf32>
    %c7_i32 = arith.constant 7 : i32
    %43 = tpu.dynamic_rotate %42 by %c7_i32 dim 0 : vector<64x16xf32>, i32 -> vector<64x16xf32>
    %c2 = arith.constant 2 : index
    %c0_31 = arith.constant 0 : index
    %c0_32 = arith.constant 0 : index
    %44 = vector.load %arg8[%c2, %c0_31, %c0_32] : memref<9x64x1xf32, #tpu.memory_space<vmem>>, vector<1x64x1xf32>
    %45 = vector.shape_cast %44 : vector<1x64x1xf32> to vector<64x1xf32>
    %46 = vector.broadcast %45 : vector<64x1xf32> to vector<64x16xf32>
    %47 = arith.mulf %43, %46 : vector<64x16xf32>
    %48 = arith.addf %41, %47 : vector<64x16xf32>
    %49 = vector.extract_strided_slice %26 {offsets = [0, 48], sizes = [64, 16], strides = [1, 1]} : vector<64x144xf32> to vector<64x16xf32>
    %c1_i32 = arith.constant 1 : i32
    %50 = tpu.dynamic_rotate %49 by %c1_i32 dim 0 : vector<64x16xf32>, i32 -> vector<64x16xf32>
    %c3 = arith.constant 3 : index
    %c0_33 = arith.constant 0 : index
    %c0_34 = arith.constant 0 : index
    %51 = vector.load %arg8[%c3, %c0_33, %c0_34] : memref<9x64x1xf32, #tpu.memory_space<vmem>>, vector<1x64x1xf32>
    %52 = vector.shape_cast %51 : vector<1x64x1xf32> to vector<64x1xf32>
    %53 = vector.broadcast %52 : vector<64x1xf32> to vector<64x16xf32>
    %54 = arith.mulf %50, %53 : vector<64x16xf32>
    %55 = arith.addf %48, %54 : vector<64x16xf32>
    %56 = vector.extract_strided_slice %26 {offsets = [0, 64], sizes = [64, 16], strides = [1, 1]} : vector<64x144xf32> to vector<64x16xf32>
    %c4 = arith.constant 4 : index
    %c0_35 = arith.constant 0 : index
    %c0_36 = arith.constant 0 : index
    %57 = vector.load %arg8[%c4, %c0_35, %c0_36] : memref<9x64x1xf32, #tpu.memory_space<vmem>>, vector<1x64x1xf32>
    %58 = vector.shape_cast %57 : vector<1x64x1xf32> to vector<64x1xf32>
    %59 = vector.broadcast %58 : vector<64x1xf32> to vector<64x16xf32>
    %60 = arith.mulf %56, %59 : vector<64x16xf32>
    %61 = arith.addf %55, %60 : vector<64x16xf32>
    %62 = vector.extract_strided_slice %26 {offsets = [0, 80], sizes = [64, 16], strides = [1, 1]} : vector<64x144xf32> to vector<64x16xf32>
    %c63_i32 = arith.constant 63 : i32
    %63 = tpu.dynamic_rotate %62 by %c63_i32 dim 0 : vector<64x16xf32>, i32 -> vector<64x16xf32>
    %c5 = arith.constant 5 : index
    %c0_37 = arith.constant 0 : index
    %c0_38 = arith.constant 0 : index
    %64 = vector.load %arg8[%c5, %c0_37, %c0_38] : memref<9x64x1xf32, #tpu.memory_space<vmem>>, vector<1x64x1xf32>
    %65 = vector.shape_cast %64 : vector<1x64x1xf32> to vector<64x1xf32>
    %66 = vector.broadcast %65 : vector<64x1xf32> to vector<64x16xf32>
    %67 = arith.mulf %63, %66 : vector<64x16xf32>
    %68 = arith.addf %61, %67 : vector<64x16xf32>
    %69 = vector.extract_strided_slice %26 {offsets = [0, 96], sizes = [64, 16], strides = [1, 1]} : vector<64x144xf32> to vector<64x16xf32>
    %c57_i32 = arith.constant 57 : i32
    %70 = tpu.dynamic_rotate %69 by %c57_i32 dim 0 : vector<64x16xf32>, i32 -> vector<64x16xf32>
    %c6 = arith.constant 6 : index
    %c0_39 = arith.constant 0 : index
    %c0_40 = arith.constant 0 : index
    %71 = vector.load %arg8[%c6, %c0_39, %c0_40] : memref<9x64x1xf32, #tpu.memory_space<vmem>>, vector<1x64x1xf32>
    %72 = vector.shape_cast %71 : vector<1x64x1xf32> to vector<64x1xf32>
    %73 = vector.broadcast %72 : vector<64x1xf32> to vector<64x16xf32>
    %74 = arith.mulf %70, %73 : vector<64x16xf32>
    %75 = arith.addf %68, %74 : vector<64x16xf32>
    %76 = vector.extract_strided_slice %26 {offsets = [0, 112], sizes = [64, 16], strides = [1, 1]} : vector<64x144xf32> to vector<64x16xf32>
    %c56_i32 = arith.constant 56 : i32
    %77 = tpu.dynamic_rotate %76 by %c56_i32 dim 0 : vector<64x16xf32>, i32 -> vector<64x16xf32>
    %c7 = arith.constant 7 : index
    %c0_41 = arith.constant 0 : index
    %c0_42 = arith.constant 0 : index
    %78 = vector.load %arg8[%c7, %c0_41, %c0_42] : memref<9x64x1xf32, #tpu.memory_space<vmem>>, vector<1x64x1xf32>
    %79 = vector.shape_cast %78 : vector<1x64x1xf32> to vector<64x1xf32>
    %80 = vector.broadcast %79 : vector<64x1xf32> to vector<64x16xf32>
    %81 = arith.mulf %77, %80 : vector<64x16xf32>
    %82 = arith.addf %75, %81 : vector<64x16xf32>
    %83 = vector.extract_strided_slice %26 {offsets = [0, 128], sizes = [64, 16], strides = [1, 1]} : vector<64x144xf32> to vector<64x16xf32>
    %c55_i32 = arith.constant 55 : i32
    %84 = tpu.dynamic_rotate %83 by %c55_i32 dim 0 : vector<64x16xf32>, i32 -> vector<64x16xf32>
    %c8 = arith.constant 8 : index
    %c0_43 = arith.constant 0 : index
    %c0_44 = arith.constant 0 : index
    %85 = vector.load %arg8[%c8, %c0_43, %c0_44] : memref<9x64x1xf32, #tpu.memory_space<vmem>>, vector<1x64x1xf32>
    %86 = vector.shape_cast %85 : vector<1x64x1xf32> to vector<64x1xf32>
    %87 = vector.broadcast %86 : vector<64x1xf32> to vector<64x16xf32>
    %88 = arith.mulf %84, %87 : vector<64x16xf32>
    %89 = arith.addf %82, %88 : vector<64x16xf32>
    %c0_45 = arith.constant 0 : index
    %c0_46 = arith.constant 0 : index
    %90 = vector.load %arg11[%c0_45, %c0_46] : memref<1x16xf32, #tpu.memory_space<vmem>>, vector<1x16xf32>
    %91 = vector.broadcast %90 : vector<1x16xf32> to vector<64x16xf32>
    %92 = arith.mulf %89, %91 : vector<64x16xf32>
    %c0_47 = arith.constant 0 : index
    %c0_48 = arith.constant 0 : index
    %93 = vector.load %arg12[%c0_47, %c0_48] : memref<1x16xf32, #tpu.memory_space<vmem>>, vector<1x16xf32>
    %94 = vector.broadcast %93 : vector<1x16xf32> to vector<64x16xf32>
    %95 = arith.addf %92, %94 : vector<64x16xf32>
    %cst_49 = arith.constant 0.000000e+00 : f32
    %96 = vector.broadcast %cst_49 : f32 to vector<64x16xf32>
    %97 = arith.maximumf %95, %96 : vector<64x16xf32>
    %98 = arith.truncf %97 : vector<64x16xf32> to vector<64x16xbf16>
    %c0_50 = arith.constant 0 : index
    %c0_51 = arith.constant 0 : index
    %99 = vector.load %arg13[%c0_50, %c0_51] : memref<16x144xbf16, #tpu.memory_space<vmem>>, vector<16x144xbf16>
    %cst_52 = arith.constant dense<0.000000e+00> : vector<64x144xf32>
    %100 = tpu.matmul %98, %99, %cst_52 {dimension_numbers = #tpu.dot_dimension_numbers<[1], [0], [0], [1], [0, 0, 1, 1], [], []>} : vector<64x16xbf16>, vector<16x144xbf16>, vector<64x144xf32> -> vector<64x144xf32>
    %cst_53 = arith.constant 0.000000e+00 : f32
    %101 = vector.broadcast %cst_53 : f32 to vector<64x16xf32>
    %102 = vector.extract_strided_slice %100 {offsets = [0, 0], sizes = [64, 16], strides = [1, 1]} : vector<64x144xf32> to vector<64x16xf32>
    %c9_i32_54 = arith.constant 9 : i32
    %103 = tpu.dynamic_rotate %102 by %c9_i32_54 dim 0 : vector<64x16xf32>, i32 -> vector<64x16xf32>
    %c0_55 = arith.constant 0 : index
    %c0_56 = arith.constant 0 : index
    %c0_57 = arith.constant 0 : index
    %104 = vector.load %arg8[%c0_55, %c0_56, %c0_57] : memref<9x64x1xf32, #tpu.memory_space<vmem>>, vector<1x64x1xf32>
    %105 = vector.shape_cast %104 : vector<1x64x1xf32> to vector<64x1xf32>
    %106 = vector.broadcast %105 : vector<64x1xf32> to vector<64x16xf32>
    %107 = arith.mulf %103, %106 : vector<64x16xf32>
    %108 = arith.addf %101, %107 : vector<64x16xf32>
    %109 = vector.extract_strided_slice %100 {offsets = [0, 16], sizes = [64, 16], strides = [1, 1]} : vector<64x144xf32> to vector<64x16xf32>
    %c8_i32_58 = arith.constant 8 : i32
    %110 = tpu.dynamic_rotate %109 by %c8_i32_58 dim 0 : vector<64x16xf32>, i32 -> vector<64x16xf32>
    %c1_59 = arith.constant 1 : index
    %c0_60 = arith.constant 0 : index
    %c0_61 = arith.constant 0 : index
    %111 = vector.load %arg8[%c1_59, %c0_60, %c0_61] : memref<9x64x1xf32, #tpu.memory_space<vmem>>, vector<1x64x1xf32>
    %112 = vector.shape_cast %111 : vector<1x64x1xf32> to vector<64x1xf32>
    %113 = vector.broadcast %112 : vector<64x1xf32> to vector<64x16xf32>
    %114 = arith.mulf %110, %113 : vector<64x16xf32>
    %115 = arith.addf %108, %114 : vector<64x16xf32>
    %116 = vector.extract_strided_slice %100 {offsets = [0, 32], sizes = [64, 16], strides = [1, 1]} : vector<64x144xf32> to vector<64x16xf32>
    %c7_i32_62 = arith.constant 7 : i32
    %117 = tpu.dynamic_rotate %116 by %c7_i32_62 dim 0 : vector<64x16xf32>, i32 -> vector<64x16xf32>
    %c2_63 = arith.constant 2 : index
    %c0_64 = arith.constant 0 : index
    %c0_65 = arith.constant 0 : index
    %118 = vector.load %arg8[%c2_63, %c0_64, %c0_65] : memref<9x64x1xf32, #tpu.memory_space<vmem>>, vector<1x64x1xf32>
    %119 = vector.shape_cast %118 : vector<1x64x1xf32> to vector<64x1xf32>
    %120 = vector.broadcast %119 : vector<64x1xf32> to vector<64x16xf32>
    %121 = arith.mulf %117, %120 : vector<64x16xf32>
    %122 = arith.addf %115, %121 : vector<64x16xf32>
    %123 = vector.extract_strided_slice %100 {offsets = [0, 48], sizes = [64, 16], strides = [1, 1]} : vector<64x144xf32> to vector<64x16xf32>
    %c1_i32_66 = arith.constant 1 : i32
    %124 = tpu.dynamic_rotate %123 by %c1_i32_66 dim 0 : vector<64x16xf32>, i32 -> vector<64x16xf32>
    %c3_67 = arith.constant 3 : index
    %c0_68 = arith.constant 0 : index
    %c0_69 = arith.constant 0 : index
    %125 = vector.load %arg8[%c3_67, %c0_68, %c0_69] : memref<9x64x1xf32, #tpu.memory_space<vmem>>, vector<1x64x1xf32>
    %126 = vector.shape_cast %125 : vector<1x64x1xf32> to vector<64x1xf32>
    %127 = vector.broadcast %126 : vector<64x1xf32> to vector<64x16xf32>
    %128 = arith.mulf %124, %127 : vector<64x16xf32>
    %129 = arith.addf %122, %128 : vector<64x16xf32>
    %130 = vector.extract_strided_slice %100 {offsets = [0, 64], sizes = [64, 16], strides = [1, 1]} : vector<64x144xf32> to vector<64x16xf32>
    %c4_70 = arith.constant 4 : index
    %c0_71 = arith.constant 0 : index
    %c0_72 = arith.constant 0 : index
    %131 = vector.load %arg8[%c4_70, %c0_71, %c0_72] : memref<9x64x1xf32, #tpu.memory_space<vmem>>, vector<1x64x1xf32>
    %132 = vector.shape_cast %131 : vector<1x64x1xf32> to vector<64x1xf32>
    %133 = vector.broadcast %132 : vector<64x1xf32> to vector<64x16xf32>
    %134 = arith.mulf %130, %133 : vector<64x16xf32>
    %135 = arith.addf %129, %134 : vector<64x16xf32>
    %136 = vector.extract_strided_slice %100 {offsets = [0, 80], sizes = [64, 16], strides = [1, 1]} : vector<64x144xf32> to vector<64x16xf32>
    %c63_i32_73 = arith.constant 63 : i32
    %137 = tpu.dynamic_rotate %136 by %c63_i32_73 dim 0 : vector<64x16xf32>, i32 -> vector<64x16xf32>
    %c5_74 = arith.constant 5 : index
    %c0_75 = arith.constant 0 : index
    %c0_76 = arith.constant 0 : index
    %138 = vector.load %arg8[%c5_74, %c0_75, %c0_76] : memref<9x64x1xf32, #tpu.memory_space<vmem>>, vector<1x64x1xf32>
    %139 = vector.shape_cast %138 : vector<1x64x1xf32> to vector<64x1xf32>
    %140 = vector.broadcast %139 : vector<64x1xf32> to vector<64x16xf32>
    %141 = arith.mulf %137, %140 : vector<64x16xf32>
    %142 = arith.addf %135, %141 : vector<64x16xf32>
    %143 = vector.extract_strided_slice %100 {offsets = [0, 96], sizes = [64, 16], strides = [1, 1]} : vector<64x144xf32> to vector<64x16xf32>
    %c57_i32_77 = arith.constant 57 : i32
    %144 = tpu.dynamic_rotate %143 by %c57_i32_77 dim 0 : vector<64x16xf32>, i32 -> vector<64x16xf32>
    %c6_78 = arith.constant 6 : index
    %c0_79 = arith.constant 0 : index
    %c0_80 = arith.constant 0 : index
    %145 = vector.load %arg8[%c6_78, %c0_79, %c0_80] : memref<9x64x1xf32, #tpu.memory_space<vmem>>, vector<1x64x1xf32>
    %146 = vector.shape_cast %145 : vector<1x64x1xf32> to vector<64x1xf32>
    %147 = vector.broadcast %146 : vector<64x1xf32> to vector<64x16xf32>
    %148 = arith.mulf %144, %147 : vector<64x16xf32>
    %149 = arith.addf %142, %148 : vector<64x16xf32>
    %150 = vector.extract_strided_slice %100 {offsets = [0, 112], sizes = [64, 16], strides = [1, 1]} : vector<64x144xf32> to vector<64x16xf32>
    %c56_i32_81 = arith.constant 56 : i32
    %151 = tpu.dynamic_rotate %150 by %c56_i32_81 dim 0 : vector<64x16xf32>, i32 -> vector<64x16xf32>
    %c7_82 = arith.constant 7 : index
    %c0_83 = arith.constant 0 : index
    %c0_84 = arith.constant 0 : index
    %152 = vector.load %arg8[%c7_82, %c0_83, %c0_84] : memref<9x64x1xf32, #tpu.memory_space<vmem>>, vector<1x64x1xf32>
    %153 = vector.shape_cast %152 : vector<1x64x1xf32> to vector<64x1xf32>
    %154 = vector.broadcast %153 : vector<64x1xf32> to vector<64x16xf32>
    %155 = arith.mulf %151, %154 : vector<64x16xf32>
    %156 = arith.addf %149, %155 : vector<64x16xf32>
    %157 = vector.extract_strided_slice %100 {offsets = [0, 128], sizes = [64, 16], strides = [1, 1]} : vector<64x144xf32> to vector<64x16xf32>
    %c55_i32_85 = arith.constant 55 : i32
    %158 = tpu.dynamic_rotate %157 by %c55_i32_85 dim 0 : vector<64x16xf32>, i32 -> vector<64x16xf32>
    %c8_86 = arith.constant 8 : index
    %c0_87 = arith.constant 0 : index
    %c0_88 = arith.constant 0 : index
    %159 = vector.load %arg8[%c8_86, %c0_87, %c0_88] : memref<9x64x1xf32, #tpu.memory_space<vmem>>, vector<1x64x1xf32>
    %160 = vector.shape_cast %159 : vector<1x64x1xf32> to vector<64x1xf32>
    %161 = vector.broadcast %160 : vector<64x1xf32> to vector<64x16xf32>
    %162 = arith.mulf %158, %161 : vector<64x16xf32>
    %163 = arith.addf %156, %162 : vector<64x16xf32>
    %c0_89 = arith.constant 0 : index
    %c0_90 = arith.constant 0 : index
    %164 = vector.load %arg14[%c0_89, %c0_90] : memref<1x16xf32, #tpu.memory_space<vmem>>, vector<1x16xf32>
    %165 = vector.broadcast %164 : vector<1x16xf32> to vector<64x16xf32>
    %166 = arith.mulf %163, %165 : vector<64x16xf32>
    %c0_91 = arith.constant 0 : index
    %c0_92 = arith.constant 0 : index
    %167 = vector.load %arg15[%c0_91, %c0_92] : memref<1x16xf32, #tpu.memory_space<vmem>>, vector<1x16xf32>
    %168 = vector.broadcast %167 : vector<1x16xf32> to vector<64x16xf32>
    %169 = arith.addf %166, %168 : vector<64x16xf32>
    %cst_93 = arith.constant 0.000000e+00 : f32
    %170 = vector.broadcast %cst_93 : f32 to vector<64x16xf32>
    %171 = arith.maximumf %169, %170 : vector<64x16xf32>
    %172 = tpu.transpose %171, [1, 0] : vector<64x16xf32> -> vector<16x64xf32>
    %173 = arith.truncf %172 : vector<16x64xf32> to vector<16x64xbf16>
    %c0_94 = arith.constant 0 : index
    %c0_95 = arith.constant 0 : index
    %c0_96 = arith.constant 0 : index
    %174 = vector.load %arg16[%c0_94, %c0_95, %c0_96] : memref<1x16x64xbf16, #tpu.memory_space<vmem>>, vector<1x16x64xbf16>
    %175 = vector.shape_cast %174 : vector<1x16x64xbf16> to vector<16x64xbf16>
    %176 = vector.shape_cast %173 : vector<16x64xbf16> to vector<1x16x64xbf16>
    tpu.vector_store %arg16[%c0_94, %c0_95, %c0_96], %176 {strides = array<i32>} : memref<1x16x64xbf16, #tpu.memory_space<vmem>>, vector<1x16x64xbf16>,
    return
  }
  func.func @transform_0(%arg0: i32) -> (i32, i32, i32) {
    %c0_i32 = arith.constant 0 : i32
    %c0_i32_0 = arith.constant 0 : i32
    %c0_i32_1 = arith.constant 0 : i32
    return %arg0, %c0_i32, %c0_i32_0 : i32, i32, i32
  }
  func.func @transform_1(%arg0: i32) -> (i32, i32, i32) {
    %c0_i32 = arith.constant 0 : i32
    %c0_i32_0 = arith.constant 0 : i32
    %c0_i32_1 = arith.constant 0 : i32
    return %arg0, %c0_i32, %c0_i32_0 : i32, i32, i32
  }
  func.func @transform_2(%arg0: i32) -> (i32, i32) {
    %c0_i32 = arith.constant 0 : i32
    %c0_i32_0 = arith.constant 0 : i32
    %c0_i32_1 = arith.constant 0 : i32
    return %c0_i32, %c0_i32_0 : i32, i32
  }
  func.func @transform_3(%arg0: i32) -> (i32, i32) {
    %c0_i32 = arith.constant 0 : i32
    %c0_i32_0 = arith.constant 0 : i32
    %c0_i32_1 = arith.constant 0 : i32
    return %c0_i32, %c0_i32_0 : i32, i32
  }
  func.func @transform_4(%arg0: i32) -> (i32, i32) {
    %c0_i32 = arith.constant 0 : i32
    %c0_i32_0 = arith.constant 0 : i32
    %c0_i32_1 = arith.constant 0 : i32
    return %c0_i32, %c0_i32_0 : i32, i32
  }
  func.func @transform_5(%arg0: i32) -> (i32, i32) {
    %c0_i32 = arith.constant 0 : i32
    %c0_i32_0 = arith.constant 0 : i32
    %c0_i32_1 = arith.constant 0 : i32
    return %c0_i32, %c0_i32_0 : i32, i32
  }
  func.func @transform_6(%arg0: i32) -> (i32, i32) {
    %c0_i32 = arith.constant 0 : i32
    %c0_i32_0 = arith.constant 0 : i32
    %c0_i32_1 = arith.constant 0 : i32
    return %c0_i32, %c0_i32_0 : i32, i32
  }
  func.func @transform_7(%arg0: i32) -> (i32, i32, i32) {
    %c0_i32 = arith.constant 0 : i32
    %c0_i32_0 = arith.constant 0 : i32
    %c0_i32_1 = arith.constant 0 : i32
    %c0_i32_2 = arith.constant 0 : i32
    return %c0_i32, %c0_i32_0, %c0_i32_1 : i32, i32, i32
  }
  func.func @transform_8(%arg0: i32) -> (i32, i32) {
    %c0_i32 = arith.constant 0 : i32
    %c0_i32_0 = arith.constant 0 : i32
    %c0_i32_1 = arith.constant 0 : i32
    return %c0_i32, %c0_i32_0 : i32, i32
  }
  func.func @transform_9(%arg0: i32) -> (i32, i32) {
    %c0_i32 = arith.constant 0 : i32
    %c0_i32_0 = arith.constant 0 : i32
    %c0_i32_1 = arith.constant 0 : i32
    return %c0_i32, %c0_i32_0 : i32, i32
  }
  func.func @transform_10(%arg0: i32) -> (i32, i32) {
    %c0_i32 = arith.constant 0 : i32
    %c0_i32_0 = arith.constant 0 : i32
    %c0_i32_1 = arith.constant 0 : i32
    return %c0_i32, %c0_i32_0 : i32, i32
  }
  func.func @transform_11(%arg0: i32) -> (i32, i32) {
    %c0_i32 = arith.constant 0 : i32
    %c0_i32_0 = arith.constant 0 : i32
    %c0_i32_1 = arith.constant 0 : i32
    return %c0_i32, %c0_i32_0 : i32, i32
  }
  func.func @transform_12(%arg0: i32) -> (i32, i32) {
    %c0_i32 = arith.constant 0 : i32
    %c0_i32_0 = arith.constant 0 : i32
    %c0_i32_1 = arith.constant 0 : i32
    return %c0_i32, %c0_i32_0 : i32, i32
  }
  func.func @transform_13(%arg0: i32) -> (i32, i32) {
    %c0_i32 = arith.constant 0 : i32
    %c0_i32_0 = arith.constant 0 : i32
    %c0_i32_1 = arith.constant 0 : i32
    return %c0_i32, %c0_i32_0 : i32, i32
  }
  func.func @transform_14(%arg0: i32) -> (i32, i32) {
    %c0_i32 = arith.constant 0 : i32
    %c0_i32_0 = arith.constant 0 : i32
    %c0_i32_1 = arith.constant 0 : i32
    return %c0_i32, %c0_i32_0 : i32, i32
  }
  func.func @transform_15(%arg0: i32) -> (i32, i32, i32) {
    %c0_i32 = arith.constant 0 : i32
    %c0_i32_0 = arith.constant 0 : i32
    %c0_i32_1 = arith.constant 0 : i32
    return %arg0, %c0_i32, %c0_i32_0 : i32, i32, i32
  }
}

</mosaic_0001>

<llo_original>
// kernel: tpu_custom_call.1
$region0: #{tpu_custom_call.1}
  #allocation0 [shape = 'u32[]', space=smem, size = 0x4, offset = 0x4, fixed_abs, tag = 'smem constant byte address 0x4 - core index']
  #allocation1 [shape = 'u32[144,128]{1,0:T(1,128)}', space=vmem, size = 0x12000, scoped, tag = 'internal scratch']
  %s0 = inlined_call_operand.vmem [shape: bf16[6,64,3], index: 0, kind: input, shape index: {}]
  %s1 = inlined_call_operand.vmem [shape: bf16[6,16,3], index: 1, kind: input, shape index: {}]
  %s2 = inlined_call_operand.vmem [shape: bf16[3,112], index: 2, kind: input, shape index: {}]
  %s3 = inlined_call_operand.vmem [shape: f32[1,112], index: 3, kind: input, shape index: {}]
  %s4 = inlined_call_operand.vmem [shape: bf16[3,320], index: 4, kind: input, shape index: {}]
  %s5 = inlined_call_operand.vmem [shape: f32[1,320], index: 5, kind: input, shape index: {}]
  %s6 = inlined_call_operand.vmem [shape: f32[64,16], index: 6, kind: input, shape index: {}]
  %s7 = inlined_call_operand.vmem [shape: f32[9,64,1], index: 7, kind: input, shape index: {}]
  %s8 = inlined_call_operand.vmem [shape: bf16[112,144], index: 8, kind: input, shape index: {}]
  %s9 = inlined_call_operand.vmem [shape: bf16[320,144], index: 9, kind: input, shape index: {}]
  %s10 = inlined_call_operand.vmem [shape: f32[1,16], index: 10, kind: input, shape index: {}]
  %s11 = inlined_call_operand.vmem [shape: f32[1,16], index: 11, kind: input, shape index: {}]
  %s12 = inlined_call_operand.vmem [shape: bf16[16,144], index: 12, kind: input, shape index: {}]
  %s13 = inlined_call_operand.vmem [shape: f32[1,16], index: 13, kind: input, shape index: {}]
  %s14 = inlined_call_operand.vmem [shape: f32[1,16], index: 14, kind: input, shape index: {}]
  %s15 = inlined_call_operand.hbm [shape: bf16[6,16,64], index: 15, kind: output, shape index: {}]
  %s16 = sld [smem:[#allocation0]]
  $region93: #{tpu_custom_call.1} parent=0
    _
  %s18 = ssub.s32 1, %s16
  %s19 = scalar_select 0, %s18, %s16
  $region1: #{tpu_custom_call.1} parent=0
    #allocation2 [shape = 'u8[8192]{0}', space=vmem, size = 0x2000, scoped, tag = 'output window, operand 0']
    #allocation3 [shape = 's32[2]{0}', space=sflag, size = 0x8, scoped, tag = 'scoped memory for tpu_custom_call.1']
    %20 = vsyncpa [#allocation3], 0
    %s21 = scalar_lea.sflag [#allocation3], 1
    %22 = vsyncpa %s21, 0
    loop: start=0, step=1, limit=8
    $region2: #{tpu_custom_call.1} parent=1 // loop_pre_header
      _
    $region3: #{tpu_custom_call.1} parent=1 // loop_header
      %s24 = sphi 0, %s28
      %p25 = scmp.ge.s32.totalorder %s24, 8
      %s34 = sphi 0, %s36
      %s37 = sphi 0, %s34
      %s38 = sphi 0, %s37
      %s54 = sphi 0, %s38
      %s60 = sphi 0, %s62
      %s63 = sphi 0, %s60
      %s64 = sphi 0, %s63
      %s80 = sphi 0, %s64
      %s84 = sphi 0, %s84
      %s86 = sphi 0, %s84
      %s87 = sphi 0, %s86
      %s101 = sphi 0, %s87
      %s105 = sphi 0, %s105
      %s107 = sphi 0, %s105
      %s108 = sphi 0, %s107
      %s122 = sphi 0, %s108
      %s126 = sphi 0, %s126
      %s128 = sphi 0, %s126
      %s129 = sphi 0, %s128
      %s143 = sphi 0, %s129
      %s147 = sphi 0, %s147
      %s149 = sphi 0, %s147
      %s150 = sphi 0, %s149
      %s164 = sphi 0, %s150
      %s168 = sphi 0, %s168
      %s170 = sphi 0, %s168
      %s171 = sphi 0, %s170
      %s185 = sphi 0, %s171
      %s189 = sphi 0, %s189
      %s191 = sphi 0, %s189
      %s192 = sphi 0, %s191
      %s206 = sphi 0, %s192
      %s210 = sphi 0, %s210
      %s212 = sphi 0, %s210
      %s213 = sphi 0, %s212
      %s227 = sphi 0, %s213
      %s231 = sphi 0, %s231
      %s233 = sphi 0, %s231
      %s234 = sphi 0, %s233
      %s248 = sphi 0, %s234
      %s252 = sphi 0, %s252
      %s254 = sphi 0, %s252
      %s255 = sphi 0, %s254
      %s269 = sphi 0, %s255
      %s273 = sphi 0, %s273
      %s275 = sphi 0, %s273
      %s276 = sphi 0, %s275
      %s290 = sphi 0, %s276
      %s294 = sphi 0, %s294
      %s296 = sphi 0, %s294
      %s297 = sphi 0, %s296
      %s311 = sphi 0, %s297
      %s315 = sphi 0, %s315
      %s317 = sphi 0, %s315
      %s318 = sphi 0, %s317
      %s332 = sphi 0, %s318
      %s336 = sphi 0, %s336
      %s338 = sphi 0, %s336
      %s339 = sphi 0, %s338
      %s353 = sphi 0, %s339
      %s359 = sphi 0, %s361
      %s362 = sphi 0, %s359
      %s363 = sphi 0, %s362
      %s379 = sphi 0, %s363
    $region4: #{tpu_custom_call.1} parent=1 // loop_header_branch
      %27 = sbr.rel (%p25) target = $region8
    $region5: #{tpu_custom_call.1} parent=1 // loop_body
      %s29 = ssub.s32 %s24, 1
      %s30 = ssub.s32 %s24, 2
      %s31 = sadd.s32 %s24, 1
      %s32 = ssub.s32 %s24, %s31
      %p33 = scmp.eq.s32.totalorder %s32, 0
      %s35 = sadd.s32 %s34, 1
      %s36 = scalar_select %p33, %s34, %s35
      %p39 = pneg %p33
      %p40 = scmp.eq.s32.totalorder %s24, 5
      %p41 = por %p39, %p40
      %p42 = scmp.ne.s32.totalorder %s34, %s37
      %p43 = scmp.eq.s32.totalorder %s24, 0
      %p44 = por %p42, %p43
      %p45 = scmp.ne.s32.totalorder %s34, %s37
      %p46 = scmp.eq.s32.totalorder %s29, 5
      %p47 = por %p45, %p46
      %p48 = scmp.ne.s32.totalorder %s37, %s38
      %p49 = scmp.eq.s32.totalorder %s29, 0
      %p50 = por %p48, %p49
      %p51 = scmp.ne.s32.totalorder %s37, %s38
      %p52 = scmp.eq.s32.totalorder %s30, 5
      %p53 = por %p51, %p52
      %p55 = scmp.ne.s32.totalorder %s38, %s54
      %p56 = scmp.eq.s32.totalorder %s30, 0
      %p57 = por %p55, %p56
      %s58 = ssub.s32 %s24, %s31
      %p59 = scmp.eq.s32.totalorder %s58, 0
      %s61 = sadd.s32 %s60, 1
      %s62 = scalar_select %p59, %s60, %s61
      %p65 = pneg %p59
      %p66 = scmp.eq.s32.totalorder %s24, 5
      %p67 = por %p65, %p66
      %p68 = scmp.ne.s32.totalorder %s60, %s63
      %p69 = scmp.eq.s32.totalorder %s24, 0
      %p70 = por %p68, %p69
      %p71 = scmp.ne.s32.totalorder %s60, %s63
      %p72 = scmp.eq.s32.totalorder %s29, 5
      %p73 = por %p71, %p72
      %p74 = scmp.ne.s32.totalorder %s63, %s64
      %p75 = scmp.eq.s32.totalorder %s29, 0
      %p76 = por %p74, %p75
      %p77 = scmp.ne.s32.totalorder %s63, %s64
      %p78 = scmp.eq.s32.totalorder %s30, 5
      %p79 = por %p77, %p78
      %p81 = scmp.ne.s32.totalorder %s64, %s80
      %p82 = scmp.eq.s32.totalorder %s30, 0
      %p83 = por %p81, %p82
      %s85 = sadd.s32 %s84, 1
      %p88 = scmp.eq.s32.totalorder %s24, 5
      %p89 = scmp.ne.s32.totalorder %s84, %s86
      %p90 = scmp.eq.s32.totalorder %s24, 0
      %p91 = por %p89, %p90
      %p92 = scmp.ne.s32.totalorder %s84, %s86
      %p93 = scmp.eq.s32.totalorder %s29, 5
      %p94 = por %p92, %p93
      %p95 = scmp.ne.s32.totalorder %s86, %s87
      %p96 = scmp.eq.s32.totalorder %s29, 0
      %p97 = por %p95, %p96
      %p98 = scmp.ne.s32.totalorder %s86, %s87
      %p99 = scmp.eq.s32.totalorder %s30, 5
      %p100 = por %p98, %p99
      %p102 = scmp.ne.s32.totalorder %s87, %s101
      %p103 = scmp.eq.s32.totalorder %s30, 0
      %p104 = por %p102, %p103
      %s106 = sadd.s32 %s105, 1
      %p109 = scmp.eq.s32.totalorder %s24, 5
      %p110 = scmp.ne.s32.totalorder %s105, %s107
      %p111 = scmp.eq.s32.totalorder %s24, 0
      %p112 = por %p110, %p111
      %p113 = scmp.ne.s32.totalorder %s105, %s107
      %p114 = scmp.eq.s32.totalorder %s29, 5
      %p115 = por %p113, %p114
      %p116 = scmp.ne.s32.totalorder %s107, %s108
      %p117 = scmp.eq.s32.totalorder %s29, 0
      %p118 = por %p116, %p117
      %p119 = scmp.ne.s32.totalorder %s107, %s108
      %p120 = scmp.eq.s32.totalorder %s30, 5
      %p121 = por %p119, %p120
      %p123 = scmp.ne.s32.totalorder %s108, %s122
      %p124 = scmp.eq.s32.totalorder %s30, 0
      %p125 = por %p123, %p124
      %s127 = sadd.s32 %s126, 1
      %p130 = scmp.eq.s32.totalorder %s24, 5
      %p131 = scmp.ne.s32.totalorder %s126, %s128
      %p132 = scmp.eq.s32.totalorder %s24, 0
      %p133 = por %p131, %p132
      %p134 = scmp.ne.s32.totalorder %s126, %s128
      %p135 = scmp.eq.s32.totalorder %s29, 5
      %p136 = por %p134, %p135
      %p137 = scmp.ne.s32.totalorder %s128, %s129
      %p138 = scmp.eq.s32.totalorder %s29, 0
      %p139 = por %p137, %p138
      %p140 = scmp.ne.s32.totalorder %s128, %s129
      %p141 = scmp.eq.s32.totalorder %s30, 5
      %p142 = por %p140, %p141
      %p144 = scmp.ne.s32.totalorder %s129, %s143
      %p145 = scmp.eq.s32.totalorder %s30, 0
      %p146 = por %p144, %p145
      %s148 = sadd.s32 %s147, 1
      %p151 = scmp.eq.s32.totalorder %s24, 5
      %p152 = scmp.ne.s32.totalorder %s147, %s149
      %p153 = scmp.eq.s32.totalorder %s24, 0
      %p154 = por %p152, %p153
      %p155 = scmp.ne.s32.totalorder %s147, %s149
      %p156 = scmp.eq.s32.totalorder %s29, 5
      %p157 = por %p155, %p156
      %p158 = scmp.ne.s32.totalorder %s149, %s150
      %p159 = scmp.eq.s32.totalorder %s29, 0
      %p160 = por %p158, %p159
      %p161 = scmp.ne.s32.totalorder %s149, %s150
      %p162 = scmp.eq.s32.totalorder %s30, 5
      %p163 = por %p161, %p162
      %p165 = scmp.ne.s32.totalorder %s150, %s164
      %p166 = scmp.eq.s32.totalorder %s30, 0
      %p167 = por %p165, %p166
      %s169 = sadd.s32 %s168, 1
      %p172 = scmp.eq.s32.totalorder %s24, 5
      %p173 = scmp.ne.s32.totalorder %s168, %s170
      %p174 = scmp.eq.s32.totalorder %s24, 0
      %p175 = por %p173, %p174
      %p176 = scmp.ne.s32.totalorder %s168, %s170
      %p177 = scmp.eq.s32.totalorder %s29, 5
      %p178 = por %p176, %p177
      %p179 = scmp.ne.s32.totalorder %s170, %s171
      %p180 = scmp.eq.s32.totalorder %s29, 0
      %p181 = por %p179, %p180
      %p182 = scmp.ne.s32.totalorder %s170, %s171
      %p183 = scmp.eq.s32.totalorder %s30, 5
      %p184 = por %p182, %p183
      %p186 = scmp.ne.s32.totalorder %s171, %s185
      %p187 = scmp.eq.s32.totalorder %s30, 0
      %p188 = por %p186, %p187
      %s190 = sadd.s32 %s189, 1
      %p193 = scmp.eq.s32.totalorder %s24, 5
      %p194 = scmp.ne.s32.totalorder %s189, %s191
      %p195 = scmp.eq.s32.totalorder %s24, 0
      %p196 = por %p194, %p195
      %p197 = scmp.ne.s32.totalorder %s189, %s191
      %p198 = scmp.eq.s32.totalorder %s29, 5
      %p199 = por %p197, %p198
      %p200 = scmp.ne.s32.totalorder %s191, %s192
      %p201 = scmp.eq.s32.totalorder %s29, 0
      %p202 = por %p200, %p201
      %p203 = scmp.ne.s32.totalorder %s191, %s192
      %p204 = scmp.eq.s32.totalorder %s30, 5
      %p205 = por %p203, %p204
      %p207 = scmp.ne.s32.totalorder %s192, %s206
      %p208 = scmp.eq.s32.totalorder %s30, 0
      %p209 = por %p207, %p208
      %s211 = sadd.s32 %s210, 1
      %p214 = scmp.eq.s32.totalorder %s24, 5
      %p215 = scmp.ne.s32.totalorder %s210, %s212
      %p216 = scmp.eq.s32.totalorder %s24, 0
      %p217 = por %p215, %p216
      %p218 = scmp.ne.s32.totalorder %s210, %s212
      %p219 = scmp.eq.s32.totalorder %s29, 5
      %p220 = por %p218, %p219
      %p221 = scmp.ne.s32.totalorder %s212, %s213
      %p222 = scmp.eq.s32.totalorder %s29, 0
      %p223 = por %p221, %p222
      %p224 = scmp.ne.s32.totalorder %s212, %s213
      %p225 = scmp.eq.s32.totalorder %s30, 5
      %p226 = por %p224, %p225
      %p228 = scmp.ne.s32.totalorder %s213, %s227
      %p229 = scmp.eq.s32.totalorder %s30, 0
      %p230 = por %p228, %p229
      %s232 = sadd.s32 %s231, 1
      %p235 = scmp.eq.s32.totalorder %s24, 5
      %p236 = scmp.ne.s32.totalorder %s231, %s233
      %p237 = scmp.eq.s32.totalorder %s24, 0
      %p238 = por %p236, %p237
      %p239 = scmp.ne.s32.totalorder %s231, %s233
      %p240 = scmp.eq.s32.totalorder %s29, 5
      %p241 = por %p239, %p240
      %p242 = scmp.ne.s32.totalorder %s233, %s234
      %p243 = scmp.eq.s32.totalorder %s29, 0
      %p244 = por %p242, %p243
      %p245 = scmp.ne.s32.totalorder %s233, %s234
      %p246 = scmp.eq.s32.totalorder %s30, 5
      %p247 = por %p245, %p246
      %p249 = scmp.ne.s32.totalorder %s234, %s248
      %p250 = scmp.eq.s32.totalorder %s30, 0
      %p251 = por %p249, %p250
      %s253 = sadd.s32 %s252, 1
      %p256 = scmp.eq.s32.totalorder %s24, 5
      %p257 = scmp.ne.s32.totalorder %s252, %s254
      %p258 = scmp.eq.s32.totalorder %s24, 0
      %p259 = por %p257, %p258
      %p260 = scmp.ne.s32.totalorder %s252, %s254
      %p261 = scmp.eq.s32.totalorder %s29, 5
      %p262 = por %p260, %p261
      %p263 = scmp.ne.s32.totalorder %s254, %s255
      %p264 = scmp.eq.s32.totalorder %s29, 0
      %p265 = por %p263, %p264
      %p266 = scmp.ne.s32.totalorder %s254, %s255
      %p267 = scmp.eq.s32.totalorder %s30, 5
      %p268 = por %p266, %p267
      %p270 = scmp.ne.s32.totalorder %s255, %s269
      %p271 = scmp.eq.s32.totalorder %s30, 0
      %p272 = por %p270, %p271
      %s274 = sadd.s32 %s273, 1
      %p277 = scmp.eq.s32.totalorder %s24, 5
      %p278 = scmp.ne.s32.totalorder %s273, %s275
      %p279 = scmp.eq.s32.totalorder %s24, 0
      %p280 = por %p278, %p279
      %p281 = scmp.ne.s32.totalorder %s273, %s275
      %p282 = scmp.eq.s32.totalorder %s29, 5
      %p283 = por %p281, %p282
      %p284 = scmp.ne.s32.totalorder %s275, %s276
      %p285 = scmp.eq.s32.totalorder %s29, 0
      %p286 = por %p284, %p285
      %p287 = scmp.ne.s32.totalorder %s275, %s276
      %p288 = scmp.eq.s32.totalorder %s30, 5
      %p289 = por %p287, %p288
      %p291 = scmp.ne.s32.totalorder %s276, %s290
      %p292 = scmp.eq.s32.totalorder %s30, 0
      %p293 = por %p291, %p292
      %s295 = sadd.s32 %s294, 1
      %p298 = scmp.eq.s32.totalorder %s24, 5
      %p299 = scmp.ne.s32.totalorder %s294, %s296
      %p300 = scmp.eq.s32.totalorder %s24, 0
      %p301 = por %p299, %p300
      %p302 = scmp.ne.s32.totalorder %s294, %s296
      %p303 = scmp.eq.s32.totalorder %s29, 5
      %p304 = por %p302, %p303
      %p305 = scmp.ne.s32.totalorder %s296, %s297
      %p306 = scmp.eq.s32.totalorder %s29, 0
      %p307 = por %p305, %p306
      %p308 = scmp.ne.s32.totalorder %s296, %s297
      %p309 = scmp.eq.s32.totalorder %s30, 5
      %p310 = por %p308, %p309
      %p312 = scmp.ne.s32.totalorder %s297, %s311
      %p313 = scmp.eq.s32.totalorder %s30, 0
      %p314 = por %p312, %p313
      %s316 = sadd.s32 %s315, 1
      %p319 = scmp.eq.s32.totalorder %s24, 5
      %p320 = scmp.ne.s32.totalorder %s315, %s317
      %p321 = scmp.eq.s32.totalorder %s24, 0
      %p322 = por %p320, %p321
      %p323 = scmp.ne.s32.totalorder %s315, %s317
      %p324 = scmp.eq.s32.totalorder %s29, 5
      %p325 = por %p323, %p324
      %p326 = scmp.ne.s32.totalorder %s317, %s318
      %p327 = scmp.eq.s32.totalorder %s29, 0
      %p328 = por %p326, %p327
      %p329 = scmp.ne.s32.totalorder %s317, %s318
      %p330 = scmp.eq.s32.totalorder %s30, 5
      %p331 = por %p329, %p330
      %p333 = scmp.ne.s32.totalorder %s318, %s332
      %p334 = scmp.eq.s32.totalorder %s30, 0
      %p335 = por %p333, %p334
      %s337 = sadd.s32 %s336, 1
      %p340 = scmp.eq.s32.totalorder %s24, 5
      %p341 = scmp.ne.s32.totalorder %s336, %s338
      %p342 = scmp.eq.s32.totalorder %s24, 0
      %p343 = por %p341, %p342
      %p344 = scmp.ne.s32.totalorder %s336, %s338
      %p345 = scmp.eq.s32.totalorder %s29, 5
      %p346 = por %p344, %p345
      %p347 = scmp.ne.s32.totalorder %s338, %s339
      %p348 = scmp.eq.s32.totalorder %s29, 0
      %p349 = por %p347, %p348
      %p350 = scmp.ne.s32.totalorder %s338, %s339
      %p351 = scmp.eq.s32.totalorder %s30, 5
      %p352 = por %p350, %p351
      %p354 = scmp.ne.s32.totalorder %s339, %s353
      %p355 = scmp.eq.s32.totalorder %s30, 0
      %p356 = por %p354, %p355
      %s357 = ssub.s32 %s24, %s31
      %p358 = scmp.eq.s32.totalorder %s357, 0
      %s360 = sadd.s32 %s359, 1
      %s361 = scalar_select %p358, %s359, %s360
      %p364 = pneg %p358
      %p365 = scmp.eq.s32.totalorder %s24, 5
      %p366 = por %p364, %p365
      %p367 = scmp.ne.s32.totalorder %s359, %s362
      %p368 = scmp.eq.s32.totalorder %s24, 0
      %p369 = por %p367, %p368
      %p370 = scmp.ne.s32.totalorder %s359, %s362
      %p371 = scmp.eq.s32.totalorder %s29, 5
      %p372 = por %p370, %p371
      %p373 = scmp.ne.s32.totalorder %s362, %s363
      %p374 = scmp.eq.s32.totalorder %s29, 0
      %p375 = por %p373, %p374
      %p376 = scmp.ne.s32.totalorder %s362, %s363
      %p377 = scmp.eq.s32.totalorder %s30, 5
      %p378 = por %p376, %p377
      %p380 = scmp.ne.s32.totalorder %s363, %s379
      %p381 = scmp.eq.s32.totalorder %s30, 0
      %p382 = por %p380, %p381
      %p383 = scmp.le.s32.totalorder 1, %s24
      %p384 = scmp.lt.s32.totalorder %s24, 7
      %p385 = pnand %p383, %p384
      %p386 = pneg %p385
      // Predicated region
      $region9: #{tpu_custom_call.1} parent=5 // pred_check
        _
      $region10: #{tpu_custom_call.1} parent=5 // pred_check_branch
        %388 = sbr.rel (%p385) target = $region12
      $region11: #{tpu_custom_call.1} parent=5 // pred_region
        %s389 = ssub.s32 %s24, 1
        // Predicated region
        $region13: #{tpu_custom_call.1} parent=11 // pred_check
          %p390 = pneg %p97
        $region14: #{tpu_custom_call.1} parent=11 // pred_check_branch
          %392 = sbr.rel (%p390) target = $region16
        $region15: #{tpu_custom_call.1} parent=11 // pred_region
          _
        $region16: #{tpu_custom_call.1} parent=11 // pred_fallthru
          _
        // Predicated region
        $region17: #{tpu_custom_call.1} parent=11 // pred_check
          %p393 = pneg %p118
        $region18: #{tpu_custom_call.1} parent=11 // pred_check_branch
          %395 = sbr.rel (%p393) target = $region20
        $region19: #{tpu_custom_call.1} parent=11 // pred_region
          _
        $region20: #{tpu_custom_call.1} parent=11 // pred_fallthru
          _
        // Predicated region
        $region21: #{tpu_custom_call.1} parent=11 // pred_check
          %p396 = pneg %p139
        $region22: #{tpu_custom_call.1} parent=11 // pred_check_branch
          %398 = sbr.rel (%p396) target = $region24
        $region23: #{tpu_custom_call.1} parent=11 // pred_region
          _
        $region24: #{tpu_custom_call.1} parent=11 // pred_fallthru
          _
        // Predicated region
        $region25: #{tpu_custom_call.1} parent=11 // pred_check
          %p399 = pneg %p160
        $region26: #{tpu_custom_call.1} parent=11 // pred_check_branch
          %401 = sbr.rel (%p399) target = $region28
        $region27: #{tpu_custom_call.1} parent=11 // pred_region
          _
        $region28: #{tpu_custom_call.1} parent=11 // pred_fallthru
          _
        // Predicated region
        $region29: #{tpu_custom_call.1} parent=11 // pred_check
          %p402 = pneg %p181
        $region30: #{tpu_custom_call.1} parent=11 // pred_check_branch
          %404 = sbr.rel (%p402) target = $region32
        $region31: #{tpu_custom_call.1} parent=11 // pred_region
          _
        $region32: #{tpu_custom_call.1} parent=11 // pred_fallthru
          _
        // Predicated region
        $region33: #{tpu_custom_call.1} parent=11 // pred_check
          %p405 = pneg %p202
        $region34: #{tpu_custom_call.1} parent=11 // pred_check_branch
          %407 = sbr.rel (%p405) target = $region36
        $region35: #{tpu_custom_call.1} parent=11 // pred_region
          _
        $region36: #{tpu_custom_call.1} parent=11 // pred_fallthru
          _
        // Predicated region
        $region37: #{tpu_custom_call.1} parent=11 // pred_check
          %p408 = pneg %p223
        $region38: #{tpu_custom_call.1} parent=11 // pred_check_branch
          %410 = sbr.rel (%p408) target = $region40
        $region39: #{tpu_custom_call.1} parent=11 // pred_region
          _
        $region40: #{tpu_custom_call.1} parent=11 // pred_fallthru
          _
        // Predicated region
        $region41: #{tpu_custom_call.1} parent=11 // pred_check
          %p411 = pneg %p244
        $region42: #{tpu_custom_call.1} parent=11 // pred_check_branch
          %413 = sbr.rel (%p411) target = $region44
        $region43: #{tpu_custom_call.1} parent=11 // pred_region
          _
        $region44: #{tpu_custom_call.1} parent=11 // pred_fallthru
          _
        // Predicated region
        $region45: #{tpu_custom_call.1} parent=11 // pred_check
          %p414 = pneg %p265
        $region46: #{tpu_custom_call.1} parent=11 // pred_check_branch
          %416 = sbr.rel (%p414) target = $region48
        $region47: #{tpu_custom_call.1} parent=11 // pred_region
          _
        $region48: #{tpu_custom_call.1} parent=11 // pred_fallthru
          _
        // Predicated region
        $region49: #{tpu_custom_call.1} parent=11 // pred_check
          %p417 = pneg %p286
        $region50: #{tpu_custom_call.1} parent=11 // pred_check_branch
          %419 = sbr.rel (%p417) target = $region52
        $region51: #{tpu_custom_call.1} parent=11 // pred_region
          _
        $region52: #{tpu_custom_call.1} parent=11 // pred_fallthru
          _
        // Predicated region
        $region53: #{tpu_custom_call.1} parent=11 // pred_check
          %p420 = pneg %p307
        $region54: #{tpu_custom_call.1} parent=11 // pred_check_branch
          %422 = sbr.rel (%p420) target = $region56
        $region55: #{tpu_custom_call.1} parent=11 // pred_region
          _
        $region56: #{tpu_custom_call.1} parent=11 // pred_fallthru
          _
        // Predicated region
        $region57: #{tpu_custom_call.1} parent=11 // pred_check
          %p423 = pneg %p328
        $region58: #{tpu_custom_call.1} parent=11 // pred_check_branch
          %425 = sbr.rel (%p423) target = $region60
        $region59: #{tpu_custom_call.1} parent=11 // pred_region
          _
        $region60: #{tpu_custom_call.1} parent=11 // pred_fallthru
          _
        // Predicated region
        $region61: #{tpu_custom_call.1} parent=11 // pred_check
          %p426 = pneg %p349
        $region62: #{tpu_custom_call.1} parent=11 // pred_check_branch
          %428 = sbr.rel (%p426) target = $region64
        $region63: #{tpu_custom_call.1} parent=11 // pred_region
          _
        $region64: #{tpu_custom_call.1} parent=11 // pred_fallthru
          _
      $region12: #{tpu_custom_call.1} parent=5 // pred_fallthru
        _
      %p429 = scmp.lt.s32.totalorder %s24, 6
      // Predicated region
      $region65: #{tpu_custom_call.1} parent=5 // pred_check
        %p430 = pneg %p429
      $region66: #{tpu_custom_call.1} parent=5 // pred_check_branch
        %432 = sbr.rel (%p430) target = $region68
      $region67: #{tpu_custom_call.1} parent=5 // pred_region
        // Predicated region
        $region69: #{tpu_custom_call.1} parent=67 // pred_check
          %p433 = pneg %p44
        $region70: #{tpu_custom_call.1} parent=67 // pred_check_branch
          %435 = sbr.rel (%p433) target = $region72
        $region71: #{tpu_custom_call.1} parent=67 // pred_region
          %p436 = scmp.lt.s32.totalorder %s24, 5
          %s437 = scalar_select %p436, %s24, 5
          %s438 = smul.addr %s437, 8
          %s439 = smul.addr %s438, 4
          %s440 = scalar_lea.vmem %s0, %s439
        $region72: #{tpu_custom_call.1} parent=67 // pred_fallthru
          _
        // Predicated region
        $region73: #{tpu_custom_call.1} parent=67 // pred_check
          %p441 = pneg %p70
        $region74: #{tpu_custom_call.1} parent=67 // pred_check_branch
          %443 = sbr.rel (%p441) target = $region76
        $region75: #{tpu_custom_call.1} parent=67 // pred_region
          %p444 = scmp.lt.s32.totalorder %s24, 5
          %s445 = scalar_select %p444, %s24, 5
          %s446 = smul.addr %s445, 2
          %s447 = smul.addr %s446, 4
          %s448 = scalar_lea.vmem %s1, %s447
        $region76: #{tpu_custom_call.1} parent=67 // pred_fallthru
          _
      $region68: #{tpu_custom_call.1} parent=5 // pred_fallthru
        _
      %p449 = scmp.le.s32.totalorder 1, %s24
      %p450 = scmp.lt.s32.totalorder %s24, 7
      %p451 = pnand %p449, %p450
      %p452 = pneg %p451
      // Predicated region
      $region77: #{tpu_custom_call.1} parent=5 // pred_check
        _
      $region78: #{tpu_custom_call.1} parent=5 // pred_check_branch
        %454 = sbr.rel (%p451) target = $region80
      $region79: #{tpu_custom_call.1} parent=5 // pred_region
        %s455 = ssub.s32 %s24, 1
        %p456 = scmp.lt.s32.totalorder %s29, 5
        %s457 = scalar_select %p456, %s29, 5
        %s458 = smul.addr %s457, 8
        %s459 = smul.addr %s458, 4
        %s460 = scalar_lea.vmem %s0, %s459
        %p461 = pneg %p50
        %p462 = pneg %p47
        %p463 = scmp.lt.s32.totalorder %s29, 5
        %s464 = scalar_select %p463, %s29, 5
        %s465 = smul.addr %s464, 2
        %s466 = smul.addr %s465, 4
        %s467 = scalar_lea.vmem %s1, %s466
        %p468 = pneg %p76
        %p469 = pneg %p73
        %p470 = pneg %p97
        %p471 = pneg %p94
        %p472 = pneg %p118
        %p473 = pneg %p115
        %p474 = pneg %p139
        %p475 = pneg %p136
        %p476 = pneg %p160
        %p477 = pneg %p157
        %p478 = pneg %p181
        %p479 = pneg %p178
        %p480 = pneg %p202
        %p481 = pneg %p199
        %p482 = pneg %p223
        %p483 = pneg %p220
        %p484 = pneg %p244
        %p485 = pneg %p241
        %p486 = pneg %p265
        %p487 = pneg %p262
        %p488 = pneg %p286
        %p489 = pneg %p283
        %p490 = pneg %p307
        %p491 = pneg %p304
        %p492 = pneg %p328
        %p493 = pneg %p325
        %p494 = pneg %p349
        %p495 = pneg %p346
        %p496 = pneg %p375
        %p497 = pneg %p372
        %s498 = sand.u32 %s362, 1
        %s499 = scalar_lea.sflag [#allocation3], %s498
        %s500 = sand.u32 %s362, 1
        %s501 = smul.addr %s500, 8
        %s502 = scalar_lea.vmem [#allocation2], %s501
        %p503 = scmp.lt.s32.totalorder %s29, 5
        %s504 = scalar_select %p503, %s29, 5
        %s505 = smul.addr %s504, 8
        %s506 = smul.addr %s505, 4
        %s507 = scalar_lea.vmem %s0, %s506
        %p508 = scmp.lt.s32.totalorder %s29, 5
        %s509 = scalar_select %p508, %s29, 5
        %s510 = smul.addr %s509, 2
        %s511 = smul.addr %s510, 4
        %s512 = scalar_lea.vmem %s1, %s511
        %v514 = vld [vmem:[%s507] sm:$0xf]
        %v515 = vld [vmem:[%s507 + $0x4] sm:$0xf]
        %v516 = vld [vmem:[%s507 + $0x8] sm:$0xf]
        %v517 = vld [vmem:[%s507 + $0xc] sm:$0xf]
        %v518 = vld [vmem:[%s507 + $0x10] sm:$0xf]
        %v519 = vld [vmem:[%s507 + $0x14] sm:$0xf]
        %v520 = vld [vmem:[%s507 + $0x18] sm:$0xf]
        %v521 = vld [vmem:[%s507 + $0x1c] sm:$0xf]
        %v522 = vld [vmem:[%s2] sm:$0x3]
        %v523 = vld [vmem:[%s3] sm:$0x1]
        %v525 = vlaneseq
        %v526 = vshrl.u32 %v525, 7
        %v527 = vsub.s32 0, %v526
        %v528 = vrot.slane %v523, %v527
        %v538 = vunpack.c.l.b16 %v514
        %v539 = vunpack.c.l.b16 %v515
        %v540 = vunpack.c.l.b16 %v516
        %v541 = vunpack.c.l.b16 %v517
        %v542 = vunpack.c.l.b16 %v518
        %v543 = vunpack.c.l.b16 %v519
        %v544 = vunpack.c.l.b16 %v520
        %v545 = vunpack.c.l.b16 %v521
        %v546 = vpack.c.b16 %v539, %v538
        %v547 = vpack.c.b16 %v541, %v540
        %v548 = vpack.c.b16 %v543, %v542
        %v549 = vpack.c.b16 %v545, %v544
        %vm550 = vcmask 23552
        %v552 = vsel %vm550, %v546, 0
        %v555 = vsel %vm550, %v547, 0
        %v558 = vsel %vm550, %v548, 0
        %v561 = vsel %vm550, %v549, 0
        %vm563 = vcmask 1040384
        %vm564 = vcmask 1041408
        %v565 = vsel %vm563, 4294967295, 65535
        %v566 = vsel %vm564, %v565, 0
        %v568 = vand.u32 %v522, %v566
        %570 = vmatprep.subr.bf16.mxu0 0
        %571 = vmatpush1.bf16.msra.mxu0 %v568
        %572 = vmatprep.subr.bf16.mxu0 0
        %573 = vmatpush1.bf16.msra.mxu0 0
        %574 = vmatprep.subr.bf16.mxu0 0
        %575 = vmatpush1.bf16.msra.mxu0 0
        %576 = vmatprep.subr.bf16.mxu0 0
        %577 = vmatpush1.bf16.msra.mxu0 0
        %578 = vmatprep.subr.bf16.mxu0 0
        %579 = vmatpush1.bf16.msra.mxu0 0
        %580 = vmatprep.subr.bf16.mxu0 0
        %581 = vmatpush1.bf16.msra.mxu0 0
        %582 = vmatprep.subr.bf16.mxu0 0
        %583 = vmatpush1.bf16.msra.mxu0 0
        %584 = vmatprep.subr.bf16.mxu0 0
        %585 = vmatpush1.bf16.msra.mxu0 0
        %586 = vmatprep.subr.bf16.mxu0 0
        %587 = vmatpush1.bf16.msra.mxu0 0
        %588 = vmatprep.subr.bf16.mxu0 0
        %589 = vmatpush1.bf16.msra.mxu0 0
        %590 = vmatprep.subr.bf16.mxu0 0
        %591 = vmatpush1.bf16.msra.mxu0 0
        %592 = vmatprep.subr.bf16.mxu0 0
        %593 = vmatpush1.bf16.msra.mxu0 0
        %594 = vmatprep.subr.bf16.mxu0 0
        %595 = vmatpush1.bf16.msra.mxu0 0
        %596 = vmatprep.subr.bf16.mxu0 0
        %597 = vmatpush1.bf16.msra.mxu0 0
        %598 = vmatprep.subr.bf16.mxu0 0
        %599 = vmatpush1.bf16.msra.mxu0 0
        %600 = vmatprep.subr.bf16.mxu0 0
        %601 = vmatpush1.bf16.msra.mxu0 0
        %602 = vmatprep.mubr.bf16.mxu0 0
        %603 = vmatmul.mubr.bf16.gmra.mrb[0].mxu0 %v552
        %v604 = vpop.f32.mrb[0].mxu0
        %v605 = vadd.f32 %v528, %v604
        %v606 = vpop.f32.mrb[0].mxu0
        %v607 = vpop.f32.mrb[0].mxu0
        %v608 = vadd.f32 %v528, %v607
        %v609 = vpop.f32.mrb[0].mxu0
        %610 = vmatprep.mubr.bf16.mxu0 0
        %611 = vmatmul.mubr.bf16.gmra.mrb[0].mxu0 %v555
        %v612 = vpop.f32.mrb[0].mxu0
        %v613 = vadd.f32 %v528, %v612
        %v614 = vpop.f32.mrb[0].mxu0
        %v615 = vpop.f32.mrb[0].mxu0
        %v616 = vadd.f32 %v528, %v615
        %v617 = vpop.f32.mrb[0].mxu0
        %618 = vmatprep.mubr.bf16.mxu0 0
        %619 = vmatmul.mubr.bf16.gmra.mrb[0].mxu0 %v558
        %v620 = vpop.f32.mrb[0].mxu0
        %v621 = vadd.f32 %v528, %v620
        %v622 = vpop.f32.mrb[0].mxu0
        %v623 = vpop.f32.mrb[0].mxu0
        %v624 = vadd.f32 %v528, %v623
        %v625 = vpop.f32.mrb[0].mxu0
        %626 = vmatprep.mubr.bf16.mxu0 0
        %627 = vmatmul.mubr.bf16.gmra.mrb[0].mxu0 %v561
        %v628 = vpop.f32.mrb[0].mxu0
        %v629 = vadd.f32 %v528, %v628
        %v630 = vpop.f32.mrb[0].mxu0
        %v631 = vpop.f32.mrb[0].mxu0
        %v632 = vadd.f32 %v528, %v631
        %v633 = vpop.f32.mrb[0].mxu0
        %634 = vdwg.mxu0
        %v635 = vmax.f32 %v605, 0.0
        %v636 = vmax.f32 %v608, 0.0
        %v637 = vmax.f32 %v613, 0.0
        %v638 = vmax.f32 %v616, 0.0
        %v639 = vmax.f32 %v621, 0.0
        %v640 = vmax.f32 %v624, 0.0
        %v641 = vmax.f32 %v629, 0.0
        %v642 = vmax.f32 %v632, 0.0
        %v643 = vpack.c.bf16 %v636, %v635
        %v644 = vpack.c.bf16 %v638, %v637
        %v645 = vpack.c.bf16 %v640, %v639
        %v646 = vpack.c.bf16 %v642, %v641
        %v647 = vld [vmem:[%s512] sm:$0xf]
        %v648 = vld [vmem:[%s512 + $0x4] sm:$0xf]
        %v649 = vld [vmem:[%s4] sm:$0x3f]
        %v650 = vld [vmem:[%s5] sm:$0x7]
        %v652 = vlaneseq
        %v653 = vshrl.u32 %v652, 7
        %v654 = vsub.s32 0, %v653
        %v655 = vrot.slane %v650, %v654
        %v656 = vlaneseq
        %v657 = vshrl.u32 %v656, 7
        %v658 = vsub.s32 1, %v657
        %v659 = vrot.slane %v650, %v658
        %v660 = vlaneseq
        %v661 = vshrl.u32 %v660, 7
        %v662 = vsub.s32 2, %v661
        %v663 = vrot.slane %v650, %v662
        %v669 = vunpack.c.l.b16 %v647
        %v670 = vunpack.c.l.b16 %v648
        %v671 = vpack.c.b16 %v670, %v669
        %v673 = vcombine.high %v649, %v649
        %v675 = vunpack.c.l.s4 1983009808
        %v676 = vunpack.c.0.s8 %v675
        %v677 = vlaneseq
        %v678 = vshrl.u32 %v677, 7
        %v679 = vsub.s32 %v676, %v678
        %v680 = vrot.slane %v649, %v679
        %v682 = vunpack.c.l.s4 1983009808
        %v683 = vunpack.c.0.s8 %v682
        %v684 = vlaneseq
        %v685 = vshrl.u32 %v684, 7
        %v686 = vsub.s32 %v683, %v685
        %v687 = vrot.slane %v673, %v686
        %v688 = vcombine.high %v680, %v680
        %v690 = vsel %vm550, %v671, 0
        %v693 = vand.u32 %v680, %v566
        %v696 = vand.u32 %v688, %v566
        %v699 = vand.u32 %v687, %v566
        %701 = vmatprep.subr.bf16.mxu0 %v696
        %702 = vmatpush1.bf16.msra.mxu0 %v693
        %703 = vmatprep.subr.bf16.mxu0 0
        %704 = vmatpush1.bf16.msra.mxu0 0
        %705 = vmatprep.subr.bf16.mxu0 0
        %706 = vmatpush1.bf16.msra.mxu0 0
        %707 = vmatprep.subr.bf16.mxu0 0
        %708 = vmatpush1.bf16.msra.mxu0 0
        %709 = vmatprep.subr.bf16.mxu0 0
        %710 = vmatpush1.bf16.msra.mxu0 0
        %711 = vmatprep.subr.bf16.mxu0 0
        %712 = vmatpush1.bf16.msra.mxu0 0
        %713 = vmatprep.subr.bf16.mxu0 0
        %714 = vmatpush1.bf16.msra.mxu0 0
        %715 = vmatprep.subr.bf16.mxu0 0
        %716 = vmatpush1.bf16.msra.mxu0 0
        %717 = vmatprep.subr.bf16.mxu0 0
        %718 = vmatpush1.bf16.msra.mxu0 0
        %719 = vmatprep.subr.bf16.mxu0 0
        %720 = vmatpush1.bf16.msra.mxu0 0
        %721 = vmatprep.subr.bf16.mxu0 0
        %722 = vmatpush1.bf16.msra.mxu0 0
        %723 = vmatprep.subr.bf16.mxu0 0
        %724 = vmatpush1.bf16.msra.mxu0 0
        %725 = vmatprep.subr.bf16.mxu0 0
        %726 = vmatpush1.bf16.msra.mxu0 0
        %727 = vmatprep.subr.bf16.mxu0 0
        %728 = vmatpush1.bf16.msra.mxu0 0
        %729 = vmatprep.subr.bf16.mxu0 0
        %730 = vmatpush1.bf16.msra.mxu0 0
        %731 = vmatprep.subr.bf16.mxu0 0
        %732 = vmatpush1.bf16.msra.mxu0 0
        %733 = vmatprep.mubr.bf16.mxu0 0
        %734 = vmatmul.mubr.bf16.gmra.mrb[0].mxu0 %v690
        %v735 = vpop.f32.mrb[0].mxu0
        %v736 = vadd.f32 %v655, %v735
        %v737 = vpop.f32.mrb[0].mxu0
        %v738 = vadd.f32 %v659, %v737
        %v739 = vpop.f32.mrb[0].mxu0
        %v740 = vadd.f32 %v655, %v739
        %v741 = vpop.f32.mrb[0].mxu0
        %v742 = vadd.f32 %v659, %v741
        %743 = vdwg.mxu0
        %744 = vmatprep.subr.bf16.mxu0 0
        %745 = vmatpush1.bf16.msra.mxu0 %v699
        %746 = vmatprep.subr.bf16.mxu0 0
        %747 = vmatpush1.bf16.msra.mxu0 0
        %748 = vmatprep.subr.bf16.mxu0 0
        %749 = vmatpush1.bf16.msra.mxu0 0
        %750 = vmatprep.subr.bf16.mxu0 0
        %751 = vmatpush1.bf16.msra.mxu0 0
        %752 = vmatprep.subr.bf16.mxu0 0
        %753 = vmatpush1.bf16.msra.mxu0 0
        %754 = vmatprep.subr.bf16.mxu0 0
        %755 = vmatpush1.bf16.msra.mxu0 0
        %756 = vmatprep.subr.bf16.mxu0 0
        %757 = vmatpush1.bf16.msra.mxu0 0
        %758 = vmatprep.subr.bf16.mxu0 0
        %759 = vmatpush1.bf16.msra.mxu0 0
        %760 = vmatprep.subr.bf16.mxu0 0
        %761 = vmatpush1.bf16.msra.mxu0 0
        %762 = vmatprep.subr.bf16.mxu0 0
        %763 = vmatpush1.bf16.msra.mxu0 0
        %764 = vmatprep.subr.bf16.mxu0 0
        %765 = vmatpush1.bf16.msra.mxu0 0
        %766 = vmatprep.subr.bf16.mxu0 0
        %767 = vmatpush1.bf16.msra.mxu0 0
        %768 = vmatprep.subr.bf16.mxu0 0
        %769 = vmatpush1.bf16.msra.mxu0 0
        %770 = vmatprep.subr.bf16.mxu0 0
        %771 = vmatpush1.bf16.msra.mxu0 0
        %772 = vmatprep.subr.bf16.mxu0 0
        %773 = vmatpush1.bf16.msra.mxu0 0
        %774 = vmatprep.subr.bf16.mxu0 0
        %775 = vmatpush1.bf16.msra.mxu0 0
        %776 = vmatprep.mubr.bf16.mxu0 0
        %777 = vmatmul.mubr.bf16.gmra.mrb[0].mxu0 %v690
        %v778 = vpop.f32.mrb[0].mxu0
        %v779 = vadd.f32 %v663, %v778
        %v780 = vpop.f32.mrb[0].mxu0
        %v781 = vpop.f32.mrb[0].mxu0
        %v782 = vadd.f32 %v663, %v781
        %v783 = vpop.f32.mrb[0].mxu0
        %784 = vdwg.mxu0
        %v785 = vmax.f32 %v736, 0.0
        %v786 = vmax.f32 %v738, 0.0
        %v787 = vmax.f32 %v779, 0.0
        %v788 = vmax.f32 %v740, 0.0
        %v789 = vmax.f32 %v742, 0.0
        %v790 = vmax.f32 %v782, 0.0
        %v791 = vld [vmem:[%s6] sm:$0xff]
        %v792 = vld [vmem:[%s6 + $0x8] sm:$0xff]
        %v793 = vld [vmem:[%s6 + $0x10] sm:$0xff]
        %v794 = vld [vmem:[%s6 + $0x18] sm:$0xff]
        %v795 = vld [vmem:[%s6 + $0x20] sm:$0xff]
        %v796 = vld [vmem:[%s6 + $0x28] sm:$0xff]
        %v797 = vld [vmem:[%s6 + $0x30] sm:$0xff]
        %v798 = vld [vmem:[%s6 + $0x38] sm:$0xff]
        %vm799 = vcmask 130048
        %v801 = vsel %vm799, %v791, 0
        %v804 = vsel %vm799, %v792, 0
        %v807 = vsel %vm799, %v793, 0
        %v810 = vsel %vm799, %v794, 0
        %v813 = vsel %vm799, %v795, 0
        %v816 = vsel %vm799, %v796, 0
        %v819 = vsel %vm799, %v797, 0
        %v822 = vsel %vm799, %v798, 0
        %824 = vmatprep.subr.mxu0 %v786
        %825 = vmatpush1.msra.mxu0 %v785
        %826 = vmatprep.subr.mxu0 %v789
        %827 = vmatpush1.msra.mxu0 %v788
        %828 = vmatprep.subr.mxu0 0.0
        %829 = vmatpush1.msra.mxu0 0.0
        %830 = vmatprep.subr.mxu0 0.0
        %831 = vmatpush1.msra.mxu0 0.0
        %832 = vmatprep.subr.mxu0 0.0
        %833 = vmatpush1.msra.mxu0 0.0
        %834 = vmatprep.subr.mxu0 0.0
        %835 = vmatpush1.msra.mxu0 0.0
        %836 = vmatprep.subr.mxu0 0.0
        %837 = vmatpush1.msra.mxu0 0.0
        %838 = vmatprep.subr.mxu0 0.0
        %839 = vmatpush1.msra.mxu0 0.0
        %840 = vmatprep.subr.mxu0 0.0
        %841 = vmatpush1.msra.mxu0 0.0
        %842 = vmatprep.subr.mxu0 0.0
        %843 = vmatpush1.msra.mxu0 0.0
        %844 = vmatprep.subr.mxu0 0.0
        %845 = vmatpush1.msra.mxu0 0.0
        %846 = vmatprep.subr.mxu0 0.0
        %847 = vmatpush1.msra.mxu0 0.0
        %848 = vmatprep.subr.mxu0 0.0
        %849 = vmatpush1.msra.mxu0 0.0
        %850 = vmatprep.subr.mxu0 0.0
        %851 = vmatpush1.msra.mxu0 0.0
        %852 = vmatprep.subr.mxu0 0.0
        %853 = vmatpush1.msra.mxu0 0.0
        %854 = vmatprep.subr.mxu0 0.0
        %855 = vmatpush1.msra.mxu0 0.0
        %856 = vmatprep.subr.mxu0 0.0
        %857 = vmatpush1.msra.mxu0 0.0
        %858 = vmatprep.subr.mxu0 0.0
        %859 = vmatpush1.msra.mxu0 0.0
        %860 = vmatprep.subr.mxu0 0.0
        %861 = vmatpush1.msra.mxu0 0.0
        %862 = vmatprep.subr.mxu0 0.0
        %863 = vmatpush1.msra.mxu0 0.0
        %864 = vmatprep.subr.mxu0 0.0
        %865 = vmatpush1.msra.mxu0 0.0
        %866 = vmatprep.subr.mxu0 0.0
        %867 = vmatpush1.msra.mxu0 0.0
        %868 = vmatprep.subr.mxu0 0.0
        %869 = vmatpush1.msra.mxu0 0.0
        %870 = vmatprep.subr.mxu0 0.0
        %871 = vmatpush1.msra.mxu0 0.0
        %872 = vmatprep.subr.mxu0 0.0
        %873 = vmatpush1.msra.mxu0 0.0
        %874 = vmatprep.subr.mxu0 0.0
        %875 = vmatpush1.msra.mxu0 0.0
        %876 = vmatprep.subr.mxu0 0.0
        %877 = vmatpush1.msra.mxu0 0.0
        %878 = vmatprep.subr.mxu0 0.0
        %879 = vmatpush1.msra.mxu0 0.0
        %880 = vmatprep.subr.mxu0 0.0
        %881 = vmatpush1.msra.mxu0 0.0
        %882 = vmatprep.subr.mxu0 0.0
        %883 = vmatpush1.msra.mxu0 0.0
        %884 = vmatprep.subr.mxu0 0.0
        %885 = vmatpush1.msra.mxu0 0.0
        %886 = vmatprep.subr.mxu0 0.0
        %887 = vmatpush1.msra.mxu0 0.0
        %888 = vmatprep.mubr.f32.mxu0 0.0
        %889 = vmatmul.mubr.f32.gmra.mrb[0].mxu0 %v801
        %v890 = vpop.f32.mrb[0].mxu0
        %v891 = vadd.f32 0.0, %v890
        %v892 = vpop.f32.mrb[0].mxu0
        %v893 = vadd.f32 0.0, %v892
        %894 = vmatprep.mubr.f32.mxu0 0.0
        %895 = vmatmul.mubr.f32.gmra.mrb[0].mxu0 %v804
        %v896 = vpop.f32.mrb[0].mxu0
        %v897 = vadd.f32 0.0, %v896
        %v898 = vpop.f32.mrb[0].mxu0
        %v899 = vadd.f32 0.0, %v898
        %900 = vmatprep.mubr.f32.mxu0 0.0
        %901 = vmatmul.mubr.f32.gmra.mrb[0].mxu0 %v807
        %v902 = vpop.f32.mrb[0].mxu0
        %v903 = vadd.f32 0.0, %v902
        %v904 = vpop.f32.mrb[0].mxu0
        %v905 = vadd.f32 0.0, %v904
        %906 = vmatprep.mubr.f32.mxu0 0.0
        %907 = vmatmul.mubr.f32.gmra.mrb[0].mxu0 %v810
        %v908 = vpop.f32.mrb[0].mxu0
        %v909 = vadd.f32 0.0, %v908
        %v910 = vpop.f32.mrb[0].mxu0
        %v911 = vadd.f32 0.0, %v910
        %912 = vmatprep.mubr.f32.mxu0 0.0
        %913 = vmatmul.mubr.f32.gmra.mrb[0].mxu0 %v813
        %v914 = vpop.f32.mrb[0].mxu0
        %v915 = vadd.f32 0.0, %v914
        %v916 = vpop.f32.mrb[0].mxu0
        %v917 = vadd.f32 0.0, %v916
        %918 = vmatprep.mubr.f32.mxu0 0.0
        %919 = vmatmul.mubr.f32.gmra.mrb[0].mxu0 %v816
        %v920 = vpop.f32.mrb[0].mxu0
        %v921 = vadd.f32 0.0, %v920
        %v922 = vpop.f32.mrb[0].mxu0
        %v923 = vadd.f32 0.0, %v922
        %924 = vmatprep.mubr.f32.mxu0 0.0
        %925 = vmatmul.mubr.f32.gmra.mrb[0].mxu0 %v819
        %v926 = vpop.f32.mrb[0].mxu0
        %v927 = vadd.f32 0.0, %v926
        %v928 = vpop.f32.mrb[0].mxu0
        %v929 = vadd.f32 0.0, %v928
        %930 = vmatprep.mubr.f32.mxu0 0.0
        %931 = vmatmul.mubr.f32.gmra.mrb[0].mxu0 %v822
        %v932 = vpop.f32.mrb[0].mxu0
        %v933 = vadd.f32 0.0, %v932
        %v934 = vpop.f32.mrb[0].mxu0
        %v935 = vadd.f32 0.0, %v934
        %936 = vdwg.mxu0
        %937 = vmatprep.subr.mxu0 0.0
        %938 = vmatpush1.msra.mxu0 %v787
        %939 = vmatprep.subr.mxu0 0.0
        %940 = vmatpush1.msra.mxu0 %v790
        %941 = vmatprep.subr.mxu0 0.0
        %942 = vmatpush1.msra.mxu0 0.0
        %943 = vmatprep.subr.mxu0 0.0
        %944 = vmatpush1.msra.mxu0 0.0
        %945 = vmatprep.subr.mxu0 0.0
        %946 = vmatpush1.msra.mxu0 0.0
        %947 = vmatprep.subr.mxu0 0.0
        %948 = vmatpush1.msra.mxu0 0.0
        %949 = vmatprep.subr.mxu0 0.0
        %950 = vmatpush1.msra.mxu0 0.0
        %951 = vmatprep.subr.mxu0 0.0
        %952 = vmatpush1.msra.mxu0 0.0
        %953 = vmatprep.subr.mxu0 0.0
        %954 = vmatpush1.msra.mxu0 0.0
        %955 = vmatprep.subr.mxu0 0.0
        %956 = vmatpush1.msra.mxu0 0.0
        %957 = vmatprep.subr.mxu0 0.0
        %958 = vmatpush1.msra.mxu0 0.0
        %959 = vmatprep.subr.mxu0 0.0
        %960 = vmatpush1.msra.mxu0 0.0
        %961 = vmatprep.subr.mxu0 0.0
        %962 = vmatpush1.msra.mxu0 0.0
        %963 = vmatprep.subr.mxu0 0.0
        %964 = vmatpush1.msra.mxu0 0.0
        %965 = vmatprep.subr.mxu0 0.0
        %966 = vmatpush1.msra.mxu0 0.0
        %967 = vmatprep.subr.mxu0 0.0
        %968 = vmatpush1.msra.mxu0 0.0
        %969 = vmatprep.subr.mxu0 0.0
        %970 = vmatpush1.msra.mxu0 0.0
        %971 = vmatprep.subr.mxu0 0.0
        %972 = vmatpush1.msra.mxu0 0.0
        %973 = vmatprep.subr.mxu0 0.0
        %974 = vmatpush1.msra.mxu0 0.0
        %975 = vmatprep.subr.mxu0 0.0
        %976 = vmatpush1.msra.mxu0 0.0
        %977 = vmatprep.subr.mxu0 0.0
        %978 = vmatpush1.msra.mxu0 0.0
        %979 = vmatprep.subr.mxu0 0.0
        %980 = vmatpush1.msra.mxu0 0.0
        %981 = vmatprep.subr.mxu0 0.0
        %982 = vmatpush1.msra.mxu0 0.0
        %983 = vmatprep.subr.mxu0 0.0
        %984 = vmatpush1.msra.mxu0 0.0
        %985 = vmatprep.subr.mxu0 0.0
        %986 = vmatpush1.msra.mxu0 0.0
        %987 = vmatprep.subr.mxu0 0.0
        %988 = vmatpush1.msra.mxu0 0.0
        %989 = vmatprep.subr.mxu0 0.0
        %990 = vmatpush1.msra.mxu0 0.0
        %991 = vmatprep.subr.mxu0 0.0
        %992 = vmatpush1.msra.mxu0 0.0
        %993 = vmatprep.subr.mxu0 0.0
        %994 = vmatpush1.msra.mxu0 0.0
        %995 = vmatprep.subr.mxu0 0.0
        %996 = vmatpush1.msra.mxu0 0.0
        %997 = vmatprep.subr.mxu0 0.0
        %998 = vmatpush1.msra.mxu0 0.0
        %999 = vmatprep.subr.mxu0 0.0
        %1000 = vmatpush1.msra.mxu0 0.0
        %1001 = vmatprep.mubr.f32.mxu0 0.0
        %1002 = vmatmul.mubr.f32.gmra.mrb[0].mxu0 %v801
        %v1003 = vpop.f32.mrb[0].mxu0
        %v1004 = vadd.f32 0.0, %v1003
        %v1005 = vpop.f32.mrb[0].mxu0
        %1006 = vmatprep.mubr.f32.mxu0 0.0
        %1007 = vmatmul.mubr.f32.gmra.mrb[0].mxu0 %v804
        %v1008 = vpop.f32.mrb[0].mxu0
        %v1009 = vadd.f32 0.0, %v1008
        %v1010 = vpop.f32.mrb[0].mxu0
        %1011 = vmatprep.mubr.f32.mxu0 0.0
        %1012 = vmatmul.mubr.f32.gmra.mrb[0].mxu0 %v807
        %v1013 = vpop.f32.mrb[0].mxu0
        %v1014 = vadd.f32 0.0, %v1013
        %v1015 = vpop.f32.mrb[0].mxu0
        %1016 = vmatprep.mubr.f32.mxu0 0.0
        %1017 = vmatmul.mubr.f32.gmra.mrb[0].mxu0 %v810
        %v1018 = vpop.f32.mrb[0].mxu0
        %v1019 = vadd.f32 0.0, %v1018
        %v1020 = vpop.f32.mrb[0].mxu0
        %1021 = vmatprep.mubr.f32.mxu0 0.0
        %1022 = vmatmul.mubr.f32.gmra.mrb[0].mxu0 %v813
        %v1023 = vpop.f32.mrb[0].mxu0
        %v1024 = vadd.f32 0.0, %v1023
        %v1025 = vpop.f32.mrb[0].mxu0
        %1026 = vmatprep.mubr.f32.mxu0 0.0
        %1027 = vmatmul.mubr.f32.gmra.mrb[0].mxu0 %v816
        %v1028 = vpop.f32.mrb[0].mxu0
        %v1029 = vadd.f32 0.0, %v1028
        %v1030 = vpop.f32.mrb[0].mxu0
        %1031 = vmatprep.mubr.f32.mxu0 0.0
        %1032 = vmatmul.mubr.f32.gmra.mrb[0].mxu0 %v819
        %v1033 = vpop.f32.mrb[0].mxu0
        %v1034 = vadd.f32 0.0, %v1033
        %v1035 = vpop.f32.mrb[0].mxu0
        %1036 = vmatprep.mubr.f32.mxu0 0.0
        %1037 = vmatmul.mubr.f32.gmra.mrb[0].mxu0 %v822
        %v1038 = vpop.f32.mrb[0].mxu0
        %v1039 = vadd.f32 0.0, %v1038
        %v1040 = vpop.f32.mrb[0].mxu0
        %1041 = vdwg.mxu0
        %v1042 = vpack.c.bf16 %v897, %v891
        %v1043 = vpack.c.bf16 %v899, %v893
        %v1044 = vpack.c.bf16 %v1009, %v1004
        %v1045 = vpack.c.bf16 %v909, %v903
        %v1046 = vpack.c.bf16 %v911, %v905
        %v1047 = vpack.c.bf16 %v1019, %v1014
        %v1048 = vpack.c.bf16 %v921, %v915
        %v1049 = vpack.c.bf16 %v923, %v917
        %v1050 = vpack.c.bf16 %v1029, %v1024
        %v1051 = vpack.c.bf16 %v933, %v927
        %v1052 = vpack.c.bf16 %v935, %v929
        %v1053 = vpack.c.bf16 %v1039, %v1034
        %v1054 = vld [vmem:[%s8] sm:$0xff]
        %v1055 = vld [vmem:[%s8 + $0x8] sm:$0xff]
        %v1056 = vld [vmem:[%s8 + $0x10] sm:$0xff]
        %v1057 = vld [vmem:[%s8 + $0x18] sm:$0xff]
        %v1058 = vld [vmem:[%s8 + $0x20] sm:$0xff]
        %v1059 = vld [vmem:[%s8 + $0x28] sm:$0xff]
        %v1060 = vld [vmem:[%s8 + $0x30] sm:$0xff]
        %v1061 = vld [vmem:[%s8 + $0x38] sm:$0xff]
        %v1062 = vld [vmem:[%s8 + $0x40] sm:$0xff]
        %v1063 = vld [vmem:[%s8 + $0x48] sm:$0xff]
        %v1064 = vld [vmem:[%s8 + $0x50] sm:$0xff]
        %v1065 = vld [vmem:[%s8 + $0x58] sm:$0xff]
        %v1066 = vld [vmem:[%s8 + $0x60] sm:$0xff]
        %v1067 = vld [vmem:[%s8 + $0x68] sm:$0xff]
        %v1068 = vld [vmem:[%s9] sm:$0xff]
        %v1069 = vld [vmem:[%s9 + $0x8] sm:$0xff]
        %v1070 = vld [vmem:[%s9 + $0x10] sm:$0xff]
        %v1071 = vld [vmem:[%s9 + $0x18] sm:$0xff]
        %v1072 = vld [vmem:[%s9 + $0x20] sm:$0xff]
        %v1073 = vld [vmem:[%s9 + $0x28] sm:$0xff]
        %v1074 = vld [vmem:[%s9 + $0x30] sm:$0xff]
        %v1075 = vld [vmem:[%s9 + $0x38] sm:$0xff]
        %v1076 = vld [vmem:[%s9 + $0x40] sm:$0xff]
        %v1077 = vld [vmem:[%s9 + $0x48] sm:$0xff]
        %v1078 = vld [vmem:[%s9 + $0x50] sm:$0xff]
        %v1079 = vld [vmem:[%s9 + $0x58] sm:$0xff]
        %v1080 = vld [vmem:[%s9 + $0x60] sm:$0xff]
        %v1081 = vld [vmem:[%s9 + $0x68] sm:$0xff]
        %v1082 = vld [vmem:[%s9 + $0x70] sm:$0xff]
        %v1083 = vld [vmem:[%s9 + $0x78] sm:$0xff]
        %v1084 = vld [vmem:[%s9 + $0x80] sm:$0xff]
        %v1085 = vld [vmem:[%s9 + $0x88] sm:$0xff]
        %v1086 = vld [vmem:[%s9 + $0x90] sm:$0xff]
        %v1087 = vld [vmem:[%s9 + $0x98] sm:$0xff]
        %v1088 = vld [vmem:[%s9 + $0xa0] sm:$0xff]
        %v1089 = vld [vmem:[%s9 + $0xa8] sm:$0xff]
        %v1090 = vld [vmem:[%s9 + $0xb0] sm:$0xff]
        %v1091 = vld [vmem:[%s9 + $0xb8] sm:$0xff]
        %v1092 = vld [vmem:[%s9 + $0xc0] sm:$0xff]
        %v1093 = vld [vmem:[%s9 + $0xc8] sm:$0xff]
        %v1094 = vld [vmem:[%s9 + $0xd0] sm:$0xff]
        %v1095 = vld [vmem:[%s9 + $0xd8] sm:$0xff]
        %v1096 = vld [vmem:[%s9 + $0xe0] sm:$0xff]
        %v1097 = vld [vmem:[%s9 + $0xe8] sm:$0xff]
        %v1098 = vld [vmem:[%s9 + $0xf0] sm:$0xff]
        %v1099 = vld [vmem:[%s9 + $0xf8] sm:$0xff]
        %v1100 = vld [vmem:[%s9 + $0x100] sm:$0xff]
        %v1101 = vld [vmem:[%s9 + $0x108] sm:$0xff]
        %v1102 = vld [vmem:[%s9 + $0x110] sm:$0xff]
        %v1103 = vld [vmem:[%s9 + $0x118] sm:$0xff]
        %v1104 = vld [vmem:[%s9 + $0x120] sm:$0xff]
        %v1105 = vld [vmem:[%s9 + $0x128] sm:$0xff]
        %v1106 = vld [vmem:[%s9 + $0x130] sm:$0xff]
        %v1107 = vld [vmem:[%s9 + $0x138] sm:$0xff]
        %v1148 = vunpack.c.l.b16 %v1068
        %v1149 = vunpack.c.h.b16 %v1068
        %v1150 = vunpack.c.l.b16 %v1069
        %v1151 = vunpack.c.h.b16 %v1069
        %v1152 = vunpack.c.l.b16 %v1070
        %v1153 = vunpack.c.h.b16 %v1070
        %v1154 = vunpack.c.l.b16 %v1071
        %v1155 = vunpack.c.h.b16 %v1071
        %v1156 = vunpack.c.l.b16 %v1072
        %v1157 = vunpack.c.h.b16 %v1072
        %v1158 = vunpack.c.l.b16 %v1073
        %v1159 = vunpack.c.h.b16 %v1073
        %v1160 = vunpack.c.l.b16 %v1074
        %v1161 = vunpack.c.h.b16 %v1074
        %v1162 = vunpack.c.l.b16 %v1075
        %v1163 = vunpack.c.h.b16 %v1075
        %v1164 = vunpack.c.l.b16 %v1076
        %v1165 = vunpack.c.h.b16 %v1076
        %v1166 = vunpack.c.l.b16 %v1077
        %v1167 = vunpack.c.h.b16 %v1077
        %v1168 = vunpack.c.l.b16 %v1078
        %v1169 = vunpack.c.h.b16 %v1078
        %v1170 = vunpack.c.l.b16 %v1079
        %v1171 = vunpack.c.h.b16 %v1079
        %v1172 = vunpack.c.l.b16 %v1080
        %v1173 = vunpack.c.h.b16 %v1080
        %v1174 = vunpack.c.l.b16 %v1081
        %v1175 = vunpack.c.h.b16 %v1081
        %v1176 = vunpack.c.l.b16 %v1082
        %v1177 = vunpack.c.h.b16 %v1082
        %v1178 = vunpack.c.l.b16 %v1083
        %v1179 = vunpack.c.h.b16 %v1083
        %v1180 = vunpack.c.l.b16 %v1084
        %v1181 = vunpack.c.h.b16 %v1084
        %v1182 = vunpack.c.l.b16 %v1085
        %v1183 = vunpack.c.h.b16 %v1085
        %v1184 = vunpack.c.l.b16 %v1086
        %v1185 = vunpack.c.h.b16 %v1086
        %v1186 = vunpack.c.l.b16 %v1087
        %v1187 = vunpack.c.h.b16 %v1087
        %v1188 = vunpack.c.l.b16 %v1088
        %v1189 = vunpack.c.h.b16 %v1088
        %v1190 = vunpack.c.l.b16 %v1089
        %v1191 = vunpack.c.h.b16 %v1089
        %v1192 = vunpack.c.l.b16 %v1090
        %v1193 = vunpack.c.h.b16 %v1090
        %v1194 = vunpack.c.l.b16 %v1091
        %v1195 = vunpack.c.h.b16 %v1091
        %v1196 = vunpack.c.l.b16 %v1092
        %v1197 = vunpack.c.h.b16 %v1092
        %v1198 = vunpack.c.l.b16 %v1093
        %v1199 = vunpack.c.h.b16 %v1093
        %v1200 = vunpack.c.l.b16 %v1094
        %v1201 = vunpack.c.h.b16 %v1094
        %v1202 = vunpack.c.l.b16 %v1095
        %v1203 = vunpack.c.h.b16 %v1095
        %v1204 = vunpack.c.l.b16 %v1096
        %v1205 = vunpack.c.h.b16 %v1096
        %v1206 = vunpack.c.l.b16 %v1097
        %v1207 = vunpack.c.h.b16 %v1097
        %v1208 = vunpack.c.l.b16 %v1098
        %v1209 = vunpack.c.h.b16 %v1098
        %v1210 = vunpack.c.l.b16 %v1099
        %v1211 = vunpack.c.h.b16 %v1099
        %v1212 = vunpack.c.l.b16 %v1100
        %v1213 = vunpack.c.h.b16 %v1100
        %v1214 = vunpack.c.l.b16 %v1101
        %v1215 = vunpack.c.h.b16 %v1101
        %v1216 = vunpack.c.l.b16 %v1102
        %v1217 = vunpack.c.h.b16 %v1102
        %v1218 = vunpack.c.l.b16 %v1103
        %v1219 = vunpack.c.h.b16 %v1103
        %v1220 = vunpack.c.l.b16 %v1104
        %v1221 = vunpack.c.h.b16 %v1104
        %v1222 = vunpack.c.l.b16 %v1105
        %v1223 = vunpack.c.h.b16 %v1105
        %v1224 = vunpack.c.l.b16 %v1106
        %v1225 = vunpack.c.h.b16 %v1106
        %v1226 = vunpack.c.l.b16 %v1107
        %v1227 = vunpack.c.h.b16 %v1107
        %v1228 = vpack.c.b16 %v1150, %v1148
        %v1229 = vpack.c.b16 %v1151, %v1149
        %v1230 = vpack.c.b16 %v1154, %v1152
        %v1231 = vpack.c.b16 %v1155, %v1153
        %v1232 = vpack.c.b16 %v1158, %v1156
        %v1233 = vpack.c.b16 %v1159, %v1157
        %v1234 = vpack.c.b16 %v1162, %v1160
        %v1235 = vpack.c.b16 %v1163, %v1161
        %v1236 = vpack.c.b16 %v1166, %v1164
        %v1237 = vpack.c.b16 %v1167, %v1165
        %v1238 = vpack.c.b16 %v1170, %v1168
        %v1239 = vpack.c.b16 %v1171, %v1169
        %v1240 = vpack.c.b16 %v1174, %v1172
        %v1241 = vpack.c.b16 %v1175, %v1173
        %v1242 = vpack.c.b16 %v1178, %v1176
        %v1243 = vpack.c.b16 %v1179, %v1177
        %v1244 = vpack.c.b16 %v1182, %v1180
        %v1245 = vpack.c.b16 %v1183, %v1181
        %v1246 = vpack.c.b16 %v1186, %v1184
        %v1247 = vpack.c.b16 %v1187, %v1185
        %v1248 = vpack.c.b16 %v1190, %v1188
        %v1249 = vpack.c.b16 %v1191, %v1189
        %v1250 = vpack.c.b16 %v1194, %v1192
        %v1251 = vpack.c.b16 %v1195, %v1193
        %v1252 = vpack.c.b16 %v1198, %v1196
        %v1253 = vpack.c.b16 %v1199, %v1197
        %v1254 = vpack.c.b16 %v1202, %v1200
        %v1255 = vpack.c.b16 %v1203, %v1201
        %v1256 = vpack.c.b16 %v1206, %v1204
        %v1257 = vpack.c.b16 %v1207, %v1205
        %v1258 = vpack.c.b16 %v1210, %v1208
        %v1259 = vpack.c.b16 %v1211, %v1209
        %v1260 = vpack.c.b16 %v1214, %v1212
        %v1261 = vpack.c.b16 %v1215, %v1213
        %v1262 = vpack.c.b16 %v1218, %v1216
        %v1263 = vpack.c.b16 %v1219, %v1217
        %v1264 = vpack.c.b16 %v1222, %v1220
        %v1265 = vpack.c.b16 %v1223, %v1221
        %v1266 = vpack.c.b16 %v1226, %v1224
        %v1267 = vpack.c.b16 %v1227, %v1225
        %vm1308 = vcmask 523264
        %v1310 = vsel %vm1308, %v1044, 0
        %v1313 = vsel %vm1308, %v1047, 0
        %v1316 = vsel %vm1308, %v1050, 0
        %v1319 = vsel %vm1308, %v1053, 0
        %1321 = vmatprep.subr.bf16.mxu0 %v1229
        %1322 = vmatpush1.bf16.msra.mxu0 %v1228
        %1323 = vmatprep.subr.bf16.mxu0 %v1231
        %1324 = vmatpush1.bf16.msra.mxu0 %v1230
        %1325 = vmatprep.subr.bf16.mxu0 %v1233
        %1326 = vmatpush1.bf16.msra.mxu0 %v1232
        %1327 = vmatprep.subr.bf16.mxu0 %v1235
        %1328 = vmatpush1.bf16.msra.mxu0 %v1234
        %1329 = vmatprep.subr.bf16.mxu0 %v1237
        %1330 = vmatpush1.bf16.msra.mxu0 %v1236
        %1331 = vmatprep.subr.bf16.mxu0 %v1239
        %1332 = vmatpush1.bf16.msra.mxu0 %v1238
        %1333 = vmatprep.subr.bf16.mxu0 %v1241
        %1334 = vmatpush1.bf16.msra.mxu0 %v1240
        %1335 = vmatprep.subr.bf16.mxu0 %v1243
        %1336 = vmatpush1.bf16.msra.mxu0 %v1242
        %1337 = vmatprep.subr.bf16.mxu0 %v1245
        %1338 = vmatpush1.bf16.msra.mxu0 %v1244
        %1339 = vmatprep.subr.bf16.mxu0 %v1247
        %1340 = vmatpush1.bf16.msra.mxu0 %v1246
        %1341 = vmatprep.subr.bf16.mxu0 %v1249
        %1342 = vmatpush1.bf16.msra.mxu0 %v1248
        %1343 = vmatprep.subr.bf16.mxu0 %v1251
        %1344 = vmatpush1.bf16.msra.mxu0 %v1250
        %1345 = vmatprep.subr.bf16.mxu0 %v1253
        %1346 = vmatpush1.bf16.msra.mxu0 %v1252
        %1347 = vmatprep.subr.bf16.mxu0 %v1255
        %1348 = vmatpush1.bf16.msra.mxu0 %v1254
        %1349 = vmatprep.subr.bf16.mxu0 %v1257
        %1350 = vmatpush1.bf16.msra.mxu0 %v1256
        %1351 = vmatprep.subr.bf16.mxu0 %v1259
        %1352 = vmatpush1.bf16.msra.mxu0 %v1258
        %1353 = vmatprep.mubr.bf16.mxu0 %v1043
        %1354 = vmatmul.mubr.bf16.gmra.mrb[0].mxu0 %v1042
        %v1355 = vpop.f32.mrb[0].mxu0
        %v1356 = vadd.f32 0.0, %v1355
        %v1357 = vpop.f32.mrb[0].mxu0
        %v1358 = vadd.f32 0.0, %v1357
        %v1359 = vpop.f32.mrb[0].mxu0
        %v1360 = vadd.f32 0.0, %v1359
        %v1361 = vpop.f32.mrb[0].mxu0
        %v1362 = vadd.f32 0.0, %v1361
        %1363 = vmatprep.mubr.bf16.mxu0 %v1046
        %1364 = vmatmul.mubr.bf16.gmra.mrb[0].mxu0 %v1045
        %v1365 = vpop.f32.mrb[0].mxu0
        %v1366 = vadd.f32 0.0, %v1365
        %v1367 = vpop.f32.mrb[0].mxu0
        %v1368 = vadd.f32 0.0, %v1367
        %v1369 = vpop.f32.mrb[0].mxu0
        %v1370 = vadd.f32 0.0, %v1369
        %v1371 = vpop.f32.mrb[0].mxu0
        %v1372 = vadd.f32 0.0, %v1371
        %1373 = vmatprep.mubr.bf16.mxu0 %v1049
        %1374 = vmatmul.mubr.bf16.gmra.mrb[0].mxu0 %v1048
        %v1375 = vpop.f32.mrb[0].mxu0
        %v1376 = vadd.f32 0.0, %v1375
        %v1377 = vpop.f32.mrb[0].mxu0
        %v1378 = vadd.f32 0.0, %v1377
        %v1379 = vpop.f32.mrb[0].mxu0
        %v1380 = vadd.f32 0.0, %v1379
        %v1381 = vpop.f32.mrb[0].mxu0
        %v1382 = vadd.f32 0.0, %v1381
        %1383 = vmatprep.mubr.bf16.mxu0 %v1052
        %1384 = vmatmul.mubr.bf16.gmra.mrb[0].mxu0 %v1051
        %v1385 = vpop.f32.mrb[0].mxu0
        %v1386 = vadd.f32 0.0, %v1385
        %v1387 = vpop.f32.mrb[0].mxu0
        %v1388 = vadd.f32 0.0, %v1387
        %v1389 = vpop.f32.mrb[0].mxu0
        %v1390 = vadd.f32 0.0, %v1389
        %v1391 = vpop.f32.mrb[0].mxu0
        %v1392 = vadd.f32 0.0, %v1391
        %1393 = vdwg.mxu0
        %1394 = vmatprep.subr.bf16.mxu0 %v1261
        %1395 = vmatpush1.bf16.msra.mxu0 %v1260
        %1396 = vmatprep.subr.bf16.mxu0 %v1263
        %1397 = vmatpush1.bf16.msra.mxu0 %v1262
        %1398 = vmatprep.subr.bf16.mxu0 %v1265
        %1399 = vmatpush1.bf16.msra.mxu0 %v1264
        %1400 = vmatprep.subr.bf16.mxu0 %v1267
        %1401 = vmatpush1.bf16.msra.mxu0 %v1266
        %1402 = vmatprep.subr.bf16.mxu0 0
        %1403 = vmatpush1.bf16.msra.mxu0 0
        %1404 = vmatprep.subr.bf16.mxu0 0
        %1405 = vmatpush1.bf16.msra.mxu0 0
        %1406 = vmatprep.subr.bf16.mxu0 0
        %1407 = vmatpush1.bf16.msra.mxu0 0
        %1408 = vmatprep.subr.bf16.mxu0 0
        %1409 = vmatpush1.bf16.msra.mxu0 0
        %1410 = vmatprep.subr.bf16.mxu0 0
        %1411 = vmatpush1.bf16.msra.mxu0 0
        %1412 = vmatprep.subr.bf16.mxu0 0
        %1413 = vmatpush1.bf16.msra.mxu0 0
        %1414 = vmatprep.subr.bf16.mxu0 0
        %1415 = vmatpush1.bf16.msra.mxu0 0
        %1416 = vmatprep.subr.bf16.mxu0 0
        %1417 = vmatpush1.bf16.msra.mxu0 0
        %1418 = vmatprep.subr.bf16.mxu0 0
        %1419 = vmatpush1.bf16.msra.mxu0 0
        %1420 = vmatprep.subr.bf16.mxu0 0
        %1421 = vmatpush1.bf16.msra.mxu0 0
        %1422 = vmatprep.subr.bf16.mxu0 0
        %1423 = vmatpush1.bf16.msra.mxu0 0
        %1424 = vmatprep.subr.bf16.mxu0 0
        %1425 = vmatpush1.bf16.msra.mxu0 0
        %1426 = vmatprep.mubr.bf16.mxu0 0
        %1427 = vmatmul.mubr.bf16.gmra.mrb[0].mxu0 %v1310
        %v1428 = vpop.f32.mrb[0].mxu0
        %v1429 = vadd.f32 %v1356, %v1428
        %v1430 = vpop.f32.mrb[0].mxu0
        %v1431 = vadd.f32 %v1358, %v1430
        %v1432 = vpop.f32.mrb[0].mxu0
        %v1433 = vadd.f32 %v1360, %v1432
        %v1434 = vpop.f32.mrb[0].mxu0
        %v1435 = vadd.f32 %v1362, %v1434
        %1436 = vmatprep.mubr.bf16.mxu0 0
        %1437 = vmatmul.mubr.bf16.gmra.mrb[0].mxu0 %v1313
        %v1438 = vpop.f32.mrb[0].mxu0
        %v1439 = vadd.f32 %v1366, %v1438
        %v1440 = vpop.f32.mrb[0].mxu0
        %v1441 = vadd.f32 %v1368, %v1440
        %v1442 = vpop.f32.mrb[0].mxu0
        %v1443 = vadd.f32 %v1370, %v1442
        %v1444 = vpop.f32.mrb[0].mxu0
        %v1445 = vadd.f32 %v1372, %v1444
        %1446 = vmatprep.mubr.bf16.mxu0 0
        %1447 = vmatmul.mubr.bf16.gmra.mrb[0].mxu0 %v1316
        %v1448 = vpop.f32.mrb[0].mxu0
        %v1449 = vadd.f32 %v1376, %v1448
        %v1450 = vpop.f32.mrb[0].mxu0
        %v1451 = vadd.f32 %v1378, %v1450
        %v1452 = vpop.f32.mrb[0].mxu0
        %v1453 = vadd.f32 %v1380, %v1452
        %v1454 = vpop.f32.mrb[0].mxu0
        %v1455 = vadd.f32 %v1382, %v1454
        %1456 = vmatprep.mubr.bf16.mxu0 0
        %1457 = vmatmul.mubr.bf16.gmra.mrb[0].mxu0 %v1319
        %v1458 = vpop.f32.mrb[0].mxu0
        %v1459 = vadd.f32 %v1386, %v1458
        %v1460 = vpop.f32.mrb[0].mxu0
        %v1461 = vadd.f32 %v1388, %v1460
        %v1462 = vpop.f32.mrb[0].mxu0
        %v1463 = vadd.f32 %v1390, %v1462
        %v1464 = vpop.f32.mrb[0].mxu0
        %v1465 = vadd.f32 %v1392, %v1464
        %1466 = vdwg.mxu0
        %v1481 = vunpack.c.l.b16 %v1054
        %v1482 = vunpack.c.h.b16 %v1054
        %v1483 = vunpack.c.l.b16 %v1055
        %v1484 = vunpack.c.h.b16 %v1055
        %v1485 = vunpack.c.l.b16 %v1056
        %v1486 = vunpack.c.h.b16 %v1056
        %v1487 = vunpack.c.l.b16 %v1057
        %v1488 = vunpack.c.h.b16 %v1057
        %v1489 = vunpack.c.l.b16 %v1058
        %v1490 = vunpack.c.h.b16 %v1058
        %v1491 = vunpack.c.l.b16 %v1059
        %v1492 = vunpack.c.h.b16 %v1059
        %v1493 = vunpack.c.l.b16 %v1060
        %v1494 = vunpack.c.h.b16 %v1060
        %v1495 = vunpack.c.l.b16 %v1061
        %v1496 = vunpack.c.h.b16 %v1061
        %v1497 = vunpack.c.l.b16 %v1062
        %v1498 = vunpack.c.h.b16 %v1062
        %v1499 = vunpack.c.l.b16 %v1063
        %v1500 = vunpack.c.h.b16 %v1063
        %v1501 = vunpack.c.l.b16 %v1064
        %v1502 = vunpack.c.h.b16 %v1064
        %v1503 = vunpack.c.l.b16 %v1065
        %v1504 = vunpack.c.h.b16 %v1065
        %v1505 = vunpack.c.l.b16 %v1066
        %v1506 = vunpack.c.h.b16 %v1066
        %v1507 = vunpack.c.l.b16 %v1067
        %v1508 = vunpack.c.h.b16 %v1067
        %v1509 = vpack.c.b16 %v1483, %v1481
        %v1510 = vpack.c.b16 %v1484, %v1482
        %v1511 = vpack.c.b16 %v1487, %v1485
        %v1512 = vpack.c.b16 %v1488, %v1486
        %v1513 = vpack.c.b16 %v1491, %v1489
        %v1514 = vpack.c.b16 %v1492, %v1490
        %v1515 = vpack.c.b16 %v1495, %v1493
        %v1516 = vpack.c.b16 %v1496, %v1494
        %v1517 = vpack.c.b16 %v1499, %v1497
        %v1518 = vpack.c.b16 %v1500, %v1498
        %v1519 = vpack.c.b16 %v1503, %v1501
        %v1520 = vpack.c.b16 %v1504, %v1502
        %v1521 = vpack.c.b16 %v1507, %v1505
        %v1522 = vpack.c.b16 %v1508, %v1506
        %vm1537 = vcmask 916480
        %v1539 = vsel %vm1537, %v643, 0
        %v1542 = vsel %vm1537, %v644, 0
        %v1545 = vsel %vm1537, %v645, 0
        %v1548 = vsel %vm1537, %v646, 0
        %1550 = vmatprep.subr.bf16.mxu0 %v1510
        %1551 = vmatpush1.bf16.msra.mxu0 %v1509
        %1552 = vmatprep.subr.bf16.mxu0 %v1512
        %1553 = vmatpush1.bf16.msra.mxu0 %v1511
        %1554 = vmatprep.subr.bf16.mxu0 %v1514
        %1555 = vmatpush1.bf16.msra.mxu0 %v1513
        %1556 = vmatprep.subr.bf16.mxu0 %v1516
        %1557 = vmatpush1.bf16.msra.mxu0 %v1515
        %1558 = vmatprep.subr.bf16.mxu0 %v1518
        %1559 = vmatpush1.bf16.msra.mxu0 %v1517
        %1560 = vmatprep.subr.bf16.mxu0 %v1520
        %1561 = vmatpush1.bf16.msra.mxu0 %v1519
        %1562 = vmatprep.subr.bf16.mxu0 %v1522
        %1563 = vmatpush1.bf16.msra.mxu0 %v1521
        %1564 = vmatprep.subr.bf16.mxu0 0
        %1565 = vmatpush1.bf16.msra.mxu0 0
        %1566 = vmatprep.subr.bf16.mxu0 0
        %1567 = vmatpush1.bf16.msra.mxu0 0
        %1568 = vmatprep.subr.bf16.mxu0 0
        %1569 = vmatpush1.bf16.msra.mxu0 0
        %1570 = vmatprep.subr.bf16.mxu0 0
        %1571 = vmatpush1.bf16.msra.mxu0 0
        %1572 = vmatprep.subr.bf16.mxu0 0
        %1573 = vmatpush1.bf16.msra.mxu0 0
        %1574 = vmatprep.subr.bf16.mxu0 0
        %1575 = vmatpush1.bf16.msra.mxu0 0
        %1576 = vmatprep.subr.bf16.mxu0 0
        %1577 = vmatpush1.bf16.msra.mxu0 0
        %1578 = vmatprep.subr.bf16.mxu0 0
        %1579 = vmatpush1.bf16.msra.mxu0 0
        %1580 = vmatprep.subr.bf16.mxu0 0
        %1581 = vmatpush1.bf16.msra.mxu0 0
        %1582 = vmatprep.mubr.bf16.mxu0 0
        %1583 = vmatmul.mubr.bf16.gmra.mrb[0].mxu0 %v1539
        %v1584 = vpop.f32.mrb[0].mxu0
        %v1585 = vadd.f32 %v1429, %v1584
        %v1586 = vpop.f32.mrb[0].mxu0
        %v1587 = vadd.f32 %v1431, %v1586
        %v1588 = vpop.f32.mrb[0].mxu0
        %v1589 = vadd.f32 %v1433, %v1588
        %v1590 = vpop.f32.mrb[0].mxu0
        %v1591 = vadd.f32 %v1435, %v1590
        %1592 = vmatprep.mubr.bf16.mxu0 0
        %1593 = vmatmul.mubr.bf16.gmra.mrb[0].mxu0 %v1542
        %v1594 = vpop.f32.mrb[0].mxu0
        %v1595 = vadd.f32 %v1439, %v1594
        %v1596 = vpop.f32.mrb[0].mxu0
        %v1597 = vadd.f32 %v1441, %v1596
        %v1598 = vpop.f32.mrb[0].mxu0
        %v1599 = vadd.f32 %v1443, %v1598
        %v1600 = vpop.f32.mrb[0].mxu0
        %v1601 = vadd.f32 %v1445, %v1600
        %1602 = vmatprep.mubr.bf16.mxu0 0
        %1603 = vmatmul.mubr.bf16.gmra.mrb[0].mxu0 %v1545
        %v1604 = vpop.f32.mrb[0].mxu0
        %v1605 = vadd.f32 %v1449, %v1604
        %v1606 = vpop.f32.mrb[0].mxu0
        %v1607 = vadd.f32 %v1451, %v1606
        %v1608 = vpop.f32.mrb[0].mxu0
        %v1609 = vadd.f32 %v1453, %v1608
        %v1610 = vpop.f32.mrb[0].mxu0
        %v1611 = vadd.f32 %v1455, %v1610
        %1612 = vmatprep.mubr.bf16.mxu0 0
        %1613 = vmatmul.mubr.bf16.gmra.mrb[0].mxu0 %v1548
        %v1614 = vpop.f32.mrb[0].mxu0
        %v1615 = vadd.f32 %v1459, %v1614
        %v1616 = vpop.f32.mrb[0].mxu0
        %v1617 = vadd.f32 %v1461, %v1616
        %v1618 = vpop.f32.mrb[0].mxu0
        %v1619 = vadd.f32 %v1463, %v1618
        %v1620 = vpop.f32.mrb[0].mxu0
        %v1621 = vadd.f32 %v1465, %v1620
        %1622 = vdwg.mxu0
        %v1623 = vrot.slane %v1585, 7
        %v1624 = vrot.slane %v1589, 7
        %v1625 = vrot.slane %v1595, 7
        %v1626 = vrot.slane %v1599, 7
        %v1627 = vrot.slane %v1605, 7
        %v1628 = vrot.slane %v1609, 7
        %v1629 = vrot.slane %v1615, 7
        %v1630 = vrot.slane %v1619, 7
        %v1631 = vlaneseq
        %v1632 = vshrl.u32 %v1631, 7
        %vm1633 = vcmp.lt.s32.totalorder %v1632, 1
        %v1634 = vsel %vm1633, %v1629, %v1630
        %v1635 = vsel %vm1633, %v1628, %v1629
        %v1636 = vsel %vm1633, %v1627, %v1628
        %v1637 = vsel %vm1633, %v1626, %v1627
        %v1638 = vsel %vm1633, %v1625, %v1626
        %v1639 = vsel %vm1633, %v1624, %v1625
        %v1640 = vsel %vm1633, %v1623, %v1624
        %v1641 = vsel %vm1633, %v1630, %v1623
        %v1642 = vld [vmem:[%s7] sm:$0xff]
        %v1643 = vld [vmem:[%s7 + $0x8] sm:$0xff]
        %v1644 = vld [vmem:[%s7 + $0x10] sm:$0xff]
        %v1645 = vld [vmem:[%s7 + $0x18] sm:$0xff]
        %v1646 = vld [vmem:[%s7 + $0x20] sm:$0xff]
        %v1647 = vld [vmem:[%s7 + $0x28] sm:$0xff]
        %v1648 = vld [vmem:[%s7 + $0x30] sm:$0xff]
        %v1649 = vld [vmem:[%s7 + $0x38] sm:$0xff]
        %1651 = vset.pattern.permute.xlu0 0
        %1652 = vperm.xlu0 %1651, %v1642
        %v1653 = vpop.permute.xlu0 %1652
        %1656 = vset.pattern.permute.xlu0 0
        %1657 = vperm.xlu0 %1656, %v1643
        %v1658 = vpop.permute.xlu0 %1657
        %1661 = vset.pattern.permute.xlu0 0
        %1662 = vperm.xlu0 %1661, %v1644
        %v1663 = vpop.permute.xlu0 %1662
        %1666 = vset.pattern.permute.xlu0 0
        %1667 = vperm.xlu0 %1666, %v1645
        %v1668 = vpop.permute.xlu0 %1667
        %1671 = vset.pattern.permute.xlu0 0
        %1672 = vperm.xlu0 %1671, %v1646
        %v1673 = vpop.permute.xlu0 %1672
        %1676 = vset.pattern.permute.xlu0 0
        %1677 = vperm.xlu0 %1676, %v1647
        %v1678 = vpop.permute.xlu0 %1677
        %1681 = vset.pattern.permute.xlu0 0
        %1682 = vperm.xlu0 %1681, %v1648
        %v1683 = vpop.permute.xlu0 %1682
        %1686 = vset.pattern.permute.xlu0 0
        %1687 = vperm.xlu0 %1686, %v1649
        %v1688 = vpop.permute.xlu0 %1687
        %v1690 = vmul.f32 %v1634, %v1653
        %v1691 = vmul.f32 %v1641, %v1658
        %v1692 = vmul.f32 %v1640, %v1663
        %v1693 = vmul.f32 %v1639, %v1668
        %v1694 = vmul.f32 %v1638, %v1673
        %v1695 = vmul.f32 %v1637, %v1678
        %v1696 = vmul.f32 %v1636, %v1683
        %v1697 = vmul.f32 %v1635, %v1688
        %v1698 = vadd.f32 %v1690, 0.0
        %v1699 = vadd.f32 %v1691, 0.0
        %v1700 = vadd.f32 %v1692, 0.0
        %v1701 = vadd.f32 %v1693, 0.0
        %v1702 = vadd.f32 %v1694, 0.0
        %v1703 = vadd.f32 %v1695, 0.0
        %v1704 = vadd.f32 %v1696, 0.0
        %v1705 = vadd.f32 %v1697, 0.0
        %1714 = vrot.lane.b32.xlu0 %v1585, 112
        %v1715 = vpop.permute.xlu0 %1714
        %1716 = vrot.lane.b32.xlu0 %v1589, 112
        %v1717 = vpop.permute.xlu0 %1716
        %1718 = vrot.lane.b32.xlu0 %v1595, 112
        %v1719 = vpop.permute.xlu0 %1718
        %1720 = vrot.lane.b32.xlu0 %v1599, 112
        %v1721 = vpop.permute.xlu0 %1720
        %1722 = vrot.lane.b32.xlu0 %v1605, 112
        %v1723 = vpop.permute.xlu0 %1722
        %1724 = vrot.lane.b32.xlu0 %v1609, 112
        %v1725 = vpop.permute.xlu0 %1724
        %1726 = vrot.lane.b32.xlu0 %v1615, 112
        %v1727 = vpop.permute.xlu0 %1726
        %1728 = vrot.lane.b32.xlu0 %v1619, 112
        %v1729 = vpop.permute.xlu0 %1728
        %s1738 = scalar_lea.vmem %s7, 64
        %v1739 = vld [vmem:[%s1738] sm:$0xff]
        %v1740 = vld [vmem:[%s1738 + $0x8] sm:$0xff]
        %v1741 = vld [vmem:[%s1738 + $0x10] sm:$0xff]
        %v1742 = vld [vmem:[%s1738 + $0x18] sm:$0xff]
        %v1743 = vld [vmem:[%s1738 + $0x20] sm:$0xff]
        %v1744 = vld [vmem:[%s1738 + $0x28] sm:$0xff]
        %v1745 = vld [vmem:[%s1738 + $0x30] sm:$0xff]
        %v1746 = vld [vmem:[%s1738 + $0x38] sm:$0xff]
        %1748 = vset.pattern.permute.xlu0 0
        %1749 = vperm.xlu0 %1748, %v1739
        %v1750 = vpop.permute.xlu0 %1749
        %1753 = vset.pattern.permute.xlu0 0
        %1754 = vperm.xlu0 %1753, %v1740
        %v1755 = vpop.permute.xlu0 %1754
        %1758 = vset.pattern.permute.xlu0 0
        %1759 = vperm.xlu0 %1758, %v1741
        %v1760 = vpop.permute.xlu0 %1759
        %1763 = vset.pattern.permute.xlu0 0
        %1764 = vperm.xlu0 %1763, %v1742
        %v1765 = vpop.permute.xlu0 %1764
        %1768 = vset.pattern.permute.xlu0 0
        %1769 = vperm.xlu0 %1768, %v1743
        %v1770 = vpop.permute.xlu0 %1769
        %1773 = vset.pattern.permute.xlu0 0
        %1774 = vperm.xlu0 %1773, %v1744
        %v1775 = vpop.permute.xlu0 %1774
        %1778 = vset.pattern.permute.xlu0 0
        %1779 = vperm.xlu0 %1778, %v1745
        %v1780 = vpop.permute.xlu0 %1779
        %1783 = vset.pattern.permute.xlu0 0
        %1784 = vperm.xlu0 %1783, %v1746
        %v1785 = vpop.permute.xlu0 %1784
        %v1787 = vmul.f32 %v1729, %v1750
        %v1788 = vmul.f32 %v1715, %v1755
        %v1789 = vmul.f32 %v1717, %v1760
        %v1790 = vmul.f32 %v1719, %v1765
        %v1791 = vmul.f32 %v1721, %v1770
        %v1792 = vmul.f32 %v1723, %v1775
        %v1793 = vmul.f32 %v1725, %v1780
        %v1794 = vmul.f32 %v1727, %v1785
        %v1795 = vadd.f32 %v1698, %v1787
        %v1796 = vadd.f32 %v1699, %v1788
        %v1797 = vadd.f32 %v1700, %v1789
        %v1798 = vadd.f32 %v1701, %v1790
        %v1799 = vadd.f32 %v1702, %v1791
        %v1800 = vadd.f32 %v1703, %v1792
        %v1801 = vadd.f32 %v1704, %v1793
        %v1802 = vadd.f32 %v1705, %v1794
        %1803 = vrot.lane.b32.xlu0 %v1585, 96
        %v1804 = vpop.permute.xlu0 %1803
        %1805 = vrot.lane.b32.xlu0 %v1589, 96
        %v1806 = vpop.permute.xlu0 %1805
        %1807 = vrot.lane.b32.xlu0 %v1595, 96
        %v1808 = vpop.permute.xlu0 %1807
        %1809 = vrot.lane.b32.xlu0 %v1599, 96
        %v1810 = vpop.permute.xlu0 %1809
        %1811 = vrot.lane.b32.xlu0 %v1605, 96
        %v1812 = vpop.permute.xlu0 %1811
        %1813 = vrot.lane.b32.xlu0 %v1609, 96
        %v1814 = vpop.permute.xlu0 %1813
        %1815 = vrot.lane.b32.xlu0 %v1615, 96
        %v1816 = vpop.permute.xlu0 %1815
        %1817 = vrot.lane.b32.xlu0 %v1619, 96
        %v1818 = vpop.permute.xlu0 %1817
        %v1827 = vrot.slane %v1804, 1
        %v1828 = vrot.slane %v1806, 1
        %v1829 = vrot.slane %v1808, 1
        %v1830 = vrot.slane %v1810, 1
        %v1831 = vrot.slane %v1812, 1
        %v1832 = vrot.slane %v1814, 1
        %v1833 = vrot.slane %v1816, 1
        %v1834 = vrot.slane %v1818, 1
        %vm1835 = vcmp.lt.s32.totalorder %v1632, 7
        %v1836 = vsel %vm1835, %v1833, %v1834
        %v1837 = vsel %vm1835, %v1832, %v1833
        %v1838 = vsel %vm1835, %v1831, %v1832
        %v1839 = vsel %vm1835, %v1830, %v1831
        %v1840 = vsel %vm1835, %v1829, %v1830
        %v1841 = vsel %vm1835, %v1828, %v1829
        %v1842 = vsel %vm1835, %v1827, %v1828
        %v1843 = vsel %vm1835, %v1834, %v1827
        %s1844 = scalar_lea.vmem %s7, 128
        %v1845 = vld [vmem:[%s1844] sm:$0xff]
        %v1846 = vld [vmem:[%s1844 + $0x8] sm:$0xff]
        %v1847 = vld [vmem:[%s1844 + $0x10] sm:$0xff]
        %v1848 = vld [vmem:[%s1844 + $0x18] sm:$0xff]
        %v1849 = vld [vmem:[%s1844 + $0x20] sm:$0xff]
        %v1850 = vld [vmem:[%s1844 + $0x28] sm:$0xff]
        %v1851 = vld [vmem:[%s1844 + $0x30] sm:$0xff]
        %v1852 = vld [vmem:[%s1844 + $0x38] sm:$0xff]
        %1854 = vset.pattern.permute.xlu0 0
        %1855 = vperm.xlu0 %1854, %v1845
        %v1856 = vpop.permute.xlu0 %1855
        %1859 = vset.pattern.permute.xlu0 0
        %1860 = vperm.xlu0 %1859, %v1846
        %v1861 = vpop.permute.xlu0 %1860
        %1864 = vset.pattern.permute.xlu0 0
        %1865 = vperm.xlu0 %1864, %v1847
        %v1866 = vpop.permute.xlu0 %1865
        %1869 = vset.pattern.permute.xlu0 0
        %1870 = vperm.xlu0 %1869, %v1848
        %v1871 = vpop.permute.xlu0 %1870
        %1874 = vset.pattern.permute.xlu0 0
        %1875 = vperm.xlu0 %1874, %v1849
        %v1876 = vpop.permute.xlu0 %1875
        %1879 = vset.pattern.permute.xlu0 0
        %1880 = vperm.xlu0 %1879, %v1850
        %v1881 = vpop.permute.xlu0 %1880
        %1884 = vset.pattern.permute.xlu0 0
        %1885 = vperm.xlu0 %1884, %v1851
        %v1886 = vpop.permute.xlu0 %1885
        %1889 = vset.pattern.permute.xlu0 0
        %1890 = vperm.xlu0 %1889, %v1852
        %v1891 = vpop.permute.xlu0 %1890
        %v1893 = vmul.f32 %v1843, %v1856
        %v1894 = vmul.f32 %v1842, %v1861
        %v1895 = vmul.f32 %v1841, %v1866
        %v1896 = vmul.f32 %v1840, %v1871
        %v1897 = vmul.f32 %v1839, %v1876
        %v1898 = vmul.f32 %v1838, %v1881
        %v1899 = vmul.f32 %v1837, %v1886
        %v1900 = vmul.f32 %v1836, %v1891
        %v1901 = vadd.f32 %v1795, %v1893
        %v1902 = vadd.f32 %v1796, %v1894
        %v1903 = vadd.f32 %v1797, %v1895
        %v1904 = vadd.f32 %v1798, %v1896
        %v1905 = vadd.f32 %v1799, %v1897
        %v1906 = vadd.f32 %v1800, %v1898
        %v1907 = vadd.f32 %v1801, %v1899
        %v1908 = vadd.f32 %v1802, %v1900
        %1909 = vrot.lane.b32.xlu0 %v1585, 80
        %v1910 = vpop.permute.xlu0 %1909
        %1911 = vrot.lane.b32.xlu0 %v1589, 80
        %v1912 = vpop.permute.xlu0 %1911
        %1913 = vrot.lane.b32.xlu0 %v1595, 80
        %v1914 = vpop.permute.xlu0 %1913
        %1915 = vrot.lane.b32.xlu0 %v1599, 80
        %v1916 = vpop.permute.xlu0 %1915
        %1917 = vrot.lane.b32.xlu0 %v1605, 80
        %v1918 = vpop.permute.xlu0 %1917
        %1919 = vrot.lane.b32.xlu0 %v1609, 80
        %v1920 = vpop.permute.xlu0 %1919
        %1921 = vrot.lane.b32.xlu0 %v1615, 80
        %v1922 = vpop.permute.xlu0 %1921
        %1923 = vrot.lane.b32.xlu0 %v1619, 80
        %v1924 = vpop.permute.xlu0 %1923
        %v1933 = vrot.slane %v1910, 7
        %v1934 = vrot.slane %v1912, 7
        %v1935 = vrot.slane %v1914, 7
        %v1936 = vrot.slane %v1916, 7
        %v1937 = vrot.slane %v1918, 7
        %v1938 = vrot.slane %v1920, 7
        %v1939 = vrot.slane %v1922, 7
        %v1940 = vrot.slane %v1924, 7
        %v1941 = vsel %vm1633, %v1939, %v1940
        %v1942 = vsel %vm1633, %v1938, %v1939
        %v1943 = vsel %vm1633, %v1937, %v1938
        %v1944 = vsel %vm1633, %v1936, %v1937
        %v1945 = vsel %vm1633, %v1935, %v1936
        %v1946 = vsel %vm1633, %v1934, %v1935
        %v1947 = vsel %vm1633, %v1933, %v1934
        %v1948 = vsel %vm1633, %v1940, %v1933
        %s1949 = scalar_lea.vmem %s7, 192
        %v1950 = vld [vmem:[%s1949] sm:$0xff]
        %v1951 = vld [vmem:[%s1949 + $0x8] sm:$0xff]
        %v1952 = vld [vmem:[%s1949 + $0x10] sm:$0xff]
        %v1953 = vld [vmem:[%s1949 + $0x18] sm:$0xff]
        %v1954 = vld [vmem:[%s1949 + $0x20] sm:$0xff]
        %v1955 = vld [vmem:[%s1949 + $0x28] sm:$0xff]
        %v1956 = vld [vmem:[%s1949 + $0x30] sm:$0xff]
        %v1957 = vld [vmem:[%s1949 + $0x38] sm:$0xff]
        %1959 = vset.pattern.permute.xlu0 0
        %1960 = vperm.xlu0 %1959, %v1950
        %v1961 = vpop.permute.xlu0 %1960
        %1964 = vset.pattern.permute.xlu0 0
        %1965 = vperm.xlu0 %1964, %v1951
        %v1966 = vpop.permute.xlu0 %1965
        %1969 = vset.pattern.permute.xlu0 0
        %1970 = vperm.xlu0 %1969, %v1952
        %v1971 = vpop.permute.xlu0 %1970
        %1974 = vset.pattern.permute.xlu0 0
        %1975 = vperm.xlu0 %1974, %v1953
        %v1976 = vpop.permute.xlu0 %1975
        %1979 = vset.pattern.permute.xlu0 0
        %1980 = vperm.xlu0 %1979, %v1954
        %v1981 = vpop.permute.xlu0 %1980
        %1984 = vset.pattern.permute.xlu0 0
        %1985 = vperm.xlu0 %1984, %v1955
        %v1986 = vpop.permute.xlu0 %1985
        %1989 = vset.pattern.permute.xlu0 0
        %1990 = vperm.xlu0 %1989, %v1956
        %v1991 = vpop.permute.xlu0 %1990
        %1994 = vset.pattern.permute.xlu0 0
        %1995 = vperm.xlu0 %1994, %v1957
        %v1996 = vpop.permute.xlu0 %1995
        %v1998 = vmul.f32 %v1948, %v1961
        %v1999 = vmul.f32 %v1947, %v1966
        %v2000 = vmul.f32 %v1946, %v1971
        %v2001 = vmul.f32 %v1945, %v1976
        %v2002 = vmul.f32 %v1944, %v1981
        %v2003 = vmul.f32 %v1943, %v1986
        %v2004 = vmul.f32 %v1942, %v1991
        %v2005 = vmul.f32 %v1941, %v1996
        %v2006 = vadd.f32 %v1901, %v1998
        %v2007 = vadd.f32 %v1902, %v1999
        %v2008 = vadd.f32 %v1903, %v2000
        %v2009 = vadd.f32 %v1904, %v2001
        %v2010 = vadd.f32 %v1905, %v2002
        %v2011 = vadd.f32 %v1906, %v2003
        %v2012 = vadd.f32 %v1907, %v2004
        %v2013 = vadd.f32 %v1908, %v2005
        %s2014 = scalar_lea.vmem %s7, 256
        %v2015 = vld [vmem:[%s2014] sm:$0xff]
        %v2016 = vld [vmem:[%s2014 + $0x8] sm:$0xff]
        %v2017 = vld [vmem:[%s2014 + $0x10] sm:$0xff]
        %v2018 = vld [vmem:[%s2014 + $0x18] sm:$0xff]
        %v2019 = vld [vmem:[%s2014 + $0x20] sm:$0xff]
        %v2020 = vld [vmem:[%s2014 + $0x28] sm:$0xff]
        %v2021 = vld [vmem:[%s2014 + $0x30] sm:$0xff]
        %v2022 = vld [vmem:[%s2014 + $0x38] sm:$0xff]
        %2024 = vset.pattern.permute.xlu0 0
        %2025 = vperm.xlu0 %2024, %v2015
        %v2026 = vpop.permute.xlu0 %2025
        %2029 = vset.pattern.permute.xlu0 0
        %2030 = vperm.xlu0 %2029, %v2016
        %v2031 = vpop.permute.xlu0 %2030
        %2034 = vset.pattern.permute.xlu0 0
        %2035 = vperm.xlu0 %2034, %v2017
        %v2036 = vpop.permute.xlu0 %2035
        %2039 = vset.pattern.permute.xlu0 0
        %2040 = vperm.xlu0 %2039, %v2018
        %v2041 = vpop.permute.xlu0 %2040
        %2044 = vset.pattern.permute.xlu0 0
        %2045 = vperm.xlu0 %2044, %v2019
        %v2046 = vpop.permute.xlu0 %2045
        %2049 = vset.pattern.permute.xlu0 0
        %2050 = vperm.xlu0 %2049, %v2020
        %v2051 = vpop.permute.xlu0 %2050
        %2054 = vset.pattern.permute.xlu0 0
        %2055 = vperm.xlu0 %2054, %v2021
        %v2056 = vpop.permute.xlu0 %2055
        %2059 = vset.pattern.permute.xlu0 0
        %2060 = vperm.xlu0 %2059, %v2022
        %v2061 = vpop.permute.xlu0 %2060
        %v2063 = vmul.f32 %v1585, %v2026
        %v2064 = vmul.f32 %v1589, %v2031
        %v2065 = vmul.f32 %v1595, %v2036
        %v2066 = vmul.f32 %v1599, %v2041
        %v2067 = vmul.f32 %v1605, %v2046
        %v2068 = vmul.f32 %v1609, %v2051
        %v2069 = vmul.f32 %v1615, %v2056
        %v2070 = vmul.f32 %v1619, %v2061
        %2079 = vrot.lane.b32.xlu0 %v2063, 64
        %v2080 = vpop.permute.xlu0 %2079
        %2081 = vrot.lane.b32.xlu0 %v2064, 64
        %v2082 = vpop.permute.xlu0 %2081
        %2083 = vrot.lane.b32.xlu0 %v2065, 64
        %v2084 = vpop.permute.xlu0 %2083
        %2085 = vrot.lane.b32.xlu0 %v2066, 64
        %v2086 = vpop.permute.xlu0 %2085
        %2087 = vrot.lane.b32.xlu0 %v2067, 64
        %v2088 = vpop.permute.xlu0 %2087
        %2089 = vrot.lane.b32.xlu0 %v2068, 64
        %v2090 = vpop.permute.xlu0 %2089
        %2091 = vrot.lane.b32.xlu0 %v2069, 64
        %v2092 = vpop.permute.xlu0 %2091
        %2093 = vrot.lane.b32.xlu0 %v2070, 64
        %v2094 = vpop.permute.xlu0 %2093
        %v2103 = vadd.f32 %v2006, %v2080
        %v2104 = vadd.f32 %v2007, %v2082
        %v2105 = vadd.f32 %v2008, %v2084
        %v2106 = vadd.f32 %v2009, %v2086
        %v2107 = vadd.f32 %v2010, %v2088
        %v2108 = vadd.f32 %v2011, %v2090
        %v2109 = vadd.f32 %v2012, %v2092
        %v2110 = vadd.f32 %v2013, %v2094
        %2111 = vrot.lane.b32.xlu0 %v1585, 48
        %v2112 = vpop.permute.xlu0 %2111
        %2113 = vrot.lane.b32.xlu0 %v1589, 48
        %v2114 = vpop.permute.xlu0 %2113
        %2115 = vrot.lane.b32.xlu0 %v1595, 48
        %v2116 = vpop.permute.xlu0 %2115
        %2117 = vrot.lane.b32.xlu0 %v1599, 48
        %v2118 = vpop.permute.xlu0 %2117
        %2119 = vrot.lane.b32.xlu0 %v1605, 48
        %v2120 = vpop.permute.xlu0 %2119
        %2121 = vrot.lane.b32.xlu0 %v1609, 48
        %v2122 = vpop.permute.xlu0 %2121
        %2123 = vrot.lane.b32.xlu0 %v1615, 48
        %v2124 = vpop.permute.xlu0 %2123
        %2125 = vrot.lane.b32.xlu0 %v1619, 48
        %v2126 = vpop.permute.xlu0 %2125
        %v2135 = vrot.slane %v2112, 1
        %v2136 = vrot.slane %v2114, 1
        %v2137 = vrot.slane %v2116, 1
        %v2138 = vrot.slane %v2118, 1
        %v2139 = vrot.slane %v2120, 1
        %v2140 = vrot.slane %v2122, 1
        %v2141 = vrot.slane %v2124, 1
        %v2142 = vrot.slane %v2126, 1
        %v2143 = vsel %vm1835, %v2141, %v2142
        %v2144 = vsel %vm1835, %v2140, %v2141
        %v2145 = vsel %vm1835, %v2139, %v2140
        %v2146 = vsel %vm1835, %v2138, %v2139
        %v2147 = vsel %vm1835, %v2137, %v2138
        %v2148 = vsel %vm1835, %v2136, %v2137
        %v2149 = vsel %vm1835, %v2135, %v2136
        %v2150 = vsel %vm1835, %v2142, %v2135
        %s2151 = scalar_lea.vmem %s7, 320
        %v2152 = vld [vmem:[%s2151] sm:$0xff]
        %v2153 = vld [vmem:[%s2151 + $0x8] sm:$0xff]
        %v2154 = vld [vmem:[%s2151 + $0x10] sm:$0xff]
        %v2155 = vld [vmem:[%s2151 + $0x18] sm:$0xff]
        %v2156 = vld [vmem:[%s2151 + $0x20] sm:$0xff]
        %v2157 = vld [vmem:[%s2151 + $0x28] sm:$0xff]
        %v2158 = vld [vmem:[%s2151 + $0x30] sm:$0xff]
        %v2159 = vld [vmem:[%s2151 + $0x38] sm:$0xff]
        %2161 = vset.pattern.permute.xlu0 0
        %2162 = vperm.xlu0 %2161, %v2152
        %v2163 = vpop.permute.xlu0 %2162
        %2166 = vset.pattern.permute.xlu0 0
        %2167 = vperm.xlu0 %2166, %v2153
        %v2168 = vpop.permute.xlu0 %2167
        %2171 = vset.pattern.permute.xlu0 0
        %2172 = vperm.xlu0 %2171, %v2154
        %v2173 = vpop.permute.xlu0 %2172
        %2176 = vset.pattern.permute.xlu0 0
        %2177 = vperm.xlu0 %2176, %v2155
        %v2178 = vpop.permute.xlu0 %2177
        %2181 = vset.pattern.permute.xlu0 0
        %2182 = vperm.xlu0 %2181, %v2156
        %v2183 = vpop.permute.xlu0 %2182
        %2186 = vset.pattern.permute.xlu0 0
        %2187 = vperm.xlu0 %2186, %v2157
        %v2188 = vpop.permute.xlu0 %2187
        %2191 = vset.pattern.permute.xlu0 0
        %2192 = vperm.xlu0 %2191, %v2158
        %v2193 = vpop.permute.xlu0 %2192
        %2196 = vset.pattern.permute.xlu0 0
        %2197 = vperm.xlu0 %2196, %v2159
        %v2198 = vpop.permute.xlu0 %2197
        %v2200 = vmul.f32 %v2149, %v2163
        %v2201 = vmul.f32 %v2148, %v2168
        %v2202 = vmul.f32 %v2147, %v2173
        %v2203 = vmul.f32 %v2146, %v2178
        %v2204 = vmul.f32 %v2145, %v2183
        %v2205 = vmul.f32 %v2144, %v2188
        %v2206 = vmul.f32 %v2143, %v2193
        %v2207 = vmul.f32 %v2150, %v2198
        %v2208 = vadd.f32 %v2103, %v2200
        %v2209 = vadd.f32 %v2104, %v2201
        %v2210 = vadd.f32 %v2105, %v2202
        %v2211 = vadd.f32 %v2106, %v2203
        %v2212 = vadd.f32 %v2107, %v2204
        %v2213 = vadd.f32 %v2108, %v2205
        %v2214 = vadd.f32 %v2109, %v2206
        %v2215 = vadd.f32 %v2110, %v2207
        %2216 = vrot.lane.b32.xlu0 %v1585, 32
        %v2217 = vpop.permute.xlu0 %2216
        %2218 = vrot.lane.b32.xlu0 %v1589, 32
        %v2219 = vpop.permute.xlu0 %2218
        %2220 = vrot.lane.b32.xlu0 %v1595, 32
        %v2221 = vpop.permute.xlu0 %2220
        %2222 = vrot.lane.b32.xlu0 %v1599, 32
        %v2223 = vpop.permute.xlu0 %2222
        %2224 = vrot.lane.b32.xlu0 %v1605, 32
        %v2225 = vpop.permute.xlu0 %2224
        %2226 = vrot.lane.b32.xlu0 %v1609, 32
        %v2227 = vpop.permute.xlu0 %2226
        %2228 = vrot.lane.b32.xlu0 %v1615, 32
        %v2229 = vpop.permute.xlu0 %2228
        %2230 = vrot.lane.b32.xlu0 %v1619, 32
        %v2231 = vpop.permute.xlu0 %2230
        %v2240 = vrot.slane %v2217, 7
        %v2241 = vrot.slane %v2219, 7
        %v2242 = vrot.slane %v2221, 7
        %v2243 = vrot.slane %v2223, 7
        %v2244 = vrot.slane %v2225, 7
        %v2245 = vrot.slane %v2227, 7
        %v2246 = vrot.slane %v2229, 7
        %v2247 = vrot.slane %v2231, 7
        %v2248 = vsel %vm1633, %v2246, %v2247
        %v2249 = vsel %vm1633, %v2245, %v2246
        %v2250 = vsel %vm1633, %v2244, %v2245
        %v2251 = vsel %vm1633, %v2243, %v2244
        %v2252 = vsel %vm1633, %v2242, %v2243
        %v2253 = vsel %vm1633, %v2241, %v2242
        %v2254 = vsel %vm1633, %v2240, %v2241
        %v2255 = vsel %vm1633, %v2247, %v2240
        %s2256 = scalar_lea.vmem %s7, 384
        %v2257 = vld [vmem:[%s2256] sm:$0xff]
        %v2258 = vld [vmem:[%s2256 + $0x8] sm:$0xff]
        %v2259 = vld [vmem:[%s2256 + $0x10] sm:$0xff]
        %v2260 = vld [vmem:[%s2256 + $0x18] sm:$0xff]
        %v2261 = vld [vmem:[%s2256 + $0x20] sm:$0xff]
        %v2262 = vld [vmem:[%s2256 + $0x28] sm:$0xff]
        %v2263 = vld [vmem:[%s2256 + $0x30] sm:$0xff]
        %v2264 = vld [vmem:[%s2256 + $0x38] sm:$0xff]
        %2266 = vset.pattern.permute.xlu0 0
        %2267 = vperm.xlu0 %2266, %v2257
        %v2268 = vpop.permute.xlu0 %2267
        %2271 = vset.pattern.permute.xlu0 0
        %2272 = vperm.xlu0 %2271, %v2258
        %v2273 = vpop.permute.xlu0 %2272
        %2276 = vset.pattern.permute.xlu0 0
        %2277 = vperm.xlu0 %2276, %v2259
        %v2278 = vpop.permute.xlu0 %2277
        %2281 = vset.pattern.permute.xlu0 0
        %2282 = vperm.xlu0 %2281, %v2260
        %v2283 = vpop.permute.xlu0 %2282
        %2286 = vset.pattern.permute.xlu0 0
        %2287 = vperm.xlu0 %2286, %v2261
        %v2288 = vpop.permute.xlu0 %2287
        %2291 = vset.pattern.permute.xlu0 0
        %2292 = vperm.xlu0 %2291, %v2262
        %v2293 = vpop.permute.xlu0 %2292
        %2296 = vset.pattern.permute.xlu0 0
        %2297 = vperm.xlu0 %2296, %v2263
        %v2298 = vpop.permute.xlu0 %2297
        %2301 = vset.pattern.permute.xlu0 0
        %2302 = vperm.xlu0 %2301, %v2264
        %v2303 = vpop.permute.xlu0 %2302
        %v2305 = vmul.f32 %v2254, %v2268
        %v2306 = vmul.f32 %v2253, %v2273
        %v2307 = vmul.f32 %v2252, %v2278
        %v2308 = vmul.f32 %v2251, %v2283
        %v2309 = vmul.f32 %v2250, %v2288
        %v2310 = vmul.f32 %v2249, %v2293
        %v2311 = vmul.f32 %v2248, %v2298
        %v2312 = vmul.f32 %v2255, %v2303
        %v2313 = vadd.f32 %v2208, %v2305
        %v2314 = vadd.f32 %v2209, %v2306
        %v2315 = vadd.f32 %v2210, %v2307
        %v2316 = vadd.f32 %v2211, %v2308
        %v2317 = vadd.f32 %v2212, %v2309
        %v2318 = vadd.f32 %v2213, %v2310
        %v2319 = vadd.f32 %v2214, %v2311
        %v2320 = vadd.f32 %v2215, %v2312
        %2321 = vrot.lane.b32.xlu0 %v1585, 16
        %v2322 = vpop.permute.xlu0 %2321
        %2323 = vrot.lane.b32.xlu0 %v1589, 16
        %v2324 = vpop.permute.xlu0 %2323
        %2325 = vrot.lane.b32.xlu0 %v1595, 16
        %v2326 = vpop.permute.xlu0 %2325
        %2327 = vrot.lane.b32.xlu0 %v1599, 16
        %v2328 = vpop.permute.xlu0 %2327
        %2329 = vrot.lane.b32.xlu0 %v1605, 16
        %v2330 = vpop.permute.xlu0 %2329
        %2331 = vrot.lane.b32.xlu0 %v1609, 16
        %v2332 = vpop.permute.xlu0 %2331
        %2333 = vrot.lane.b32.xlu0 %v1615, 16
        %v2334 = vpop.permute.xlu0 %2333
        %2335 = vrot.lane.b32.xlu0 %v1619, 16
        %v2336 = vpop.permute.xlu0 %2335
        %s2345 = scalar_lea.vmem %s7, 448
        %v2346 = vld [vmem:[%s2345] sm:$0xff]
        %v2347 = vld [vmem:[%s2345 + $0x8] sm:$0xff]
        %v2348 = vld [vmem:[%s2345 + $0x10] sm:$0xff]
        %v2349 = vld [vmem:[%s2345 + $0x18] sm:$0xff]
        %v2350 = vld [vmem:[%s2345 + $0x20] sm:$0xff]
        %v2351 = vld [vmem:[%s2345 + $0x28] sm:$0xff]
        %v2352 = vld [vmem:[%s2345 + $0x30] sm:$0xff]
        %v2353 = vld [vmem:[%s2345 + $0x38] sm:$0xff]
        %2355 = vset.pattern.permute.xlu0 0
        %2356 = vperm.xlu0 %2355, %v2346
        %v2357 = vpop.permute.xlu0 %2356
        %2360 = vset.pattern.permute.xlu0 0
        %2361 = vperm.xlu0 %2360, %v2347
        %v2362 = vpop.permute.xlu0 %2361
        %2365 = vset.pattern.permute.xlu0 0
        %2366 = vperm.xlu0 %2365, %v2348
        %v2367 = vpop.permute.xlu0 %2366
        %2370 = vset.pattern.permute.xlu0 0
        %2371 = vperm.xlu0 %2370, %v2349
        %v2372 = vpop.permute.xlu0 %2371
        %2375 = vset.pattern.permute.xlu0 0
        %2376 = vperm.xlu0 %2375, %v2350
        %v2377 = vpop.permute.xlu0 %2376
        %2380 = vset.pattern.permute.xlu0 0
        %2381 = vperm.xlu0 %2380, %v2351
        %v2382 = vpop.permute.xlu0 %2381
        %2385 = vset.pattern.permute.xlu0 0
        %2386 = vperm.xlu0 %2385, %v2352
        %v2387 = vpop.permute.xlu0 %2386
        %2390 = vset.pattern.permute.xlu0 0
        %2391 = vperm.xlu0 %2390, %v2353
        %v2392 = vpop.permute.xlu0 %2391
        %v2394 = vmul.f32 %v2324, %v2357
        %v2395 = vmul.f32 %v2326, %v2362
        %v2396 = vmul.f32 %v2328, %v2367
        %v2397 = vmul.f32 %v2330, %v2372
        %v2398 = vmul.f32 %v2332, %v2377
        %v2399 = vmul.f32 %v2334, %v2382
        %v2400 = vmul.f32 %v2336, %v2387
        %v2401 = vmul.f32 %v2322, %v2392
        %v2402 = vadd.f32 %v2313, %v2394
        %v2403 = vadd.f32 %v2314, %v2395
        %v2404 = vadd.f32 %v2315, %v2396
        %v2405 = vadd.f32 %v2316, %v2397
        %v2406 = vadd.f32 %v2317, %v2398
        %v2407 = vadd.f32 %v2318, %v2399
        %v2408 = vadd.f32 %v2319, %v2400
        %v2409 = vadd.f32 %v2320, %v2401
        %v2410 = vrot.slane %v1587, 1
        %v2411 = vrot.slane %v1591, 1
        %v2412 = vrot.slane %v1597, 1
        %v2413 = vrot.slane %v1601, 1
        %v2414 = vrot.slane %v1607, 1
        %v2415 = vrot.slane %v1611, 1
        %v2416 = vrot.slane %v1617, 1
        %v2417 = vrot.slane %v1621, 1
        %v2418 = vsel %vm1835, %v2416, %v2417
        %v2419 = vsel %vm1835, %v2415, %v2416
        %v2420 = vsel %vm1835, %v2414, %v2415
        %v2421 = vsel %vm1835, %v2413, %v2414
        %v2422 = vsel %vm1835, %v2412, %v2413
        %v2423 = vsel %vm1835, %v2411, %v2412
        %v2424 = vsel %vm1835, %v2410, %v2411
        %v2425 = vsel %vm1835, %v2417, %v2410
        %s2426 = scalar_lea.vmem %s7, 512
        %v2427 = vld [vmem:[%s2426] sm:$0xff]
        %v2428 = vld [vmem:[%s2426 + $0x8] sm:$0xff]
        %v2429 = vld [vmem:[%s2426 + $0x10] sm:$0xff]
        %v2430 = vld [vmem:[%s2426 + $0x18] sm:$0xff]
        %v2431 = vld [vmem:[%s2426 + $0x20] sm:$0xff]
        %v2432 = vld [vmem:[%s2426 + $0x28] sm:$0xff]
        %v2433 = vld [vmem:[%s2426 + $0x30] sm:$0xff]
        %v2434 = vld [vmem:[%s2426 + $0x38] sm:$0xff]
        %2436 = vset.pattern.permute.xlu0 0
        %2437 = vperm.xlu0 %2436, %v2427
        %v2438 = vpop.permute.xlu0 %2437
        %2441 = vset.pattern.permute.xlu0 0
        %2442 = vperm.xlu0 %2441, %v2428
        %v2443 = vpop.permute.xlu0 %2442
        %2446 = vset.pattern.permute.xlu0 0
        %2447 = vperm.xlu0 %2446, %v2429
        %v2448 = vpop.permute.xlu0 %2447
        %2451 = vset.pattern.permute.xlu0 0
        %2452 = vperm.xlu0 %2451, %v2430
        %v2453 = vpop.permute.xlu0 %2452
        %2456 = vset.pattern.permute.xlu0 0
        %2457 = vperm.xlu0 %2456, %v2431
        %v2458 = vpop.permute.xlu0 %2457
        %2461 = vset.pattern.permute.xlu0 0
        %2462 = vperm.xlu0 %2461, %v2432
        %v2463 = vpop.permute.xlu0 %2462
        %2466 = vset.pattern.permute.xlu0 0
        %2467 = vperm.xlu0 %2466, %v2433
        %v2468 = vpop.permute.xlu0 %2467
        %2471 = vset.pattern.permute.xlu0 0
        %2472 = vperm.xlu0 %2471, %v2434
        %v2473 = vpop.permute.xlu0 %2472
        %v2475 = vmul.f32 %v2423, %v2438
        %v2476 = vmul.f32 %v2422, %v2443
        %v2477 = vmul.f32 %v2421, %v2448
        %v2478 = vmul.f32 %v2420, %v2453
        %v2479 = vmul.f32 %v2419, %v2458
        %v2480 = vmul.f32 %v2418, %v2463
        %v2481 = vmul.f32 %v2425, %v2468
        %v2482 = vmul.f32 %v2424, %v2473
        %v2483 = vadd.f32 %v2402, %v2475
        %v2484 = vadd.f32 %v2403, %v2476
        %v2485 = vadd.f32 %v2404, %v2477
        %v2486 = vadd.f32 %v2405, %v2478
        %v2487 = vadd.f32 %v2406, %v2479
        %v2488 = vadd.f32 %v2407, %v2480
        %v2489 = vadd.f32 %v2408, %v2481
        %v2490 = vadd.f32 %v2409, %v2482
        %v2491 = vld [vmem:[%s10] sm:$0x1]
        %v2493 = vlaneseq
        %v2494 = vshrl.u32 %v2493, 7
        %v2495 = vsub.s32 0, %v2494
        %v2496 = vrot.slane %v2491, %v2495
        %v2498 = vmul.f32 %v2483, %v2496
        %v2499 = vmul.f32 %v2484, %v2496
        %v2500 = vmul.f32 %v2485, %v2496
        %v2501 = vmul.f32 %v2486, %v2496
        %v2502 = vmul.f32 %v2487, %v2496
        %v2503 = vmul.f32 %v2488, %v2496
        %v2504 = vmul.f32 %v2489, %v2496
        %v2505 = vmul.f32 %v2490, %v2496
        %v2506 = vld [vmem:[%s11] sm:$0x1]
        %v2508 = vlaneseq
        %v2509 = vshrl.u32 %v2508, 7
        %v2510 = vsub.s32 0, %v2509
        %v2511 = vrot.slane %v2506, %v2510
        %v2513 = vadd.f32 %v2498, %v2511
        %v2514 = vadd.f32 %v2499, %v2511
        %v2515 = vadd.f32 %v2500, %v2511
        %v2516 = vadd.f32 %v2501, %v2511
        %v2517 = vadd.f32 %v2502, %v2511
        %v2518 = vadd.f32 %v2503, %v2511
        %v2519 = vadd.f32 %v2504, %v2511
        %v2520 = vadd.f32 %v2505, %v2511
        %v2521 = vmax.f32 %v2513, 0.0
        %v2522 = vmax.f32 %v2514, 0.0
        %v2523 = vmax.f32 %v2515, 0.0
        %v2524 = vmax.f32 %v2516, 0.0
        %v2525 = vmax.f32 %v2517, 0.0
        %v2526 = vmax.f32 %v2518, 0.0
        %v2527 = vmax.f32 %v2519, 0.0
        %v2528 = vmax.f32 %v2520, 0.0
        %v2529 = vpack.c.bf16 %v2522, %v2521
        %v2530 = vpack.c.bf16 %v2524, %v2523
        %v2531 = vpack.c.bf16 %v2526, %v2525
        %v2532 = vpack.c.bf16 %v2528, %v2527
        %v2533 = vld [vmem:[%s12] sm:$0xff]
        %v2534 = vld [vmem:[%s12 + $0x8] sm:$0xff]
        %v2537 = vunpack.c.l.b16 %v2533
        %v2538 = vunpack.c.h.b16 %v2533
        %v2539 = vunpack.c.l.b16 %v2534
        %v2540 = vunpack.c.h.b16 %v2534
        %v2541 = vpack.c.b16 %v2539, %v2537
        %v2542 = vpack.c.b16 %v2540, %v2538
        %v2546 = vsel %vm799, %v2529, 0
        %v2549 = vsel %vm799, %v2530, 0
        %v2552 = vsel %vm799, %v2531, 0
        %v2555 = vsel %vm799, %v2532, 0
        %2557 = vmatprep.subr.bf16.mxu0 %v2542
        %2558 = vmatpush1.bf16.msra.mxu0 %v2541
        %2559 = vmatprep.subr.bf16.mxu0 0
        %2560 = vmatpush1.bf16.msra.mxu0 0
        %2561 = vmatprep.subr.bf16.mxu0 0
        %2562 = vmatpush1.bf16.msra.mxu0 0
        %2563 = vmatprep.subr.bf16.mxu0 0
        %2564 = vmatpush1.bf16.msra.mxu0 0
        %2565 = vmatprep.subr.bf16.mxu0 0
        %2566 = vmatpush1.bf16.msra.mxu0 0
        %2567 = vmatprep.subr.bf16.mxu0 0
        %2568 = vmatpush1.bf16.msra.mxu0 0
        %2569 = vmatprep.subr.bf16.mxu0 0
        %2570 = vmatpush1.bf16.msra.mxu0 0
        %2571 = vmatprep.subr.bf16.mxu0 0
        %2572 = vmatpush1.bf16.msra.mxu0 0
        %2573 = vmatprep.subr.bf16.mxu0 0
        %2574 = vmatpush1.bf16.msra.mxu0 0
        %2575 = vmatprep.subr.bf16.mxu0 0
        %2576 = vmatpush1.bf16.msra.mxu0 0
        %2577 = vmatprep.subr.bf16.mxu0 0
        %2578 = vmatpush1.bf16.msra.mxu0 0
        %2579 = vmatprep.subr.bf16.mxu0 0
        %2580 = vmatpush1.bf16.msra.mxu0 0
        %2581 = vmatprep.subr.bf16.mxu0 0
        %2582 = vmatpush1.bf16.msra.mxu0 0
        %2583 = vmatprep.subr.bf16.mxu0 0
        %2584 = vmatpush1.bf16.msra.mxu0 0
        %2585 = vmatprep.subr.bf16.mxu0 0
        %2586 = vmatpush1.bf16.msra.mxu0 0
        %2587 = vmatprep.subr.bf16.mxu0 0
        %2588 = vmatpush1.bf16.msra.mxu0 0
        %2589 = vmatprep.mubr.bf16.mxu0 0
        %2590 = vmatmul.mubr.bf16.gmra.mrb[0].mxu0 %v2546
        %v2591 = vpop.f32.mrb[0].mxu0
        %v2592 = vadd.f32 0.0, %v2591
        %v2593 = vpop.f32.mrb[0].mxu0
        %v2594 = vadd.f32 0.0, %v2593
        %v2595 = vpop.f32.mrb[0].mxu0
        %v2596 = vadd.f32 0.0, %v2595
        %v2597 = vpop.f32.mrb[0].mxu0
        %v2598 = vadd.f32 0.0, %v2597
        %2599 = vmatprep.mubr.bf16.mxu0 0
        %2600 = vmatmul.mubr.bf16.gmra.mrb[0].mxu0 %v2549
        %v2601 = vpop.f32.mrb[0].mxu0
        %v2602 = vadd.f32 0.0, %v2601
        %v2603 = vpop.f32.mrb[0].mxu0
        %v2604 = vadd.f32 0.0, %v2603
        %v2605 = vpop.f32.mrb[0].mxu0
        %v2606 = vadd.f32 0.0, %v2605
        %v2607 = vpop.f32.mrb[0].mxu0
        %v2608 = vadd.f32 0.0, %v2607
        %2609 = vmatprep.mubr.bf16.mxu0 0
        %2610 = vmatmul.mubr.bf16.gmra.mrb[0].mxu0 %v2552
        %v2611 = vpop.f32.mrb[0].mxu0
        %v2612 = vadd.f32 0.0, %v2611
        %v2613 = vpop.f32.mrb[0].mxu0
        %v2614 = vadd.f32 0.0, %v2613
        %v2615 = vpop.f32.mrb[0].mxu0
        %v2616 = vadd.f32 0.0, %v2615
        %v2617 = vpop.f32.mrb[0].mxu0
        %v2618 = vadd.f32 0.0, %v2617
        %2619 = vmatprep.mubr.bf16.mxu0 0
        %2620 = vmatmul.mubr.bf16.gmra.mrb[0].mxu0 %v2555
        %v2621 = vpop.f32.mrb[0].mxu0
        %v2622 = vadd.f32 0.0, %v2621
        %v2623 = vpop.f32.mrb[0].mxu0
        %v2624 = vadd.f32 0.0, %v2623
        %v2625 = vpop.f32.mrb[0].mxu0
        %v2626 = vadd.f32 0.0, %v2625
        %v2627 = vpop.f32.mrb[0].mxu0
        %v2628 = vadd.f32 0.0, %v2627
        %2629 = vdwg.mxu0
        %v2630 = vrot.slane %v2592, 7
        %v2631 = vrot.slane %v2596, 7
        %v2632 = vrot.slane %v2602, 7
        %v2633 = vrot.slane %v2606, 7
        %v2634 = vrot.slane %v2612, 7
        %v2635 = vrot.slane %v2616, 7
        %v2636 = vrot.slane %v2622, 7
        %v2637 = vrot.slane %v2626, 7
        %v2638 = vsel %vm1633, %v2636, %v2637
        %v2639 = vsel %vm1633, %v2635, %v2636
        %v2640 = vsel %vm1633, %v2634, %v2635
        %v2641 = vsel %vm1633, %v2633, %v2634
        %v2642 = vsel %vm1633, %v2632, %v2633
        %v2643 = vsel %vm1633, %v2631, %v2632
        %v2644 = vsel %vm1633, %v2630, %v2631
        %v2645 = vsel %vm1633, %v2637, %v2630
        %v2646 = vmul.f32 %v2638, %v1653
        %v2647 = vmul.f32 %v2645, %v1658
        %v2648 = vmul.f32 %v2644, %v1663
        %v2649 = vmul.f32 %v2643, %v1668
        %v2650 = vmul.f32 %v2642, %v1673
        %v2651 = vmul.f32 %v2641, %v1678
        %v2652 = vmul.f32 %v2640, %v1683
        %v2653 = vmul.f32 %v2639, %v1688
        %v2654 = vadd.f32 %v2646, 0.0
        %v2655 = vadd.f32 %v2647, 0.0
        %v2656 = vadd.f32 %v2648, 0.0
        %v2657 = vadd.f32 %v2649, 0.0
        %v2658 = vadd.f32 %v2650, 0.0
        %v2659 = vadd.f32 %v2651, 0.0
        %v2660 = vadd.f32 %v2652, 0.0
        %v2661 = vadd.f32 %v2653, 0.0
        %2670 = vrot.lane.b32.xlu0 %v2592, 112
        %v2671 = vpop.permute.xlu0 %2670
        %2672 = vrot.lane.b32.xlu0 %v2596, 112
        %v2673 = vpop.permute.xlu0 %2672
        %2674 = vrot.lane.b32.xlu0 %v2602, 112
        %v2675 = vpop.permute.xlu0 %2674
        %2676 = vrot.lane.b32.xlu0 %v2606, 112
        %v2677 = vpop.permute.xlu0 %2676
        %2678 = vrot.lane.b32.xlu0 %v2612, 112
        %v2679 = vpop.permute.xlu0 %2678
        %2680 = vrot.lane.b32.xlu0 %v2616, 112
        %v2681 = vpop.permute.xlu0 %2680
        %2682 = vrot.lane.b32.xlu0 %v2622, 112
        %v2683 = vpop.permute.xlu0 %2682
        %2684 = vrot.lane.b32.xlu0 %v2626, 112
        %v2685 = vpop.permute.xlu0 %2684
        %v2694 = vmul.f32 %v2685, %v1750
        %v2695 = vmul.f32 %v2671, %v1755
        %v2696 = vmul.f32 %v2673, %v1760
        %v2697 = vmul.f32 %v2675, %v1765
        %v2698 = vmul.f32 %v2677, %v1770
        %v2699 = vmul.f32 %v2679, %v1775
        %v2700 = vmul.f32 %v2681, %v1780
        %v2701 = vmul.f32 %v2683, %v1785
        %v2702 = vadd.f32 %v2654, %v2694
        %v2703 = vadd.f32 %v2655, %v2695
        %v2704 = vadd.f32 %v2656, %v2696
        %v2705 = vadd.f32 %v2657, %v2697
        %v2706 = vadd.f32 %v2658, %v2698
        %v2707 = vadd.f32 %v2659, %v2699
        %v2708 = vadd.f32 %v2660, %v2700
        %v2709 = vadd.f32 %v2661, %v2701
        %2710 = vrot.lane.b32.xlu0 %v2592, 96
        %v2711 = vpop.permute.xlu0 %2710
        %2712 = vrot.lane.b32.xlu0 %v2596, 96
        %v2713 = vpop.permute.xlu0 %2712
        %2714 = vrot.lane.b32.xlu0 %v2602, 96
        %v2715 = vpop.permute.xlu0 %2714
        %2716 = vrot.lane.b32.xlu0 %v2606, 96
        %v2717 = vpop.permute.xlu0 %2716
        %2718 = vrot.lane.b32.xlu0 %v2612, 96
        %v2719 = vpop.permute.xlu0 %2718
        %2720 = vrot.lane.b32.xlu0 %v2616, 96
        %v2721 = vpop.permute.xlu0 %2720
        %2722 = vrot.lane.b32.xlu0 %v2622, 96
        %v2723 = vpop.permute.xlu0 %2722
        %2724 = vrot.lane.b32.xlu0 %v2626, 96
        %v2725 = vpop.permute.xlu0 %2724
        %v2734 = vrot.slane %v2711, 1
        %v2735 = vrot.slane %v2713, 1
        %v2736 = vrot.slane %v2715, 1
        %v2737 = vrot.slane %v2717, 1
        %v2738 = vrot.slane %v2719, 1
        %v2739 = vrot.slane %v2721, 1
        %v2740 = vrot.slane %v2723, 1
        %v2741 = vrot.slane %v2725, 1
        %v2742 = vsel %vm1835, %v2740, %v2741
        %v2743 = vsel %vm1835, %v2739, %v2740
        %v2744 = vsel %vm1835, %v2738, %v2739
        %v2745 = vsel %vm1835, %v2737, %v2738
        %v2746 = vsel %vm1835, %v2736, %v2737
        %v2747 = vsel %vm1835, %v2735, %v2736
        %v2748 = vsel %vm1835, %v2734, %v2735
        %v2749 = vsel %vm1835, %v2741, %v2734
        %v2750 = vmul.f32 %v2749, %v1856
        %v2751 = vmul.f32 %v2748, %v1861
        %v2752 = vmul.f32 %v2747, %v1866
        %v2753 = vmul.f32 %v2746, %v1871
        %v2754 = vmul.f32 %v2745, %v1876
        %v2755 = vmul.f32 %v2744, %v1881
        %v2756 = vmul.f32 %v2743, %v1886
        %v2757 = vmul.f32 %v2742, %v1891
        %v2758 = vadd.f32 %v2702, %v2750
        %v2759 = vadd.f32 %v2703, %v2751
        %v2760 = vadd.f32 %v2704, %v2752
        %v2761 = vadd.f32 %v2705, %v2753
        %v2762 = vadd.f32 %v2706, %v2754
        %v2763 = vadd.f32 %v2707, %v2755
        %v2764 = vadd.f32 %v2708, %v2756
        %v2765 = vadd.f32 %v2709, %v2757
        %2766 = vrot.lane.b32.xlu0 %v2592, 80
        %v2767 = vpop.permute.xlu0 %2766
        %2768 = vrot.lane.b32.xlu0 %v2596, 80
        %v2769 = vpop.permute.xlu0 %2768
        %2770 = vrot.lane.b32.xlu0 %v2602, 80
        %v2771 = vpop.permute.xlu0 %2770
        %2772 = vrot.lane.b32.xlu0 %v2606, 80
        %v2773 = vpop.permute.xlu0 %2772
        %2774 = vrot.lane.b32.xlu0 %v2612, 80
        %v2775 = vpop.permute.xlu0 %2774
        %2776 = vrot.lane.b32.xlu0 %v2616, 80
        %v2777 = vpop.permute.xlu0 %2776
        %2778 = vrot.lane.b32.xlu0 %v2622, 80
        %v2779 = vpop.permute.xlu0 %2778
        %2780 = vrot.lane.b32.xlu0 %v2626, 80
        %v2781 = vpop.permute.xlu0 %2780
        %v2790 = vrot.slane %v2767, 7
        %v2791 = vrot.slane %v2769, 7
        %v2792 = vrot.slane %v2771, 7
        %v2793 = vrot.slane %v2773, 7
        %v2794 = vrot.slane %v2775, 7
        %v2795 = vrot.slane %v2777, 7
        %v2796 = vrot.slane %v2779, 7
        %v2797 = vrot.slane %v2781, 7
        %v2798 = vsel %vm1633, %v2796, %v2797
        %v2799 = vsel %vm1633, %v2795, %v2796
        %v2800 = vsel %vm1633, %v2794, %v2795
        %v2801 = vsel %vm1633, %v2793, %v2794
        %v2802 = vsel %vm1633, %v2792, %v2793
        %v2803 = vsel %vm1633, %v2791, %v2792
        %v2804 = vsel %vm1633, %v2790, %v2791
        %v2805 = vsel %vm1633, %v2797, %v2790
        %v2806 = vmul.f32 %v2805, %v1961
        %v2807 = vmul.f32 %v2804, %v1966
        %v2808 = vmul.f32 %v2803, %v1971
        %v2809 = vmul.f32 %v2802, %v1976
        %v2810 = vmul.f32 %v2801, %v1981
        %v2811 = vmul.f32 %v2800, %v1986
        %v2812 = vmul.f32 %v2799, %v1991
        %v2813 = vmul.f32 %v2798, %v1996
        %v2814 = vadd.f32 %v2758, %v2806
        %v2815 = vadd.f32 %v2759, %v2807
        %v2816 = vadd.f32 %v2760, %v2808
        %v2817 = vadd.f32 %v2761, %v2809
        %v2818 = vadd.f32 %v2762, %v2810
        %v2819 = vadd.f32 %v2763, %v2811
        %v2820 = vadd.f32 %v2764, %v2812
        %v2821 = vadd.f32 %v2765, %v2813
        %v2822 = vmul.f32 %v2592, %v2026
        %v2823 = vmul.f32 %v2596, %v2031
        %v2824 = vmul.f32 %v2602, %v2036
        %v2825 = vmul.f32 %v2606, %v2041
        %v2826 = vmul.f32 %v2612, %v2046
        %v2827 = vmul.f32 %v2616, %v2051
        %v2828 = vmul.f32 %v2622, %v2056
        %v2829 = vmul.f32 %v2626, %v2061
        %2838 = vrot.lane.b32.xlu0 %v2822, 64
        %v2839 = vpop.permute.xlu0 %2838
        %2840 = vrot.lane.b32.xlu0 %v2823, 64
        %v2841 = vpop.permute.xlu0 %2840
        %2842 = vrot.lane.b32.xlu0 %v2824, 64
        %v2843 = vpop.permute.xlu0 %2842
        %2844 = vrot.lane.b32.xlu0 %v2825, 64
        %v2845 = vpop.permute.xlu0 %2844
        %2846 = vrot.lane.b32.xlu0 %v2826, 64
        %v2847 = vpop.permute.xlu0 %2846
        %2848 = vrot.lane.b32.xlu0 %v2827, 64
        %v2849 = vpop.permute.xlu0 %2848
        %2850 = vrot.lane.b32.xlu0 %v2828, 64
        %v2851 = vpop.permute.xlu0 %2850
        %2852 = vrot.lane.b32.xlu0 %v2829, 64
        %v2853 = vpop.permute.xlu0 %2852
        %v2862 = vadd.f32 %v2814, %v2839
        %v2863 = vadd.f32 %v2815, %v2841
        %v2864 = vadd.f32 %v2816, %v2843
        %v2865 = vadd.f32 %v2817, %v2845
        %v2866 = vadd.f32 %v2818, %v2847
        %v2867 = vadd.f32 %v2819, %v2849
        %v2868 = vadd.f32 %v2820, %v2851
        %v2869 = vadd.f32 %v2821, %v2853
        %2870 = vrot.lane.b32.xlu0 %v2592, 48
        %v2871 = vpop.permute.xlu0 %2870
        %2872 = vrot.lane.b32.xlu0 %v2596, 48
        %v2873 = vpop.permute.xlu0 %2872
        %2874 = vrot.lane.b32.xlu0 %v2602, 48
        %v2875 = vpop.permute.xlu0 %2874
        %2876 = vrot.lane.b32.xlu0 %v2606, 48
        %v2877 = vpop.permute.xlu0 %2876
        %2878 = vrot.lane.b32.xlu0 %v2612, 48
        %v2879 = vpop.permute.xlu0 %2878
        %2880 = vrot.lane.b32.xlu0 %v2616, 48
        %v2881 = vpop.permute.xlu0 %2880
        %2882 = vrot.lane.b32.xlu0 %v2622, 48
        %v2883 = vpop.permute.xlu0 %2882
        %2884 = vrot.lane.b32.xlu0 %v2626, 48
        %v2885 = vpop.permute.xlu0 %2884
        %v2894 = vrot.slane %v2871, 1
        %v2895 = vrot.slane %v2873, 1
        %v2896 = vrot.slane %v2875, 1
        %v2897 = vrot.slane %v2877, 1
        %v2898 = vrot.slane %v2879, 1
        %v2899 = vrot.slane %v2881, 1
        %v2900 = vrot.slane %v2883, 1
        %v2901 = vrot.slane %v2885, 1
        %v2902 = vsel %vm1835, %v2900, %v2901
        %v2903 = vsel %vm1835, %v2899, %v2900
        %v2904 = vsel %vm1835, %v2898, %v2899
        %v2905 = vsel %vm1835, %v2897, %v2898
        %v2906 = vsel %vm1835, %v2896, %v2897
        %v2907 = vsel %vm1835, %v2895, %v2896
        %v2908 = vsel %vm1835, %v2894, %v2895
        %v2909 = vsel %vm1835, %v2901, %v2894
        %v2910 = vmul.f32 %v2908, %v2163
        %v2911 = vmul.f32 %v2907, %v2168
        %v2912 = vmul.f32 %v2906, %v2173
        %v2913 = vmul.f32 %v2905, %v2178
        %v2914 = vmul.f32 %v2904, %v2183
        %v2915 = vmul.f32 %v2903, %v2188
        %v2916 = vmul.f32 %v2902, %v2193
        %v2917 = vmul.f32 %v2909, %v2198
        %v2918 = vadd.f32 %v2862, %v2910
        %v2919 = vadd.f32 %v2863, %v2911
        %v2920 = vadd.f32 %v2864, %v2912
        %v2921 = vadd.f32 %v2865, %v2913
        %v2922 = vadd.f32 %v2866, %v2914
        %v2923 = vadd.f32 %v2867, %v2915
        %v2924 = vadd.f32 %v2868, %v2916
        %v2925 = vadd.f32 %v2869, %v2917
        %2926 = vrot.lane.b32.xlu0 %v2592, 32
        %v2927 = vpop.permute.xlu0 %2926
        %2928 = vrot.lane.b32.xlu0 %v2596, 32
        %v2929 = vpop.permute.xlu0 %2928
        %2930 = vrot.lane.b32.xlu0 %v2602, 32
        %v2931 = vpop.permute.xlu0 %2930
        %2932 = vrot.lane.b32.xlu0 %v2606, 32
        %v2933 = vpop.permute.xlu0 %2932
        %2934 = vrot.lane.b32.xlu0 %v2612, 32
        %v2935 = vpop.permute.xlu0 %2934
        %2936 = vrot.lane.b32.xlu0 %v2616, 32
        %v2937 = vpop.permute.xlu0 %2936
        %2938 = vrot.lane.b32.xlu0 %v2622, 32
        %v2939 = vpop.permute.xlu0 %2938
        %2940 = vrot.lane.b32.xlu0 %v2626, 32
        %v2941 = vpop.permute.xlu0 %2940
        %v2950 = vrot.slane %v2927, 7
        %v2951 = vrot.slane %v2929, 7
        %v2952 = vrot.slane %v2931, 7
        %v2953 = vrot.slane %v2933, 7
        %v2954 = vrot.slane %v2935, 7
        %v2955 = vrot.slane %v2937, 7
        %v2956 = vrot.slane %v2939, 7
        %v2957 = vrot.slane %v2941, 7
        %v2958 = vsel %vm1633, %v2956, %v2957
        %v2959 = vsel %vm1633, %v2955, %v2956
        %v2960 = vsel %vm1633, %v2954, %v2955
        %v2961 = vsel %vm1633, %v2953, %v2954
        %v2962 = vsel %vm1633, %v2952, %v2953
        %v2963 = vsel %vm1633, %v2951, %v2952
        %v2964 = vsel %vm1633, %v2950, %v2951
        %v2965 = vsel %vm1633, %v2957, %v2950
        %v2966 = vmul.f32 %v2964, %v2268
        %v2967 = vmul.f32 %v2963, %v2273
        %v2968 = vmul.f32 %v2962, %v2278
        %v2969 = vmul.f32 %v2961, %v2283
        %v2970 = vmul.f32 %v2960, %v2288
        %v2971 = vmul.f32 %v2959, %v2293
        %v2972 = vmul.f32 %v2958, %v2298
        %v2973 = vmul.f32 %v2965, %v2303
        %v2974 = vadd.f32 %v2918, %v2966
        %v2975 = vadd.f32 %v2919, %v2967
        %v2976 = vadd.f32 %v2920, %v2968
        %v2977 = vadd.f32 %v2921, %v2969
        %v2978 = vadd.f32 %v2922, %v2970
        %v2979 = vadd.f32 %v2923, %v2971
        %v2980 = vadd.f32 %v2924, %v2972
        %v2981 = vadd.f32 %v2925, %v2973
        %2982 = vrot.lane.b32.xlu0 %v2592, 16
        %v2983 = vpop.permute.xlu0 %2982
        %2984 = vrot.lane.b32.xlu0 %v2596, 16
        %v2985 = vpop.permute.xlu0 %2984
        %2986 = vrot.lane.b32.xlu0 %v2602, 16
        %v2987 = vpop.permute.xlu0 %2986
        %2988 = vrot.lane.b32.xlu0 %v2606, 16
        %v2989 = vpop.permute.xlu0 %2988
        %2990 = vrot.lane.b32.xlu0 %v2612, 16
        %v2991 = vpop.permute.xlu0 %2990
        %2992 = vrot.lane.b32.xlu0 %v2616, 16
        %v2993 = vpop.permute.xlu0 %2992
        %2994 = vrot.lane.b32.xlu0 %v2622, 16
        %v2995 = vpop.permute.xlu0 %2994
        %2996 = vrot.lane.b32.xlu0 %v2626, 16
        %v2997 = vpop.permute.xlu0 %2996
        %v3006 = vmul.f32 %v2985, %v2357
        %v3007 = vmul.f32 %v2987, %v2362
        %v3008 = vmul.f32 %v2989, %v2367
        %v3009 = vmul.f32 %v2991, %v2372
        %v3010 = vmul.f32 %v2993, %v2377
        %v3011 = vmul.f32 %v2995, %v2382
        %v3012 = vmul.f32 %v2997, %v2387
        %v3013 = vmul.f32 %v2983, %v2392
        %v3014 = vadd.f32 %v2974, %v3006
        %v3015 = vadd.f32 %v2975, %v3007
        %v3016 = vadd.f32 %v2976, %v3008
        %v3017 = vadd.f32 %v2977, %v3009
        %v3018 = vadd.f32 %v2978, %v3010
        %v3019 = vadd.f32 %v2979, %v3011
        %v3020 = vadd.f32 %v2980, %v3012
        %v3021 = vadd.f32 %v2981, %v3013
        %v3022 = vrot.slane %v2594, 1
        %v3023 = vrot.slane %v2598, 1
        %v3024 = vrot.slane %v2604, 1
        %v3025 = vrot.slane %v2608, 1
        %v3026 = vrot.slane %v2614, 1
        %v3027 = vrot.slane %v2618, 1
        %v3028 = vrot.slane %v2624, 1
        %v3029 = vrot.slane %v2628, 1
        %v3030 = vsel %vm1835, %v3028, %v3029
        %v3031 = vsel %vm1835, %v3027, %v3028
        %v3032 = vsel %vm1835, %v3026, %v3027
        %v3033 = vsel %vm1835, %v3025, %v3026
        %v3034 = vsel %vm1835, %v3024, %v3025
        %v3035 = vsel %vm1835, %v3023, %v3024
        %v3036 = vsel %vm1835, %v3022, %v3023
        %v3037 = vsel %vm1835, %v3029, %v3022
        %v3038 = vmul.f32 %v3035, %v2438
        %v3039 = vmul.f32 %v3034, %v2443
        %v3040 = vmul.f32 %v3033, %v2448
        %v3041 = vmul.f32 %v3032, %v2453
        %v3042 = vmul.f32 %v3031, %v2458
        %v3043 = vmul.f32 %v3030, %v2463
        %v3044 = vmul.f32 %v3037, %v2468
        %v3045 = vmul.f32 %v3036, %v2473
        %v3046 = vadd.f32 %v3014, %v3038
        %v3047 = vadd.f32 %v3015, %v3039
        %v3048 = vadd.f32 %v3016, %v3040
        %v3049 = vadd.f32 %v3017, %v3041
        %v3050 = vadd.f32 %v3018, %v3042
        %v3051 = vadd.f32 %v3019, %v3043
        %v3052 = vadd.f32 %v3020, %v3044
        %v3053 = vadd.f32 %v3021, %v3045
        %v3054 = vld [vmem:[%s13] sm:$0x1]
        %v3056 = vlaneseq
        %v3057 = vshrl.u32 %v3056, 7
        %v3058 = vsub.s32 0, %v3057
        %v3059 = vrot.slane %v3054, %v3058
        %v3061 = vmul.f32 %v3046, %v3059
        %v3062 = vmul.f32 %v3047, %v3059
        %v3063 = vmul.f32 %v3048, %v3059
        %v3064 = vmul.f32 %v3049, %v3059
        %v3065 = vmul.f32 %v3050, %v3059
        %v3066 = vmul.f32 %v3051, %v3059
        %v3067 = vmul.f32 %v3052, %v3059
        %v3068 = vmul.f32 %v3053, %v3059
        %v3069 = vld [vmem:[%s14] sm:$0x1]
        %v3071 = vlaneseq
        %v3072 = vshrl.u32 %v3071, 7
        %v3073 = vsub.s32 0, %v3072
        %v3074 = vrot.slane %v3069, %v3073
        %v3076 = vadd.f32 %v3061, %v3074
        %v3077 = vadd.f32 %v3062, %v3074
        %v3078 = vadd.f32 %v3063, %v3074
        %v3079 = vadd.f32 %v3064, %v3074
        %v3080 = vadd.f32 %v3065, %v3074
        %v3081 = vadd.f32 %v3066, %v3074
        %v3082 = vadd.f32 %v3067, %v3074
        %v3083 = vadd.f32 %v3068, %v3074
        %v3084 = vmax.f32 %v3076, 0.0
        %v3085 = vmax.f32 %v3077, 0.0
        %v3086 = vmax.f32 %v3078, 0.0
        %v3087 = vmax.f32 %v3079, 0.0
        %v3088 = vmax.f32 %v3080, 0.0
        %v3089 = vmax.f32 %v3081, 0.0
        %v3090 = vmax.f32 %v3082, 0.0
        %v3091 = vmax.f32 %v3083, 0.0
        %3092 = vxpose.xlu0.b32.start [1/16] %v3084, 128
        %3093 = vxpose.xlu0.b32.cont [2/16] %v3085, 128
        %3094 = vxpose.xlu0.b32.cont [3/16] %v3086, 128
        %3095 = vxpose.xlu0.b32.cont [4/16] %v3087, 128
        %3096 = vxpose.xlu0.b32.cont [5/16] %v3088, 128
        %3097 = vxpose.xlu0.b32.cont [6/16] %v3089, 128
        %3098 = vxpose.xlu0.b32.cont [7/16] %v3090, 128
        %3099 = vxpose.xlu0.b32.cont [8/16] %v3091, 128
        %3100 = vxpose.xlu0.b32.cont [9/16] 0.0, 128
        %3101 = vxpose.xlu0.b32.cont [10/16] 0.0, 128
        %3102 = vxpose.xlu0.b32.cont [11/16] 0.0, 128
        %3103 = vxpose.xlu0.b32.cont [12/16] 0.0, 128
        %3104 = vxpose.xlu0.b32.cont [13/16] 0.0, 128
        %3105 = vxpose.xlu0.b32.cont [14/16] 0.0, 128
        %3106 = vxpose.xlu0.b32.cont [15/16] 0.0, 128
        %3107 = vxpose.xlu0.b32.end [16/16] 0.0, 128
        %v3108 = vpop.trf.xlu0
        %v3109 = vpop.trf.xlu0
        %v3110 = vpop.trf.xlu0
        %v3111 = vpop.trf.xlu0
        %v3112 = vpop.trf.xlu0
        %v3113 = vpop.trf.xlu0
        %v3114 = vpop.trf.xlu0
        %v3115 = vpop.trf.xlu0
        %v3116 = vpop.trf.xlu0
        %v3117 = vpop.trf.xlu0
        %v3118 = vpop.trf.xlu0
        %v3119 = vpop.trf.xlu0
        %v3120 = vpop.trf.xlu0
        %v3121 = vpop.trf.xlu0
        %v3122 = vpop.trf.xlu0
        %v3123 = vpop.trf.xlu0
        %v3124 = vpack.c.bf16 %v3109, %v3108
        %v3126 = vunpack.c.l.b16 %v3124
        %v3127 = vunpack.c.h.b16 %v3124
        %v3128 = vpack.c.b16 %v3126, %v3126
        %v3129 = vpack.c.b16 %v3127, %v3127
        %vm3132 = vcmask 519168
        %3133 = vst.msk [vmem:[%s502] sm:$0xf] %vm3132, %v3128
        %3134 = vst.msk [vmem:[%s502 + $0x4] sm:$0xf] %vm3132, %v3129
        %s3135 = sand.u32 %s362, 1
        %s3136 = scalar_lea.sflag [#allocation3], %s3135
        %s3137 = sand.u32 %s362, 1
        %s3138 = smul.addr %s3137, 8
        %s3139 = scalar_lea.vmem [#allocation2], %s3138
        // Predicated region
        $region81: #{tpu_custom_call.1} parent=79 // pred_check
          %p3140 = pneg %p372
        $region82: #{tpu_custom_call.1} parent=79 // pred_check_branch
          %3142 = sbr.rel (%p3140) target = $region84
        $region83: #{tpu_custom_call.1} parent=79 // pred_region
          %s3144 = ssub.s32 128, 128
          %3145 = vsyncadd %s3136, %s3144
          %s3146 = smul.addr %s29, 2
          %s3147 = smul.addr %s3146, 64
          %s3148 = scalar_lea.hbm %s15, %s3147
          %s3149 = sshll.u32 %s3139, 4
          %s3150 = int_to_ptr.vmem [resolvable:$true] %s3149
          %3155 = dma.vmem_to_hbm [thread:$0]  %s3150, 128, %s3148, %s3136, 64, 64, 4
        $region84: #{tpu_custom_call.1} parent=79 // pred_fallthru
          _
      $region80: #{tpu_custom_call.1} parent=5 // pred_fallthru
        _
      %p3156 = scmp.le.s32.totalorder 2, %s24
      // Predicated region
      $region85: #{tpu_custom_call.1} parent=5 // pred_check
        %p3157 = pneg %p3156
      $region86: #{tpu_custom_call.1} parent=5 // pred_check_branch
        %3159 = sbr.rel (%p3157) target = $region88
      $region87: #{tpu_custom_call.1} parent=5 // pred_region
        %s3160 = ssub.s32 %s24, 2
        // Predicated region
        $region89: #{tpu_custom_call.1} parent=87 // pred_check
          %p3161 = pneg %p378
        $region90: #{tpu_custom_call.1} parent=87 // pred_check_branch
          %3163 = sbr.rel (%p3161) target = $region92
        $region91: #{tpu_custom_call.1} parent=87 // pred_region
          %s3164 = sand.u32 %s363, 1
          %s3165 = scalar_lea.sflag [#allocation3], %s3164
          %s3166 = sand.u32 %s363, 1
          %s3167 = smul.addr %s3166, 8
          %s3168 = scalar_lea.vmem [#allocation2], %s3167
          %3169 = dma.done %s3165, 128
        $region92: #{tpu_custom_call.1} parent=87 // pred_fallthru
          _
      $region88: #{tpu_custom_call.1} parent=5 // pred_fallthru
        _
    $region6: #{tpu_custom_call.1} parent=1 // loop_footer
      %s28 = sadd.s32 1, %s24
    $region7: #{tpu_custom_call.1} parent=1 // loop_footer_branch
      %23 = sbr.rel target = $region3
    $region8: #{tpu_custom_call.1} parent=1 // loop_exit
      _
    %3170 = vsyncpa [#allocation3], 1
    %s3171 = scalar_lea.sflag [#allocation3], 1
    %3172 = vsyncpa %s3171, 1

</llo_original>
